<compile_context>
chip_gen: v6e
topology: v6e:2x2x1
jax: 0.10.0
libtpu: 0.0.40
codegen_flags: <defaults>
</compile_context>

<pallas_src>
import functools

import jax
import jax.numpy as jnp
import numpy as np
from jax.experimental import pallas as pl
from jax.experimental.pallas import tpu as pltpu

LANES = 128


def _xlstm_kernel(xflat_ref, w_ref, b_ref, c_ref, h_out_ref, c_out_ref,
                  acc_ref, cacc_ref, *, H, W, Wp, KH, KW, HID):
    """One grid step = one batch element.

    xflat_ref : (1, FLAT, CPAD) bf16  padded [x, h] channel-minor, rows flattened
                                      so each conv tap is a contiguous row window
    w_ref     : (KH*KW, CPAD, 4*HID) bf16  per-tap weights (gate scales pre-folded)
    b_ref     : (1, 4*HID) f32             bias (gate scales pre-folded)
    c_ref     : (1, HID, H*W) f32          cell state, channel-major (lane-dense)
    h/c_out   : (1, HID, H*W) f32
    acc_ref   : (H*Wp, 4*HID) f32          VMEM scratch: conv acc on extended grid
    cacc_ref  : (H*W, 4*HID) f32           VMEM scratch: compacted conv output
    """
    EXT = H * Wp  # extended output grid (keeps every tap a contiguous window)

    # --- conv as KH*KW direct MXU matmuls on contiguous row windows of the
    #     flattened padded input, f32 accumulation; bias folded into tap 0. ---
    for dh in range(KH):
        for dw in range(KW):
            t = dh * KW + dw
            off = dh * Wp + dw
            contrib = jnp.dot(xflat_ref[0, off:off + EXT, :], w_ref[t],
                              preferred_element_type=jnp.float32)  # (EXT, 4H)
            if t == 0:
                acc_ref[...] = contrib + b_ref[...]
            else:
                acc_ref[...] += contrib

    # --- drop the (Wp - W) garbage columns of the extended output grid. ------
    for h in range(H):
        cacc_ref[h * W:(h + 1) * W, :] = acc_ref[h * Wp:h * Wp + W, :]

    # --- channel-major gating tail: a single transpose, then every slice is a
    #     full-lane-width sublane slice and all loads/stores are lane-dense. ---
    accT = cacc_ref[...].T                                   # (4*HID, H*W) f32
    i_g = jax.nn.sigmoid(accT[0 * HID:1 * HID, :])
    f_g = jax.nn.sigmoid(accT[1 * HID:2 * HID, :])
    o_g = jax.nn.sigmoid(accT[2 * HID:3 * HID, :])
    g_g = jnp.tanh(accT[3 * HID:4 * HID, :])

    c_cur = c_ref[0]                                         # (HID, H*W) f32
    c_next = f_g * c_cur + i_g * g_g
    h_next = o_g * jnp.tanh(c_next)

    c_out_ref[0] = c_next.astype(c_out_ref.dtype)
    h_out_ref[0] = h_next.astype(h_out_ref.dtype)


def xlstm_cell_forward(x, h_cur, c_cur, weight, bias, gate_i, gate_f, gate_o,
                       *, hidden_dim, kernel_size):
    """XLSTMCell.forward in NCHW (same layout as the PyTorch module)."""
    B, Cx, H, W = x.shape
    KH, KW = kernel_size
    assert KH % 2 == 1 and KW % 2 == 1, "odd kernel sizes only ('same' conv)"
    HID = hidden_dim
    Cin = Cx + HID
    CPAD = LANES
    assert Cin <= CPAD, "input_dim + hidden_dim must fit one 128-lane block"
    HW = H * W
    assert HW % LANES == 0 and HID % 8 == 0, \
        "lane-dense state layout needs H*W % 128 == 0 and hidden_dim % 8 == 0"

    ph, pw = KH // 2, KW // 2
    Wp = W + 2 * pw
    extra = 1 if KW > 1 else 0            # keeps every tap's row window in bounds
    FLAT = (H + 2 * ph + extra) * Wp
    EXT = H * Wp
    f32 = jnp.float32

    # ---- one-time parameter prep (hoist out of the step loop for RNN use) ---
    gate_vec = jnp.concatenate(
        [gate_i, gate_f, gate_o, jnp.ones((HID,), gate_i.dtype)]).astype(f32)
    w_hwio = jnp.transpose(weight.astype(f32), (2, 3, 1, 0)) * gate_vec  # (KH,KW,Cin,4H)
    w_hwio = jnp.pad(w_hwio, ((0, 0), (0, 0), (0, CPAD - Cin), (0, 0)))
    w_taps = w_hwio.reshape(KH * KW, CPAD, 4 * HID).astype(jnp.bfloat16)
    b_vec = (bias.astype(f32) * gate_vec).reshape(1, 4 * HID)

    # ---- input staging: concat + NCHW->channel-minor + pad + bf16 (one fused
    #      XLA producer; TODO(synk): fold in-kernel for the recurrent case). ---
    comb = jnp.concatenate([x, h_cur], axis=1)               # (B, Cin, H, W)
    comb = jnp.transpose(comb, (0, 2, 3, 1))                 # (B, H, W, Cin)
    comb = jnp.pad(comb, ((0, 0), (ph, ph + extra), (pw, pw), (0, CPAD - Cin)))
    xflat = comb.astype(jnp.bfloat16).reshape(B, FLAT, CPAD)

    c_cm = c_cur.astype(f32).reshape(B, HID, HW)             # free reshape (NCHW)

    kernel = functools.partial(_xlstm_kernel, H=H, W=W, Wp=Wp, KH=KH, KW=KW,
                               HID=HID)

    cost = pl.CostEstimate(
        flops=2 * B * EXT * (KH * KW * CPAD) * (4 * HID) + 10 * B * HW * HID,
        transcendentals=5 * B * HW * HID,
        bytes_accessed=(xflat.size * 2 + w_taps.size * 2 + b_vec.size * 4
                        + 3 * B * HID * HW * 4),
    )

    h_cm, c_next_cm = pl.pallas_call(
        kernel,
        out_shape=(jax.ShapeDtypeStruct((B, HID, HW), f32),
                   jax.ShapeDtypeStruct((B, HID, HW), f32)),
        grid_spec=pltpu.PrefetchScalarGridSpec(
            num_scalar_prefetch=0,
            grid=(B,),
            in_specs=[
                pl.BlockSpec((1, FLAT, CPAD), lambda b: (b, 0, 0)),
                pl.BlockSpec((KH * KW, CPAD, 4 * HID), lambda b: (0, 0, 0)),
                pl.BlockSpec((1, 4 * HID), lambda b: (0, 0)),
                pl.BlockSpec((1, HID, HW), lambda b: (b, 0, 0)),
            ],
            out_specs=[
                pl.BlockSpec((1, HID, HW), lambda b: (b, 0, 0)),
                pl.BlockSpec((1, HID, HW), lambda b: (b, 0, 0)),
            ],
            scratch_shapes=[
                pltpu.VMEM((EXT, 4 * HID), f32),
                pltpu.VMEM((HW, 4 * HID), f32),
            ],
        ),
        compiler_params=pltpu.CompilerParams(
            dimension_semantics=("parallel",)),
        cost_estimate=cost,
    )(xflat, w_taps, b_vec, c_cm)

    return (h_cm.reshape(B, HID, H, W), c_next_cm.reshape(B, HID, H, W))


def _reference_forward(x, h_cur, c_cur, weight, bias, gate_i, gate_f, gate_o,
                       *, hidden_dim, kernel_size):
    """Pure-JAX reference mirroring the PyTorch module (NCHW, f32)."""
    KH, KW = kernel_size
    hd = hidden_dim
    combined = jnp.concatenate([x, h_cur], axis=1)
    conv = jax.lax.conv_general_dilated(
        combined, weight, window_strides=(1, 1),
        padding=((KH // 2, KH // 2), (KW // 2, KW // 2)),
        dimension_numbers=("NCHW", "OIHW", "NCHW"),
    ) + bias.reshape(1, 4 * hd, 1, 1)
    cc_i = conv[:, 0 * hd:1 * hd]
    cc_f = conv[:, 1 * hd:2 * hd]
    cc_o = conv[:, 2 * hd:3 * hd]
    cc_g = conv[:, 3 * hd:4 * hd]
    i = jax.nn.sigmoid(cc_i * gate_i.reshape(1, hd, 1, 1))
    f = jax.nn.sigmoid(cc_f * gate_f.reshape(1, hd, 1, 1))
    o = jax.nn.sigmoid(cc_o * gate_o.reshape(1, hd, 1, 1))
    g = jnp.tanh(cc_g)
    c_next = f * c_cur + i * g
    h_next = o * jnp.tanh(c_next)
    return h_next, c_next


if __name__ == "__main__":
    input_dim = 4
    hidden_dim = 32
    kernel_size = (3, 3)
    B, H, W = 2, 16, 16
    Cin = input_dim + hidden_dim

    key = jax.random.PRNGKey(0)
    kx, kh, kc, kw, kb, ki, kf, ko = jax.random.split(key, 8)

    # NCHW inputs, exactly like the PyTorch module.
    x = jax.random.normal(kx, (B, input_dim, H, W), jnp.float32)
    h0 = jax.random.normal(kh, (B, hidden_dim, H, W), jnp.float32)
    c0 = jax.random.normal(kc, (B, hidden_dim, H, W), jnp.float32)

    # Parameters (torch Conv2d OIHW weight). The module inits gate_* to ones;
    # use non-trivial values here so the weight/bias gate folding is exercised.
    weight = 0.1 * jax.random.normal(
        kw, (4 * hidden_dim, Cin, kernel_size[0], kernel_size[1]), jnp.float32)
    bias = 0.1 * jax.random.normal(kb, (4 * hidden_dim,), jnp.float32)
    gate_i = 1.0 + 0.1 * jax.random.normal(ki, (hidden_dim,), jnp.float32)
    gate_f = 1.0 + 0.1 * jax.random.normal(kf, (hidden_dim,), jnp.float32)
    gate_o = 1.0 + 0.1 * jax.random.normal(ko, (hidden_dim,), jnp.float32)

    fwd = jax.jit(functools.partial(xlstm_cell_forward,
                                    hidden_dim=hidden_dim,
                                    kernel_size=kernel_size))
    h_next, c_next = fwd(x, h0, c0, weight, bias, gate_i, gate_f, gate_o)
    jax.block_until_ready((h_next, c_next))

    h_ref, c_ref = _reference_forward(
        x, h0, c0, weight, bias, gate_i, gate_f, gate_o,
        hidden_dim=hidden_dim, kernel_size=kernel_size)

    # bf16 matmul operands (f32 accumulation) -> relaxed tolerance.
    np.testing.assert_allclose(np.asarray(h_next), np.asarray(h_ref),
                               rtol=4e-2, atol=4e-2)
    np.testing.assert_allclose(np.asarray(c_next), np.asarray(c_ref),
                               rtol=4e-2, atol=4e-2)

    print("KERNEL_OK")
</pallas_src>

<mosaic_0001>
module attributes {stable_mosaic.version = 11 : i64} {
  func.func @_xlstm_kernel(%arg0: i32, %arg1: memref<1x342x128xbf16, #tpu.memory_space<vmem>>, %arg2: memref<9x128x128xbf16, #tpu.memory_space<vmem>>, %arg3: memref<1x128xf32, #tpu.memory_space<vmem>>, %arg4: memref<1x32x256xf32, #tpu.memory_space<vmem>>, %arg5: memref<1x32x256xf32, #tpu.memory_space<vmem>>, %arg6: memref<1x32x256xf32, #tpu.memory_space<vmem>>, %arg7: memref<288x128xf32, #tpu.memory_space<vmem>>, %arg8: memref<256x128xf32, #tpu.memory_space<vmem>>) attributes {dimension_semantics = [#tpu.dimension_semantics<parallel>], iteration_bounds = array<i64: 2>, scalar_prefetch = 0 : i64, scratch_operands = 2 : i64, tpu.core_type = #tpu.core_type<tc>, window_params = [{transform_indices = @transform_0, window_bounds = array<i64: 1, 342, 128>}, {pipeline_mode = #tpu.pipeline_mode<synchronous>, transform_indices = @transform_1, window_bounds = array<i64: 9, 128, 128>}, {pipeline_mode = #tpu.pipeline_mode<synchronous>, transform_indices = @transform_2, window_bounds = array<i64: 1, 128>}, {transform_indices = @transform_3, window_bounds = array<i64: 1, 32, 256>}, {transform_indices = @transform_4, window_bounds = array<i64: 1, 32, 256>}, {transform_indices = @transform_5, window_bounds = array<i64: 1, 32, 256>}]} {
    %c0 = arith.constant 0 : index
    %c0_0 = arith.constant 0 : index
    %c0_1 = arith.constant 0 : index
    %0 = vector.load %arg1[%c0, %c0_0, %c0_1] : memref<1x342x128xbf16, #tpu.memory_space<vmem>>, vector<1x288x128xbf16>
    %1 = vector.shape_cast %0 : vector<1x288x128xbf16> to vector<288x128xbf16>
    %c0_2 = arith.constant 0 : index
    %c0_3 = arith.constant 0 : index
    %c0_4 = arith.constant 0 : index
    %2 = vector.load %arg2[%c0_2, %c0_3, %c0_4] : memref<9x128x128xbf16, #tpu.memory_space<vmem>>, vector<1x128x128xbf16>
    %3 = vector.shape_cast %2 : vector<1x128x128xbf16> to vector<128x128xbf16>
    %cst = arith.constant dense<0.000000e+00> : vector<288x128xf32>
    %4 = tpu.matmul %1, %3, %cst {dimension_numbers = #tpu.dot_dimension_numbers<[1], [0], [0], [1], [0, 0, 1, 1], [], []>} : vector<288x128xbf16>, vector<128x128xbf16>, vector<288x128xf32> -> vector<288x128xf32>
    %c0_5 = arith.constant 0 : index
    %c0_6 = arith.constant 0 : index
    %5 = vector.load %arg3[%c0_5, %c0_6] : memref<1x128xf32, #tpu.memory_space<vmem>>, vector<1x128xf32>
    %6 = vector.broadcast %5 : vector<1x128xf32> to vector<288x128xf32>
    %7 = arith.addf %4, %6 : vector<288x128xf32>
    %c0_7 = arith.constant 0 : index
    %c0_8 = arith.constant 0 : index
    %8 = vector.load %arg7[%c0_7, %c0_8] : memref<288x128xf32, #tpu.memory_space<vmem>>, vector<288x128xf32>
    tpu.vector_store %arg7[%c0_7, %c0_8], %7 {strides = array<i32>} : memref<288x128xf32, #tpu.memory_space<vmem>>, vector<288x128xf32>,
    %c0_9 = arith.constant 0 : index
    %c1 = arith.constant 1 : index
    %c0_10 = arith.constant 0 : index
    %9 = vector.load %arg1[%c0_9, %c1, %c0_10] : memref<1x342x128xbf16, #tpu.memory_space<vmem>>, vector<1x288x128xbf16>
    %10 = vector.shape_cast %9 : vector<1x288x128xbf16> to vector<288x128xbf16>
    %c1_11 = arith.constant 1 : index
    %c0_12 = arith.constant 0 : index
    %c0_13 = arith.constant 0 : index
    %11 = vector.load %arg2[%c1_11, %c0_12, %c0_13] : memref<9x128x128xbf16, #tpu.memory_space<vmem>>, vector<1x128x128xbf16>
    %12 = vector.shape_cast %11 : vector<1x128x128xbf16> to vector<128x128xbf16>
    %cst_14 = arith.constant dense<0.000000e+00> : vector<288x128xf32>
    %13 = tpu.matmul %10, %12, %cst_14 {dimension_numbers = #tpu.dot_dimension_numbers<[1], [0], [0], [1], [0, 0, 1, 1], [], []>} : vector<288x128xbf16>, vector<128x128xbf16>, vector<288x128xf32> -> vector<288x128xf32>
    %c0_15 = arith.constant 0 : index
    %c0_16 = arith.constant 0 : index
    %14 = vector.load %arg7[%c0_15, %c0_16] : memref<288x128xf32, #tpu.memory_space<vmem>>, vector<288x128xf32>
    %15 = arith.addf %14, %13 : vector<288x128xf32>
    %c0_17 = arith.constant 0 : index
    %c0_18 = arith.constant 0 : index
    %16 = vector.load %arg7[%c0_17, %c0_18] : memref<288x128xf32, #tpu.memory_space<vmem>>, vector<288x128xf32>
    tpu.vector_store %arg7[%c0_17, %c0_18], %15 {strides = array<i32>} : memref<288x128xf32, #tpu.memory_space<vmem>>, vector<288x128xf32>,
    %c0_19 = arith.constant 0 : index
    %c2 = arith.constant 2 : index
    %c0_20 = arith.constant 0 : index
    %17 = vector.load %arg1[%c0_19, %c2, %c0_20] : memref<1x342x128xbf16, #tpu.memory_space<vmem>>, vector<1x288x128xbf16>
    %18 = vector.shape_cast %17 : vector<1x288x128xbf16> to vector<288x128xbf16>
    %c2_21 = arith.constant 2 : index
    %c0_22 = arith.constant 0 : index
    %c0_23 = arith.constant 0 : index
    %19 = vector.load %arg2[%c2_21, %c0_22, %c0_23] : memref<9x128x128xbf16, #tpu.memory_space<vmem>>, vector<1x128x128xbf16>
    %20 = vector.shape_cast %19 : vector<1x128x128xbf16> to vector<128x128xbf16>
    %cst_24 = arith.constant dense<0.000000e+00> : vector<288x128xf32>
    %21 = tpu.matmul %18, %20, %cst_24 {dimension_numbers = #tpu.dot_dimension_numbers<[1], [0], [0], [1], [0, 0, 1, 1], [], []>} : vector<288x128xbf16>, vector<128x128xbf16>, vector<288x128xf32> -> vector<288x128xf32>
    %c0_25 = arith.constant 0 : index
    %c0_26 = arith.constant 0 : index
    %22 = vector.load %arg7[%c0_25, %c0_26] : memref<288x128xf32, #tpu.memory_space<vmem>>, vector<288x128xf32>
    %23 = arith.addf %22, %21 : vector<288x128xf32>
    %c0_27 = arith.constant 0 : index
    %c0_28 = arith.constant 0 : index
    %24 = vector.load %arg7[%c0_27, %c0_28] : memref<288x128xf32, #tpu.memory_space<vmem>>, vector<288x128xf32>
    tpu.vector_store %arg7[%c0_27, %c0_28], %23 {strides = array<i32>} : memref<288x128xf32, #tpu.memory_space<vmem>>, vector<288x128xf32>,
    %c0_29 = arith.constant 0 : index
    %c18 = arith.constant 18 : index
    %c0_30 = arith.constant 0 : index
    %25 = vector.load %arg1[%c0_29, %c18, %c0_30] : memref<1x342x128xbf16, #tpu.memory_space<vmem>>, vector<1x288x128xbf16>
    %26 = vector.shape_cast %25 : vector<1x288x128xbf16> to vector<288x128xbf16>
    %c3 = arith.constant 3 : index
    %c0_31 = arith.constant 0 : index
    %c0_32 = arith.constant 0 : index
    %27 = vector.load %arg2[%c3, %c0_31, %c0_32] : memref<9x128x128xbf16, #tpu.memory_space<vmem>>, vector<1x128x128xbf16>
    %28 = vector.shape_cast %27 : vector<1x128x128xbf16> to vector<128x128xbf16>
    %cst_33 = arith.constant dense<0.000000e+00> : vector<288x128xf32>
    %29 = tpu.matmul %26, %28, %cst_33 {dimension_numbers = #tpu.dot_dimension_numbers<[1], [0], [0], [1], [0, 0, 1, 1], [], []>} : vector<288x128xbf16>, vector<128x128xbf16>, vector<288x128xf32> -> vector<288x128xf32>
    %c0_34 = arith.constant 0 : index
    %c0_35 = arith.constant 0 : index
    %30 = vector.load %arg7[%c0_34, %c0_35] : memref<288x128xf32, #tpu.memory_space<vmem>>, vector<288x128xf32>
    %31 = arith.addf %30, %29 : vector<288x128xf32>
    %c0_36 = arith.constant 0 : index
    %c0_37 = arith.constant 0 : index
    %32 = vector.load %arg7[%c0_36, %c0_37] : memref<288x128xf32, #tpu.memory_space<vmem>>, vector<288x128xf32>
    tpu.vector_store %arg7[%c0_36, %c0_37], %31 {strides = array<i32>} : memref<288x128xf32, #tpu.memory_space<vmem>>, vector<288x128xf32>,
    %c0_38 = arith.constant 0 : index
    %c19 = arith.constant 19 : index
    %c0_39 = arith.constant 0 : index
    %33 = vector.load %arg1[%c0_38, %c19, %c0_39] : memref<1x342x128xbf16, #tpu.memory_space<vmem>>, vector<1x288x128xbf16>
    %34 = vector.shape_cast %33 : vector<1x288x128xbf16> to vector<288x128xbf16>
    %c4 = arith.constant 4 : index
    %c0_40 = arith.constant 0 : index
    %c0_41 = arith.constant 0 : index
    %35 = vector.load %arg2[%c4, %c0_40, %c0_41] : memref<9x128x128xbf16, #tpu.memory_space<vmem>>, vector<1x128x128xbf16>
    %36 = vector.shape_cast %35 : vector<1x128x128xbf16> to vector<128x128xbf16>
    %cst_42 = arith.constant dense<0.000000e+00> : vector<288x128xf32>
    %37 = tpu.matmul %34, %36, %cst_42 {dimension_numbers = #tpu.dot_dimension_numbers<[1], [0], [0], [1], [0, 0, 1, 1], [], []>} : vector<288x128xbf16>, vector<128x128xbf16>, vector<288x128xf32> -> vector<288x128xf32>
    %c0_43 = arith.constant 0 : index
    %c0_44 = arith.constant 0 : index
    %38 = vector.load %arg7[%c0_43, %c0_44] : memref<288x128xf32, #tpu.memory_space<vmem>>, vector<288x128xf32>
    %39 = arith.addf %38, %37 : vector<288x128xf32>
    %c0_45 = arith.constant 0 : index
    %c0_46 = arith.constant 0 : index
    %40 = vector.load %arg7[%c0_45, %c0_46] : memref<288x128xf32, #tpu.memory_space<vmem>>, vector<288x128xf32>
    tpu.vector_store %arg7[%c0_45, %c0_46], %39 {strides = array<i32>} : memref<288x128xf32, #tpu.memory_space<vmem>>, vector<288x128xf32>,
    %c0_47 = arith.constant 0 : index
    %c20 = arith.constant 20 : index
    %c0_48 = arith.constant 0 : index
    %41 = vector.load %arg1[%c0_47, %c20, %c0_48] : memref<1x342x128xbf16, #tpu.memory_space<vmem>>, vector<1x288x128xbf16>
    %42 = vector.shape_cast %41 : vector<1x288x128xbf16> to vector<288x128xbf16>
    %c5 = arith.constant 5 : index
    %c0_49 = arith.constant 0 : index
    %c0_50 = arith.constant 0 : index
    %43 = vector.load %arg2[%c5, %c0_49, %c0_50] : memref<9x128x128xbf16, #tpu.memory_space<vmem>>, vector<1x128x128xbf16>
    %44 = vector.shape_cast %43 : vector<1x128x128xbf16> to vector<128x128xbf16>
    %cst_51 = arith.constant dense<0.000000e+00> : vector<288x128xf32>
    %45 = tpu.matmul %42, %44, %cst_51 {dimension_numbers = #tpu.dot_dimension_numbers<[1], [0], [0], [1], [0, 0, 1, 1], [], []>} : vector<288x128xbf16>, vector<128x128xbf16>, vector<288x128xf32> -> vector<288x128xf32>
    %c0_52 = arith.constant 0 : index
    %c0_53 = arith.constant 0 : index
    %46 = vector.load %arg7[%c0_52, %c0_53] : memref<288x128xf32, #tpu.memory_space<vmem>>, vector<288x128xf32>
    %47 = arith.addf %46, %45 : vector<288x128xf32>
    %c0_54 = arith.constant 0 : index
    %c0_55 = arith.constant 0 : index
    %48 = vector.load %arg7[%c0_54, %c0_55] : memref<288x128xf32, #tpu.memory_space<vmem>>, vector<288x128xf32>
    tpu.vector_store %arg7[%c0_54, %c0_55], %47 {strides = array<i32>} : memref<288x128xf32, #tpu.memory_space<vmem>>, vector<288x128xf32>,
    %c0_56 = arith.constant 0 : index
    %c36 = arith.constant 36 : index
    %c0_57 = arith.constant 0 : index
    %49 = vector.load %arg1[%c0_56, %c36, %c0_57] : memref<1x342x128xbf16, #tpu.memory_space<vmem>>, vector<1x288x128xbf16>
    %50 = vector.shape_cast %49 : vector<1x288x128xbf16> to vector<288x128xbf16>
    %c6 = arith.constant 6 : index
    %c0_58 = arith.constant 0 : index
    %c0_59 = arith.constant 0 : index
    %51 = vector.load %arg2[%c6, %c0_58, %c0_59] : memref<9x128x128xbf16, #tpu.memory_space<vmem>>, vector<1x128x128xbf16>
    %52 = vector.shape_cast %51 : vector<1x128x128xbf16> to vector<128x128xbf16>
    %cst_60 = arith.constant dense<0.000000e+00> : vector<288x128xf32>
    %53 = tpu.matmul %50, %52, %cst_60 {dimension_numbers = #tpu.dot_dimension_numbers<[1], [0], [0], [1], [0, 0, 1, 1], [], []>} : vector<288x128xbf16>, vector<128x128xbf16>, vector<288x128xf32> -> vector<288x128xf32>
    %c0_61 = arith.constant 0 : index
    %c0_62 = arith.constant 0 : index
    %54 = vector.load %arg7[%c0_61, %c0_62] : memref<288x128xf32, #tpu.memory_space<vmem>>, vector<288x128xf32>
    %55 = arith.addf %54, %53 : vector<288x128xf32>
    %c0_63 = arith.constant 0 : index
    %c0_64 = arith.constant 0 : index
    %56 = vector.load %arg7[%c0_63, %c0_64] : memref<288x128xf32, #tpu.memory_space<vmem>>, vector<288x128xf32>
    tpu.vector_store %arg7[%c0_63, %c0_64], %55 {strides = array<i32>} : memref<288x128xf32, #tpu.memory_space<vmem>>, vector<288x128xf32>,
    %c0_65 = arith.constant 0 : index
    %c37 = arith.constant 37 : index
    %c0_66 = arith.constant 0 : index
    %57 = vector.load %arg1[%c0_65, %c37, %c0_66] : memref<1x342x128xbf16, #tpu.memory_space<vmem>>, vector<1x288x128xbf16>
    %58 = vector.shape_cast %57 : vector<1x288x128xbf16> to vector<288x128xbf16>
    %c7 = arith.constant 7 : index
    %c0_67 = arith.constant 0 : index
    %c0_68 = arith.constant 0 : index
    %59 = vector.load %arg2[%c7, %c0_67, %c0_68] : memref<9x128x128xbf16, #tpu.memory_space<vmem>>, vector<1x128x128xbf16>
    %60 = vector.shape_cast %59 : vector<1x128x128xbf16> to vector<128x128xbf16>
    %cst_69 = arith.constant dense<0.000000e+00> : vector<288x128xf32>
    %61 = tpu.matmul %58, %60, %cst_69 {dimension_numbers = #tpu.dot_dimension_numbers<[1], [0], [0], [1], [0, 0, 1, 1], [], []>} : vector<288x128xbf16>, vector<128x128xbf16>, vector<288x128xf32> -> vector<288x128xf32>
    %c0_70 = arith.constant 0 : index
    %c0_71 = arith.constant 0 : index
    %62 = vector.load %arg7[%c0_70, %c0_71] : memref<288x128xf32, #tpu.memory_space<vmem>>, vector<288x128xf32>
    %63 = arith.addf %62, %61 : vector<288x128xf32>
    %c0_72 = arith.constant 0 : index
    %c0_73 = arith.constant 0 : index
    %64 = vector.load %arg7[%c0_72, %c0_73] : memref<288x128xf32, #tpu.memory_space<vmem>>, vector<288x128xf32>
    tpu.vector_store %arg7[%c0_72, %c0_73], %63 {strides = array<i32>} : memref<288x128xf32, #tpu.memory_space<vmem>>, vector<288x128xf32>,
    %c0_74 = arith.constant 0 : index
    %c38 = arith.constant 38 : index
    %c0_75 = arith.constant 0 : index
    %65 = vector.load %arg1[%c0_74, %c38, %c0_75] : memref<1x342x128xbf16, #tpu.memory_space<vmem>>, vector<1x288x128xbf16>
    %66 = vector.shape_cast %65 : vector<1x288x128xbf16> to vector<288x128xbf16>
    %c8 = arith.constant 8 : index
    %c0_76 = arith.constant 0 : index
    %c0_77 = arith.constant 0 : index
    %67 = vector.load %arg2[%c8, %c0_76, %c0_77] : memref<9x128x128xbf16, #tpu.memory_space<vmem>>, vector<1x128x128xbf16>
    %68 = vector.shape_cast %67 : vector<1x128x128xbf16> to vector<128x128xbf16>
    %cst_78 = arith.constant dense<0.000000e+00> : vector<288x128xf32>
    %69 = tpu.matmul %66, %68, %cst_78 {dimension_numbers = #tpu.dot_dimension_numbers<[1], [0], [0], [1], [0, 0, 1, 1], [], []>} : vector<288x128xbf16>, vector<128x128xbf16>, vector<288x128xf32> -> vector<288x128xf32>
    %c0_79 = arith.constant 0 : index
    %c0_80 = arith.constant 0 : index
    %70 = vector.load %arg7[%c0_79, %c0_80] : memref<288x128xf32, #tpu.memory_space<vmem>>, vector<288x128xf32>
    %71 = arith.addf %70, %69 : vector<288x128xf32>
    %c0_81 = arith.constant 0 : index
    %c0_82 = arith.constant 0 : index
    %72 = vector.load %arg7[%c0_81, %c0_82] : memref<288x128xf32, #tpu.memory_space<vmem>>, vector<288x128xf32>
    tpu.vector_store %arg7[%c0_81, %c0_82], %71 {strides = array<i32>} : memref<288x128xf32, #tpu.memory_space<vmem>>, vector<288x128xf32>,
    %c0_83 = arith.constant 0 : index
    %c0_84 = arith.constant 0 : index
    %73 = vector.load %arg7[%c0_83, %c0_84] : memref<288x128xf32, #tpu.memory_space<vmem>>, vector<16x128xf32>
    %c0_85 = arith.constant 0 : index
    %c0_86 = arith.constant 0 : index
    %74 = vector.load %arg8[%c0_85, %c0_86] : memref<256x128xf32, #tpu.memory_space<vmem>>, vector<16x128xf32>
    tpu.vector_store %arg8[%c0_85, %c0_86], %73 {strides = array<i32>} : memref<256x128xf32, #tpu.memory_space<vmem>>, vector<16x128xf32>,
    %c18_87 = arith.constant 18 : index
    %c0_88 = arith.constant 0 : index
    %75 = vector.load %arg7[%c18_87, %c0_88] : memref<288x128xf32, #tpu.memory_space<vmem>>, vector<16x128xf32>
    %c16 = arith.constant 16 : index
    %c0_89 = arith.constant 0 : index
    %76 = vector.load %arg8[%c16, %c0_89] : memref<256x128xf32, #tpu.memory_space<vmem>>, vector<16x128xf32>
    tpu.vector_store %arg8[%c16, %c0_89], %75 {strides = array<i32>} : memref<256x128xf32, #tpu.memory_space<vmem>>, vector<16x128xf32>,
    %c36_90 = arith.constant 36 : index
    %c0_91 = arith.constant 0 : index
    %77 = vector.load %arg7[%c36_90, %c0_91] : memref<288x128xf32, #tpu.memory_space<vmem>>, vector<16x128xf32>
    %c32 = arith.constant 32 : index
    %c0_92 = arith.constant 0 : index
    %78 = vector.load %arg8[%c32, %c0_92] : memref<256x128xf32, #tpu.memory_space<vmem>>, vector<16x128xf32>
    tpu.vector_store %arg8[%c32, %c0_92], %77 {strides = array<i32>} : memref<256x128xf32, #tpu.memory_space<vmem>>, vector<16x128xf32>,
    %c54 = arith.constant 54 : index
    %c0_93 = arith.constant 0 : index
    %79 = vector.load %arg7[%c54, %c0_93] : memref<288x128xf32, #tpu.memory_space<vmem>>, vector<16x128xf32>
    %c48 = arith.constant 48 : index
    %c0_94 = arith.constant 0 : index
    %80 = vector.load %arg8[%c48, %c0_94] : memref<256x128xf32, #tpu.memory_space<vmem>>, vector<16x128xf32>
    tpu.vector_store %arg8[%c48, %c0_94], %79 {strides = array<i32>} : memref<256x128xf32, #tpu.memory_space<vmem>>, vector<16x128xf32>,
    %c72 = arith.constant 72 : index
    %c0_95 = arith.constant 0 : index
    %81 = vector.load %arg7[%c72, %c0_95] : memref<288x128xf32, #tpu.memory_space<vmem>>, vector<16x128xf32>
    %c64 = arith.constant 64 : index
    %c0_96 = arith.constant 0 : index
    %82 = vector.load %arg8[%c64, %c0_96] : memref<256x128xf32, #tpu.memory_space<vmem>>, vector<16x128xf32>
    tpu.vector_store %arg8[%c64, %c0_96], %81 {strides = array<i32>} : memref<256x128xf32, #tpu.memory_space<vmem>>, vector<16x128xf32>,
    %c90 = arith.constant 90 : index
    %c0_97 = arith.constant 0 : index
    %83 = vector.load %arg7[%c90, %c0_97] : memref<288x128xf32, #tpu.memory_space<vmem>>, vector<16x128xf32>
    %c80 = arith.constant 80 : index
    %c0_98 = arith.constant 0 : index
    %84 = vector.load %arg8[%c80, %c0_98] : memref<256x128xf32, #tpu.memory_space<vmem>>, vector<16x128xf32>
    tpu.vector_store %arg8[%c80, %c0_98], %83 {strides = array<i32>} : memref<256x128xf32, #tpu.memory_space<vmem>>, vector<16x128xf32>,
    %c108 = arith.constant 108 : index
    %c0_99 = arith.constant 0 : index
    %85 = vector.load %arg7[%c108, %c0_99] : memref<288x128xf32, #tpu.memory_space<vmem>>, vector<16x128xf32>
    %c96 = arith.constant 96 : index
    %c0_100 = arith.constant 0 : index
    %86 = vector.load %arg8[%c96, %c0_100] : memref<256x128xf32, #tpu.memory_space<vmem>>, vector<16x128xf32>
    tpu.vector_store %arg8[%c96, %c0_100], %85 {strides = array<i32>} : memref<256x128xf32, #tpu.memory_space<vmem>>, vector<16x128xf32>,
    %c126 = arith.constant 126 : index
    %c0_101 = arith.constant 0 : index
    %87 = vector.load %arg7[%c126, %c0_101] : memref<288x128xf32, #tpu.memory_space<vmem>>, vector<16x128xf32>
    %c112 = arith.constant 112 : index
    %c0_102 = arith.constant 0 : index
    %88 = vector.load %arg8[%c112, %c0_102] : memref<256x128xf32, #tpu.memory_space<vmem>>, vector<16x128xf32>
    tpu.vector_store %arg8[%c112, %c0_102], %87 {strides = array<i32>} : memref<256x128xf32, #tpu.memory_space<vmem>>, vector<16x128xf32>,
    %c144 = arith.constant 144 : index
    %c0_103 = arith.constant 0 : index
    %89 = vector.load %arg7[%c144, %c0_103] : memref<288x128xf32, #tpu.memory_space<vmem>>, vector<16x128xf32>
    %c128 = arith.constant 128 : index
    %c0_104 = arith.constant 0 : index
    %90 = vector.load %arg8[%c128, %c0_104] : memref<256x128xf32, #tpu.memory_space<vmem>>, vector<16x128xf32>
    tpu.vector_store %arg8[%c128, %c0_104], %89 {strides = array<i32>} : memref<256x128xf32, #tpu.memory_space<vmem>>, vector<16x128xf32>,
    %c162 = arith.constant 162 : index
    %c0_105 = arith.constant 0 : index
    %91 = vector.load %arg7[%c162, %c0_105] : memref<288x128xf32, #tpu.memory_space<vmem>>, vector<16x128xf32>
    %c144_106 = arith.constant 144 : index
    %c0_107 = arith.constant 0 : index
    %92 = vector.load %arg8[%c144_106, %c0_107] : memref<256x128xf32, #tpu.memory_space<vmem>>, vector<16x128xf32>
    tpu.vector_store %arg8[%c144_106, %c0_107], %91 {strides = array<i32>} : memref<256x128xf32, #tpu.memory_space<vmem>>, vector<16x128xf32>,
    %c180 = arith.constant 180 : index
    %c0_108 = arith.constant 0 : index
    %93 = vector.load %arg7[%c180, %c0_108] : memref<288x128xf32, #tpu.memory_space<vmem>>, vector<16x128xf32>
    %c160 = arith.constant 160 : index
    %c0_109 = arith.constant 0 : index
    %94 = vector.load %arg8[%c160, %c0_109] : memref<256x128xf32, #tpu.memory_space<vmem>>, vector<16x128xf32>
    tpu.vector_store %arg8[%c160, %c0_109], %93 {strides = array<i32>} : memref<256x128xf32, #tpu.memory_space<vmem>>, vector<16x128xf32>,
    %c198 = arith.constant 198 : index
    %c0_110 = arith.constant 0 : index
    %95 = vector.load %arg7[%c198, %c0_110] : memref<288x128xf32, #tpu.memory_space<vmem>>, vector<16x128xf32>
    %c176 = arith.constant 176 : index
    %c0_111 = arith.constant 0 : index
    %96 = vector.load %arg8[%c176, %c0_111] : memref<256x128xf32, #tpu.memory_space<vmem>>, vector<16x128xf32>
    tpu.vector_store %arg8[%c176, %c0_111], %95 {strides = array<i32>} : memref<256x128xf32, #tpu.memory_space<vmem>>, vector<16x128xf32>,
    %c216 = arith.constant 216 : index
    %c0_112 = arith.constant 0 : index
    %97 = vector.load %arg7[%c216, %c0_112] : memref<288x128xf32, #tpu.memory_space<vmem>>, vector<16x128xf32>
    %c192 = arith.constant 192 : index
    %c0_113 = arith.constant 0 : index
    %98 = vector.load %arg8[%c192, %c0_113] : memref<256x128xf32, #tpu.memory_space<vmem>>, vector<16x128xf32>
    tpu.vector_store %arg8[%c192, %c0_113], %97 {strides = array<i32>} : memref<256x128xf32, #tpu.memory_space<vmem>>, vector<16x128xf32>,
    %c234 = arith.constant 234 : index
    %c0_114 = arith.constant 0 : index
    %99 = vector.load %arg7[%c234, %c0_114] : memref<288x128xf32, #tpu.memory_space<vmem>>, vector<16x128xf32>
    %c208 = arith.constant 208 : index
    %c0_115 = arith.constant 0 : index
    %100 = vector.load %arg8[%c208, %c0_115] : memref<256x128xf32, #tpu.memory_space<vmem>>, vector<16x128xf32>
    tpu.vector_store %arg8[%c208, %c0_115], %99 {strides = array<i32>} : memref<256x128xf32, #tpu.memory_space<vmem>>, vector<16x128xf32>,
    %c252 = arith.constant 252 : index
    %c0_116 = arith.constant 0 : index
    %101 = vector.load %arg7[%c252, %c0_116] : memref<288x128xf32, #tpu.memory_space<vmem>>, vector<16x128xf32>
    %c224 = arith.constant 224 : index
    %c0_117 = arith.constant 0 : index
    %102 = vector.load %arg8[%c224, %c0_117] : memref<256x128xf32, #tpu.memory_space<vmem>>, vector<16x128xf32>
    tpu.vector_store %arg8[%c224, %c0_117], %101 {strides = array<i32>} : memref<256x128xf32, #tpu.memory_space<vmem>>, vector<16x128xf32>,
    %c270 = arith.constant 270 : index
    %c0_118 = arith.constant 0 : index
    %103 = vector.load %arg7[%c270, %c0_118] : memref<288x128xf32, #tpu.memory_space<vmem>>, vector<16x128xf32>
    %c240 = arith.constant 240 : index
    %c0_119 = arith.constant 0 : index
    %104 = vector.load %arg8[%c240, %c0_119] : memref<256x128xf32, #tpu.memory_space<vmem>>, vector<16x128xf32>
    tpu.vector_store %arg8[%c240, %c0_119], %103 {strides = array<i32>} : memref<256x128xf32, #tpu.memory_space<vmem>>, vector<16x128xf32>,
    %c0_120 = arith.constant 0 : index
    %c0_121 = arith.constant 0 : index
    %105 = vector.load %arg8[%c0_120, %c0_121] : memref<256x128xf32, #tpu.memory_space<vmem>>, vector<256x128xf32>
    %106 = tpu.transpose %105, [1, 0] : vector<256x128xf32> -> vector<128x256xf32>
    %107 = vector.extract_strided_slice %106 {offsets = [0, 0], sizes = [32, 256], strides = [1, 1]} : vector<128x256xf32> to vector<32x256xf32>
    %108 = arith.negf %107 : vector<32x256xf32>
    %109 = math.exp %108 : vector<32x256xf32>
    %cst_122 = arith.constant 1.000000e+00 : f32
    %110 = vector.broadcast %cst_122 : f32 to vector<32x256xf32>
    %111 = arith.addf %110, %109 : vector<32x256xf32>
    %112 = arith.divf %110, %111 : vector<32x256xf32>
    %113 = vector.extract_strided_slice %106 {offsets = [32, 0], sizes = [32, 256], strides = [1, 1]} : vector<128x256xf32> to vector<32x256xf32>
    %114 = arith.negf %113 : vector<32x256xf32>
    %115 = math.exp %114 : vector<32x256xf32>
    %cst_123 = arith.constant 1.000000e+00 : f32
    %116 = vector.broadcast %cst_123 : f32 to vector<32x256xf32>
    %117 = arith.addf %116, %115 : vector<32x256xf32>
    %118 = arith.divf %116, %117 : vector<32x256xf32>
    %119 = vector.extract_strided_slice %106 {offsets = [64, 0], sizes = [32, 256], strides = [1, 1]} : vector<128x256xf32> to vector<32x256xf32>
    %120 = arith.negf %119 : vector<32x256xf32>
    %121 = math.exp %120 : vector<32x256xf32>
    %cst_124 = arith.constant 1.000000e+00 : f32
    %122 = vector.broadcast %cst_124 : f32 to vector<32x256xf32>
    %123 = arith.addf %122, %121 : vector<32x256xf32>
    %124 = arith.divf %122, %123 : vector<32x256xf32>
    %125 = vector.extract_strided_slice %106 {offsets = [96, 0], sizes = [32, 256], strides = [1, 1]} : vector<128x256xf32> to vector<32x256xf32>
    %126 = math.tanh %125 : vector<32x256xf32>
    %c0_125 = arith.constant 0 : index
    %c0_126 = arith.constant 0 : index
    %c0_127 = arith.constant 0 : index
    %127 = vector.load %arg4[%c0_125, %c0_126, %c0_127] : memref<1x32x256xf32, #tpu.memory_space<vmem>>, vector<1x32x256xf32>
    %128 = vector.shape_cast %127 : vector<1x32x256xf32> to vector<32x256xf32>
    %129 = arith.mulf %118, %128 : vector<32x256xf32>
    %130 = arith.mulf %112, %126 : vector<32x256xf32>
    %131 = arith.addf %129, %130 : vector<32x256xf32>
    %132 = math.tanh %131 : vector<32x256xf32>
    %133 = arith.mulf %124, %132 : vector<32x256xf32>
    %c0_128 = arith.constant 0 : index
    %c0_129 = arith.constant 0 : index
    %c0_130 = arith.constant 0 : index
    %134 = vector.load %arg6[%c0_128, %c0_129, %c0_130] : memref<1x32x256xf32, #tpu.memory_space<vmem>>, vector<1x32x256xf32>
    %135 = vector.shape_cast %134 : vector<1x32x256xf32> to vector<32x256xf32>
    %136 = vector.shape_cast %131 : vector<32x256xf32> to vector<1x32x256xf32>
    tpu.vector_store %arg6[%c0_128, %c0_129, %c0_130], %136 {strides = array<i32>} : memref<1x32x256xf32, #tpu.memory_space<vmem>>, vector<1x32x256xf32>,
    %c0_131 = arith.constant 0 : index
    %c0_132 = arith.constant 0 : index
    %c0_133 = arith.constant 0 : index
    %137 = vector.load %arg5[%c0_131, %c0_132, %c0_133] : memref<1x32x256xf32, #tpu.memory_space<vmem>>, vector<1x32x256xf32>
    %138 = vector.shape_cast %137 : vector<1x32x256xf32> to vector<32x256xf32>
    %139 = vector.shape_cast %133 : vector<32x256xf32> to vector<1x32x256xf32>
    tpu.vector_store %arg5[%c0_131, %c0_132, %c0_133], %139 {strides = array<i32>} : memref<1x32x256xf32, #tpu.memory_space<vmem>>, vector<1x32x256xf32>,
    return
  }
  func.func @transform_0(%arg0: i32) -> (i32, i32, i32) {
    %c0_i32 = arith.constant 0 : i32
    %c0_i32_0 = arith.constant 0 : i32
    %c0_i32_1 = arith.constant 0 : i32
    return %arg0, %c0_i32, %c0_i32_0 : i32, i32, i32
  }
  func.func @transform_1(%arg0: i32) -> (i32, i32, i32) {
    %c0_i32 = arith.constant 0 : i32
    %c0_i32_0 = arith.constant 0 : i32
    %c0_i32_1 = arith.constant 0 : i32
    %c0_i32_2 = arith.constant 0 : i32
    return %c0_i32, %c0_i32_0, %c0_i32_1 : i32, i32, i32
  }
  func.func @transform_2(%arg0: i32) -> (i32, i32) {
    %c0_i32 = arith.constant 0 : i32
    %c0_i32_0 = arith.constant 0 : i32
    %c0_i32_1 = arith.constant 0 : i32
    return %c0_i32, %c0_i32_0 : i32, i32
  }
  func.func @transform_3(%arg0: i32) -> (i32, i32, i32) {
    %c0_i32 = arith.constant 0 : i32
    %c0_i32_0 = arith.constant 0 : i32
    %c0_i32_1 = arith.constant 0 : i32
    return %arg0, %c0_i32, %c0_i32_0 : i32, i32, i32
  }
  func.func @transform_4(%arg0: i32) -> (i32, i32, i32) {
    %c0_i32 = arith.constant 0 : i32
    %c0_i32_0 = arith.constant 0 : i32
    %c0_i32_1 = arith.constant 0 : i32
    return %arg0, %c0_i32, %c0_i32_0 : i32, i32, i32
  }
  func.func @transform_5(%arg0: i32) -> (i32, i32, i32) {
    %c0_i32 = arith.constant 0 : i32
    %c0_i32_0 = arith.constant 0 : i32
    %c0_i32_1 = arith.constant 0 : i32
    return %arg0, %c0_i32, %c0_i32_0 : i32, i32, i32
  }
}

</mosaic_0001>

<llo_original>
// kernel: xlstm_cell_forward.1
$region0: #{xlstm_cell_forward.1}
  #allocation0 [shape = 'u32[]', space=smem, size = 0x4, offset = 0x4, fixed_abs, tag = 'smem constant byte address 0x4 - core index']
  #allocation1 [shape = 'u32[144,128]{1,0:T(1,128)}', space=vmem, size = 0x12000, scoped, tag = 'internal scratch']
  #allocation2 [shape = 'f32[288,128]{1,0:T(8,128)}', space=vmem, size = 0x24000, scoped, tag = 'scratch operand']
  #allocation3 [shape = 'f32[256,128]{1,0:T(8,128)}', space=vmem, size = 0x20000, scoped, tag = 'scratch operand']
  %s0 = inlined_call_operand.vmem [shape: bf16[2,342,128], index: 0, kind: input, shape index: {}]
  %s1 = inlined_call_operand.vmem [shape: bf16[9,128,128], index: 1, kind: input, shape index: {}]
  %s2 = inlined_call_operand.vmem [shape: f32[1,128], index: 2, kind: input, shape index: {}]
  %s3 = inlined_call_operand.vmem [shape: f32[2,32,256], index: 3, kind: input, shape index: {}]
  %s4 = inlined_call_operand.vmem [shape: f32[2,32,256], index: 4, kind: output, shape index: {0}]
  %s5 = inlined_call_operand.vmem [shape: f32[2,32,256], index: 5, kind: output, shape index: {1}]
  %6 = xla_tuple %s4, %s5
  %s7 = sld [smem:[#allocation0]]
  $region57: #{xlstm_cell_forward.1} parent=0
    _
  %s9 = ssub.s32 1, %s7
  %s10 = scalar_select 0, %s9, %s7
  loop: start=0, step=1, limit=4
  $region2: #{xlstm_cell_forward.1} parent=0 // loop_pre_header
    _
  $region3: #{xlstm_cell_forward.1} parent=0 // loop_header
    %s12 = sphi 0, %s16
    %p13 = scmp.ge.s32.totalorder %s12, 4
    %s22 = sphi 0, %s24
    %s25 = sphi 0, %s22
    %s26 = sphi 0, %s25
    %s42 = sphi 0, %s26
    %s46 = sphi 0, %s46
    %s48 = sphi 0, %s46
    %s49 = sphi 0, %s48
    %s63 = sphi 0, %s49
    %s67 = sphi 0, %s67
    %s69 = sphi 0, %s67
    %s70 = sphi 0, %s69
    %s84 = sphi 0, %s70
    %s90 = sphi 0, %s92
    %s93 = sphi 0, %s90
    %s94 = sphi 0, %s93
    %s110 = sphi 0, %s94
    %s116 = sphi 0, %s118
    %s119 = sphi 0, %s116
    %s120 = sphi 0, %s119
    %s136 = sphi 0, %s120
    %s142 = sphi 0, %s144
    %s145 = sphi 0, %s142
    %s146 = sphi 0, %s145
    %s162 = sphi 0, %s146
  $region4: #{xlstm_cell_forward.1} parent=0 // loop_header_branch
    %15 = sbr.rel (%p13) target = $region8
  $region5: #{xlstm_cell_forward.1} parent=0 // loop_body
    %s17 = ssub.s32 %s12, 1
    %s18 = ssub.s32 %s12, 2
    %s19 = sadd.s32 %s12, 1
    %s20 = ssub.s32 %s12, %s19
    %p21 = scmp.eq.s32.totalorder %s20, 0
    %s23 = sadd.s32 %s22, 1
    %s24 = scalar_select %p21, %s22, %s23
    %p27 = pneg %p21
    %p28 = scmp.eq.s32.totalorder %s12, 1
    %p29 = por %p27, %p28
    %p30 = scmp.ne.s32.totalorder %s22, %s25
    %p31 = scmp.eq.s32.totalorder %s12, 0
    %p32 = por %p30, %p31
    %p33 = scmp.ne.s32.totalorder %s22, %s25
    %p34 = scmp.eq.s32.totalorder %s17, 1
    %p35 = por %p33, %p34
    %p36 = scmp.ne.s32.totalorder %s25, %s26
    %p37 = scmp.eq.s32.totalorder %s17, 0
    %p38 = por %p36, %p37
    %p39 = scmp.ne.s32.totalorder %s25, %s26
    %p40 = scmp.eq.s32.totalorder %s18, 1
    %p41 = por %p39, %p40
    %p43 = scmp.ne.s32.totalorder %s26, %s42
    %p44 = scmp.eq.s32.totalorder %s18, 0
    %p45 = por %p43, %p44
    %s47 = sadd.s32 %s46, 1
    %p50 = scmp.eq.s32.totalorder %s12, 1
    %p51 = scmp.ne.s32.totalorder %s46, %s48
    %p52 = scmp.eq.s32.totalorder %s12, 0
    %p53 = por %p51, %p52
    %p54 = scmp.ne.s32.totalorder %s46, %s48
    %p55 = scmp.eq.s32.totalorder %s17, 1
    %p56 = por %p54, %p55
    %p57 = scmp.ne.s32.totalorder %s48, %s49
    %p58 = scmp.eq.s32.totalorder %s17, 0
    %p59 = por %p57, %p58
    %p60 = scmp.ne.s32.totalorder %s48, %s49
    %p61 = scmp.eq.s32.totalorder %s18, 1
    %p62 = por %p60, %p61
    %p64 = scmp.ne.s32.totalorder %s49, %s63
    %p65 = scmp.eq.s32.totalorder %s18, 0
    %p66 = por %p64, %p65
    %s68 = sadd.s32 %s67, 1
    %p71 = scmp.eq.s32.totalorder %s12, 1
    %p72 = scmp.ne.s32.totalorder %s67, %s69
    %p73 = scmp.eq.s32.totalorder %s12, 0
    %p74 = por %p72, %p73
    %p75 = scmp.ne.s32.totalorder %s67, %s69
    %p76 = scmp.eq.s32.totalorder %s17, 1
    %p77 = por %p75, %p76
    %p78 = scmp.ne.s32.totalorder %s69, %s70
    %p79 = scmp.eq.s32.totalorder %s17, 0
    %p80 = por %p78, %p79
    %p81 = scmp.ne.s32.totalorder %s69, %s70
    %p82 = scmp.eq.s32.totalorder %s18, 1
    %p83 = por %p81, %p82
    %p85 = scmp.ne.s32.totalorder %s70, %s84
    %p86 = scmp.eq.s32.totalorder %s18, 0
    %p87 = por %p85, %p86
    %s88 = ssub.s32 %s12, %s19
    %p89 = scmp.eq.s32.totalorder %s88, 0
    %s91 = sadd.s32 %s90, 1
    %s92 = scalar_select %p89, %s90, %s91
    %p95 = pneg %p89
    %p96 = scmp.eq.s32.totalorder %s12, 1
    %p97 = por %p95, %p96
    %p98 = scmp.ne.s32.totalorder %s90, %s93
    %p99 = scmp.eq.s32.totalorder %s12, 0
    %p100 = por %p98, %p99
    %p101 = scmp.ne.s32.totalorder %s90, %s93
    %p102 = scmp.eq.s32.totalorder %s17, 1
    %p103 = por %p101, %p102
    %p104 = scmp.ne.s32.totalorder %s93, %s94
    %p105 = scmp.eq.s32.totalorder %s17, 0
    %p106 = por %p104, %p105
    %p107 = scmp.ne.s32.totalorder %s93, %s94
    %p108 = scmp.eq.s32.totalorder %s18, 1
    %p109 = por %p107, %p108
    %p111 = scmp.ne.s32.totalorder %s94, %s110
    %p112 = scmp.eq.s32.totalorder %s18, 0
    %p113 = por %p111, %p112
    %s114 = ssub.s32 %s12, %s19
    %p115 = scmp.eq.s32.totalorder %s114, 0
    %s117 = sadd.s32 %s116, 1
    %s118 = scalar_select %p115, %s116, %s117
    %p121 = pneg %p115
    %p122 = scmp.eq.s32.totalorder %s12, 1
    %p123 = por %p121, %p122
    %p124 = scmp.ne.s32.totalorder %s116, %s119
    %p125 = scmp.eq.s32.totalorder %s12, 0
    %p126 = por %p124, %p125
    %p127 = scmp.ne.s32.totalorder %s116, %s119
    %p128 = scmp.eq.s32.totalorder %s17, 1
    %p129 = por %p127, %p128
    %p130 = scmp.ne.s32.totalorder %s119, %s120
    %p131 = scmp.eq.s32.totalorder %s17, 0
    %p132 = por %p130, %p131
    %p133 = scmp.ne.s32.totalorder %s119, %s120
    %p134 = scmp.eq.s32.totalorder %s18, 1
    %p135 = por %p133, %p134
    %p137 = scmp.ne.s32.totalorder %s120, %s136
    %p138 = scmp.eq.s32.totalorder %s18, 0
    %p139 = por %p137, %p138
    %s140 = ssub.s32 %s12, %s19
    %p141 = scmp.eq.s32.totalorder %s140, 0
    %s143 = sadd.s32 %s142, 1
    %s144 = scalar_select %p141, %s142, %s143
    %p147 = pneg %p141
    %p148 = scmp.eq.s32.totalorder %s12, 1
    %p149 = por %p147, %p148
    %p150 = scmp.ne.s32.totalorder %s142, %s145
    %p151 = scmp.eq.s32.totalorder %s12, 0
    %p152 = por %p150, %p151
    %p153 = scmp.ne.s32.totalorder %s142, %s145
    %p154 = scmp.eq.s32.totalorder %s17, 1
    %p155 = por %p153, %p154
    %p156 = scmp.ne.s32.totalorder %s145, %s146
    %p157 = scmp.eq.s32.totalorder %s17, 0
    %p158 = por %p156, %p157
    %p159 = scmp.ne.s32.totalorder %s145, %s146
    %p160 = scmp.eq.s32.totalorder %s18, 1
    %p161 = por %p159, %p160
    %p163 = scmp.ne.s32.totalorder %s146, %s162
    %p164 = scmp.eq.s32.totalorder %s18, 0
    %p165 = por %p163, %p164
    %p166 = scmp.le.s32.totalorder 1, %s12
    %p167 = scmp.lt.s32.totalorder %s12, 3
    %p168 = pnand %p166, %p167
    %p169 = pneg %p168
    // Predicated region
    $region9: #{xlstm_cell_forward.1} parent=5 // pred_check
      _
    $region10: #{xlstm_cell_forward.1} parent=5 // pred_check_branch
      %171 = sbr.rel (%p168) target = $region12
    $region11: #{xlstm_cell_forward.1} parent=5 // pred_region
      %s172 = ssub.s32 %s12, 1
      // Predicated region
      $region13: #{xlstm_cell_forward.1} parent=11 // pred_check
        %p173 = pneg %p59
      $region14: #{xlstm_cell_forward.1} parent=11 // pred_check_branch
        %175 = sbr.rel (%p173) target = $region16
      $region15: #{xlstm_cell_forward.1} parent=11 // pred_region
        _
      $region16: #{xlstm_cell_forward.1} parent=11 // pred_fallthru
        _
      // Predicated region
      $region17: #{xlstm_cell_forward.1} parent=11 // pred_check
        %p176 = pneg %p80
      $region18: #{xlstm_cell_forward.1} parent=11 // pred_check_branch
        %178 = sbr.rel (%p176) target = $region20
      $region19: #{xlstm_cell_forward.1} parent=11 // pred_region
        _
      $region20: #{xlstm_cell_forward.1} parent=11 // pred_fallthru
        _
    $region12: #{xlstm_cell_forward.1} parent=5 // pred_fallthru
      _
    %p179 = scmp.lt.s32.totalorder %s12, 2
    // Predicated region
    $region21: #{xlstm_cell_forward.1} parent=5 // pred_check
      %p180 = pneg %p179
    $region22: #{xlstm_cell_forward.1} parent=5 // pred_check_branch
      %182 = sbr.rel (%p180) target = $region24
    $region23: #{xlstm_cell_forward.1} parent=5 // pred_region
      // Predicated region
      $region25: #{xlstm_cell_forward.1} parent=23 // pred_check
        %p183 = pneg %p32
      $region26: #{xlstm_cell_forward.1} parent=23 // pred_check_branch
        %185 = sbr.rel (%p183) target = $region28
      $region27: #{xlstm_cell_forward.1} parent=23 // pred_region
        %p186 = scmp.lt.s32.totalorder %s12, 1
        %s187 = scalar_select %p186, %s12, 1
        %s188 = smul.addr %s187, 43
        %s189 = smul.addr %s188, 4
        %s190 = scalar_lea.vmem %s0, %s189
      $region28: #{xlstm_cell_forward.1} parent=23 // pred_fallthru
        _
      // Predicated region
      $region29: #{xlstm_cell_forward.1} parent=23 // pred_check
        %p191 = pneg %p100
      $region30: #{xlstm_cell_forward.1} parent=23 // pred_check_branch
        %193 = sbr.rel (%p191) target = $region32
      $region31: #{xlstm_cell_forward.1} parent=23 // pred_region
        %p194 = scmp.lt.s32.totalorder %s12, 1
        %s195 = scalar_select %p194, %s12, 1
        %s196 = smul.addr %s195, 8
        %s197 = smul.addr %s196, 8
        %s198 = scalar_lea.vmem %s3, %s197
      $region32: #{xlstm_cell_forward.1} parent=23 // pred_fallthru
        _
    $region24: #{xlstm_cell_forward.1} parent=5 // pred_fallthru
      _
    %p199 = scmp.le.s32.totalorder 1, %s12
    %p200 = scmp.lt.s32.totalorder %s12, 3
    %p201 = pnand %p199, %p200
    %p202 = pneg %p201
    // Predicated region
    $region33: #{xlstm_cell_forward.1} parent=5 // pred_check
      _
    $region34: #{xlstm_cell_forward.1} parent=5 // pred_check_branch
      %204 = sbr.rel (%p201) target = $region36
    $region35: #{xlstm_cell_forward.1} parent=5 // pred_region
      %s205 = ssub.s32 %s12, 1
      %p206 = scmp.lt.s32.totalorder %s17, 1
      %s207 = scalar_select %p206, %s17, 1
      %s208 = smul.addr %s207, 43
      %s209 = smul.addr %s208, 4
      %s210 = scalar_lea.vmem %s0, %s209
      %p211 = pneg %p38
      %p212 = pneg %p35
      %p213 = pneg %p59
      %p214 = pneg %p56
      %p215 = pneg %p80
      %p216 = pneg %p77
      %p217 = scmp.lt.s32.totalorder %s17, 1
      %s218 = scalar_select %p217, %s17, 1
      %s219 = smul.addr %s218, 8
      %s220 = smul.addr %s219, 8
      %s221 = scalar_lea.vmem %s3, %s220
      %p222 = pneg %p106
      %p223 = pneg %p103
      %p224 = pneg %p132
      %p225 = pneg %p129
      %p226 = scmp.lt.s32.totalorder %s17, 1
      %s227 = scalar_select %p226, %s17, 1
      %s228 = smul.addr %s227, 8
      %s229 = smul.addr %s228, 8
      %s230 = scalar_lea.vmem %s4, %s229
      %p231 = pneg %p158
      %p232 = pneg %p155
      %p233 = scmp.lt.s32.totalorder %s17, 1
      %s234 = scalar_select %p233, %s17, 1
      %s235 = smul.addr %s234, 8
      %s236 = smul.addr %s235, 8
      %s237 = scalar_lea.vmem %s5, %s236
      %p238 = scmp.lt.s32.totalorder %s17, 1
      %s239 = scalar_select %p238, %s17, 1
      %s240 = smul.addr %s239, 43
      %s241 = smul.addr %s240, 4
      %s242 = scalar_lea.vmem %s0, %s241
      %p243 = scmp.lt.s32.totalorder %s17, 1
      %s244 = scalar_select %p243, %s17, 1
      %s245 = smul.addr %s244, 8
      %s246 = smul.addr %s245, 8
      %s247 = scalar_lea.vmem %s3, %s246
      %p248 = scmp.lt.s32.totalorder %s17, 1
      %s249 = scalar_select %p248, %s17, 1
      %s250 = smul.addr %s249, 8
      %s251 = smul.addr %s250, 8
      %s252 = scalar_lea.vmem %s4, %s251
      %p253 = scmp.lt.s32.totalorder %s17, 1
      %s254 = scalar_select %p253, %s17, 1
      %s255 = smul.addr %s254, 8
      %s256 = smul.addr %s255, 8
      %s257 = scalar_lea.vmem %s5, %s256
      %v259 = vld [vmem:[%s242] sm:$0xf]
      %v260 = vld [vmem:[%s242 + $0x4] sm:$0xf]
      %v261 = vld [vmem:[%s242 + $0x8] sm:$0xf]
      %v262 = vld [vmem:[%s242 + $0xc] sm:$0xf]
      %v263 = vld [vmem:[%s242 + $0x10] sm:$0xf]
      %v264 = vld [vmem:[%s242 + $0x14] sm:$0xf]
      %v265 = vld [vmem:[%s242 + $0x18] sm:$0xf]
      %v266 = vld [vmem:[%s242 + $0x1c] sm:$0xf]
      %v267 = vld [vmem:[%s242 + $0x20] sm:$0xf]
      %v268 = vld [vmem:[%s242 + $0x24] sm:$0xf]
      %v269 = vld [vmem:[%s242 + $0x28] sm:$0xf]
      %v270 = vld [vmem:[%s242 + $0x2c] sm:$0xf]
      %v271 = vld [vmem:[%s242 + $0x30] sm:$0xf]
      %v272 = vld [vmem:[%s242 + $0x34] sm:$0xf]
      %v273 = vld [vmem:[%s242 + $0x38] sm:$0xf]
      %v274 = vld [vmem:[%s242 + $0x3c] sm:$0xf]
      %v275 = vld [vmem:[%s242 + $0x40] sm:$0xf]
      %v276 = vld [vmem:[%s242 + $0x44] sm:$0xf]
      %v277 = vld [vmem:[%s242 + $0x48] sm:$0xf]
      %v278 = vld [vmem:[%s242 + $0x4c] sm:$0xf]
      %v279 = vld [vmem:[%s242 + $0x50] sm:$0xf]
      %v280 = vld [vmem:[%s242 + $0x54] sm:$0xf]
      %v281 = vld [vmem:[%s242 + $0x58] sm:$0xf]
      %v282 = vld [vmem:[%s242 + $0x5c] sm:$0xf]
      %v283 = vld [vmem:[%s242 + $0x60] sm:$0xf]
      %v284 = vld [vmem:[%s242 + $0x64] sm:$0xf]
      %v285 = vld [vmem:[%s242 + $0x68] sm:$0xf]
      %v286 = vld [vmem:[%s242 + $0x6c] sm:$0xf]
      %v287 = vld [vmem:[%s242 + $0x70] sm:$0xf]
      %v288 = vld [vmem:[%s242 + $0x74] sm:$0xf]
      %v289 = vld [vmem:[%s242 + $0x78] sm:$0xf]
      %v290 = vld [vmem:[%s242 + $0x7c] sm:$0xf]
      %v291 = vld [vmem:[%s242 + $0x80] sm:$0xf]
      %v292 = vld [vmem:[%s242 + $0x84] sm:$0xf]
      %v293 = vld [vmem:[%s242 + $0x88] sm:$0xf]
      %v294 = vld [vmem:[%s242 + $0x8c] sm:$0xf]
      %v295 = vld [vmem:[%s1] sm:$0xf]
      %v296 = vld [vmem:[%s1 + $0x4] sm:$0xf]
      %v297 = vld [vmem:[%s1 + $0x8] sm:$0xf]
      %v298 = vld [vmem:[%s1 + $0xc] sm:$0xf]
      %v299 = vld [vmem:[%s1 + $0x10] sm:$0xf]
      %v300 = vld [vmem:[%s1 + $0x14] sm:$0xf]
      %v301 = vld [vmem:[%s1 + $0x18] sm:$0xf]
      %v302 = vld [vmem:[%s1 + $0x1c] sm:$0xf]
      %v303 = vld [vmem:[%s1 + $0x20] sm:$0xf]
      %v304 = vld [vmem:[%s1 + $0x24] sm:$0xf]
      %v305 = vld [vmem:[%s1 + $0x28] sm:$0xf]
      %v306 = vld [vmem:[%s1 + $0x2c] sm:$0xf]
      %v307 = vld [vmem:[%s1 + $0x30] sm:$0xf]
      %v308 = vld [vmem:[%s1 + $0x34] sm:$0xf]
      %v309 = vld [vmem:[%s1 + $0x38] sm:$0xf]
      %v310 = vld [vmem:[%s1 + $0x3c] sm:$0xf]
      %v311 = vld [vmem:[%s2] sm:$0x1]
      %v313 = vlaneseq
      %v314 = vshrl.u32 %v313, 7
      %v315 = vsub.s32 0, %v314
      %v316 = vrot.slane %v311, %v315
      %v354 = vunpack.c.l.b16 %v259
      %v355 = vunpack.c.l.b16 %v260
      %v356 = vunpack.c.l.b16 %v261
      %v357 = vunpack.c.l.b16 %v262
      %v358 = vunpack.c.l.b16 %v263
      %v359 = vunpack.c.l.b16 %v264
      %v360 = vunpack.c.l.b16 %v265
      %v361 = vunpack.c.l.b16 %v266
      %v362 = vunpack.c.l.b16 %v267
      %v363 = vunpack.c.l.b16 %v268
      %v364 = vunpack.c.l.b16 %v269
      %v365 = vunpack.c.l.b16 %v270
      %v366 = vunpack.c.l.b16 %v271
      %v367 = vunpack.c.l.b16 %v272
      %v368 = vunpack.c.l.b16 %v273
      %v369 = vunpack.c.l.b16 %v274
      %v370 = vunpack.c.l.b16 %v275
      %v371 = vunpack.c.l.b16 %v276
      %v372 = vunpack.c.l.b16 %v277
      %v373 = vunpack.c.l.b16 %v278
      %v374 = vunpack.c.l.b16 %v279
      %v375 = vunpack.c.l.b16 %v280
      %v376 = vunpack.c.l.b16 %v281
      %v377 = vunpack.c.l.b16 %v282
      %v378 = vunpack.c.l.b16 %v283
      %v379 = vunpack.c.l.b16 %v284
      %v380 = vunpack.c.l.b16 %v285
      %v381 = vunpack.c.l.b16 %v286
      %v382 = vunpack.c.l.b16 %v287
      %v383 = vunpack.c.l.b16 %v288
      %v384 = vunpack.c.l.b16 %v289
      %v385 = vunpack.c.l.b16 %v290
      %v386 = vunpack.c.l.b16 %v291
      %v387 = vunpack.c.l.b16 %v292
      %v388 = vunpack.c.l.b16 %v293
      %v389 = vunpack.c.l.b16 %v294
      %v390 = vpack.c.b16 %v355, %v354
      %v391 = vpack.c.b16 %v357, %v356
      %v392 = vpack.c.b16 %v359, %v358
      %v393 = vpack.c.b16 %v361, %v360
      %v394 = vpack.c.b16 %v363, %v362
      %v395 = vpack.c.b16 %v365, %v364
      %v396 = vpack.c.b16 %v367, %v366
      %v397 = vpack.c.b16 %v369, %v368
      %v398 = vpack.c.b16 %v371, %v370
      %v399 = vpack.c.b16 %v373, %v372
      %v400 = vpack.c.b16 %v375, %v374
      %v401 = vpack.c.b16 %v377, %v376
      %v402 = vpack.c.b16 %v379, %v378
      %v403 = vpack.c.b16 %v381, %v380
      %v404 = vpack.c.b16 %v383, %v382
      %v405 = vpack.c.b16 %v385, %v384
      %v406 = vpack.c.b16 %v387, %v386
      %v407 = vpack.c.b16 %v389, %v388
      %v442 = vunpack.c.l.b16 %v295
      %v443 = vunpack.c.l.b16 %v296
      %v444 = vunpack.c.l.b16 %v297
      %v445 = vunpack.c.l.b16 %v298
      %v446 = vunpack.c.l.b16 %v299
      %v447 = vunpack.c.l.b16 %v300
      %v448 = vunpack.c.l.b16 %v301
      %v449 = vunpack.c.l.b16 %v302
      %v450 = vunpack.c.l.b16 %v303
      %v451 = vunpack.c.l.b16 %v304
      %v452 = vunpack.c.l.b16 %v305
      %v453 = vunpack.c.l.b16 %v306
      %v454 = vunpack.c.l.b16 %v307
      %v455 = vunpack.c.l.b16 %v308
      %v456 = vunpack.c.l.b16 %v309
      %v457 = vunpack.c.l.b16 %v310
      %v458 = vpack.c.b16 %v443, %v442
      %v459 = vpack.c.b16 %v445, %v444
      %v460 = vpack.c.b16 %v447, %v446
      %v461 = vpack.c.b16 %v449, %v448
      %v462 = vpack.c.b16 %v451, %v450
      %v463 = vpack.c.b16 %v453, %v452
      %v464 = vpack.c.b16 %v455, %v454
      %v465 = vpack.c.b16 %v457, %v456
      %474 = vmatprep.subr.bf16.mxu0 0
      %475 = vmatpush1.bf16.msra.mxu0 %v465
      %476 = vmatprep.subr.bf16.mxu0 0
      %477 = vmatpush1.bf16.msra.mxu0 %v464
      %478 = vmatprep.subr.bf16.mxu0 0
      %479 = vmatpush1.bf16.msra.mxu0 %v463
      %480 = vmatprep.subr.bf16.mxu0 0
      %481 = vmatpush1.bf16.msra.mxu0 %v462
      %482 = vmatprep.subr.bf16.mxu0 0
      %483 = vmatpush1.bf16.msra.mxu0 %v461
      %484 = vmatprep.subr.bf16.mxu0 0
      %485 = vmatpush1.bf16.msra.mxu0 %v460
      %486 = vmatprep.subr.bf16.mxu0 0
      %487 = vmatpush1.bf16.msra.mxu0 %v459
      %488 = vmatprep.subr.bf16.mxu0 0
      %489 = vmatpush1.bf16.msra.mxu0 %v458
      %490 = vmatprep.subr.bf16.mxu0 0
      %491 = vmatpush2.bf16.msra.mxu0 0
      %492 = vmatprep.subr.bf16.mxu0 0
      %493 = vmatpush2.bf16.msra.mxu0 0
      %494 = vmatprep.subr.bf16.mxu0 0
      %495 = vmatpush2.bf16.msra.mxu0 0
      %496 = vmatprep.subr.bf16.mxu0 0
      %497 = vmatpush2.bf16.msra.mxu0 0
      %498 = vmatprep.subr.bf16.mxu0 0
      %499 = vmatpush2.bf16.msra.mxu0 0
      %500 = vmatprep.subr.bf16.mxu0 0
      %501 = vmatpush2.bf16.msra.mxu0 0
      %502 = vmatprep.subr.bf16.mxu0 0
      %503 = vmatpush2.bf16.msra.mxu0 0
      %504 = vmatprep.subr.bf16.mxu0 0
      %505 = vmatpush2.bf16.msra.mxu0 0
      %506 = vmatprep.mubr.bf16.mxu0 0
      %507 = vmatmul.mubr.bf16.gmra.mxu0 %v390
      %v508 = vpop.f32.mrf.mxu0
      %v509 = vadd.f32 %v316, %v508
      %v510 = vpop.f32.mrf.mxu0
      %v511 = vpop.f32.mrf.mxu0
      %v512 = vadd.f32 %v316, %v511
      %v513 = vpop.f32.mrf.mxu0
      %514 = vmatprep.mubr.bf16.mxu0 0
      %515 = vmatmul.mubr.bf16.gmra.mxu0 %v391
      %v516 = vpop.f32.mrf.mxu0
      %v517 = vadd.f32 %v316, %v516
      %v518 = vpop.f32.mrf.mxu0
      %v519 = vpop.f32.mrf.mxu0
      %v520 = vadd.f32 %v316, %v519
      %v521 = vpop.f32.mrf.mxu0
      %522 = vmatprep.mubr.bf16.mxu0 0
      %523 = vmatmul.mubr.bf16.gmra.mxu0 %v392
      %v524 = vpop.f32.mrf.mxu0
      %v525 = vadd.f32 %v316, %v524
      %v526 = vpop.f32.mrf.mxu0
      %v527 = vpop.f32.mrf.mxu0
      %v528 = vadd.f32 %v316, %v527
      %v529 = vpop.f32.mrf.mxu0
      %530 = vmatprep.mubr.bf16.mxu0 0
      %531 = vmatmul.mubr.bf16.gmra.mxu0 %v393
      %v532 = vpop.f32.mrf.mxu0
      %v533 = vadd.f32 %v316, %v532
      %v534 = vpop.f32.mrf.mxu0
      %v535 = vpop.f32.mrf.mxu0
      %v536 = vadd.f32 %v316, %v535
      %v537 = vpop.f32.mrf.mxu0
      %538 = vmatprep.mubr.bf16.mxu0 0
      %539 = vmatmul.mubr.bf16.gmra.mxu0 %v394
      %v540 = vpop.f32.mrf.mxu0
      %v541 = vadd.f32 %v316, %v540
      %v542 = vpop.f32.mrf.mxu0
      %v543 = vpop.f32.mrf.mxu0
      %v544 = vadd.f32 %v316, %v543
      %v545 = vpop.f32.mrf.mxu0
      %546 = vmatprep.mubr.bf16.mxu0 0
      %547 = vmatmul.mubr.bf16.gmra.mxu0 %v395
      %v548 = vpop.f32.mrf.mxu0
      %v549 = vadd.f32 %v316, %v548
      %v550 = vpop.f32.mrf.mxu0
      %v551 = vpop.f32.mrf.mxu0
      %v552 = vadd.f32 %v316, %v551
      %v553 = vpop.f32.mrf.mxu0
      %554 = vmatprep.mubr.bf16.mxu0 0
      %555 = vmatmul.mubr.bf16.gmra.mxu0 %v396
      %v556 = vpop.f32.mrf.mxu0
      %v557 = vadd.f32 %v316, %v556
      %v558 = vpop.f32.mrf.mxu0
      %v559 = vpop.f32.mrf.mxu0
      %v560 = vadd.f32 %v316, %v559
      %v561 = vpop.f32.mrf.mxu0
      %562 = vmatprep.mubr.bf16.mxu0 0
      %563 = vmatmul.mubr.bf16.gmra.mxu0 %v397
      %v564 = vpop.f32.mrf.mxu0
      %v565 = vadd.f32 %v316, %v564
      %v566 = vpop.f32.mrf.mxu0
      %v567 = vpop.f32.mrf.mxu0
      %v568 = vadd.f32 %v316, %v567
      %v569 = vpop.f32.mrf.mxu0
      %570 = vmatprep.mubr.bf16.mxu0 0
      %571 = vmatmul.mubr.bf16.gmra.mxu0 %v398
      %v572 = vpop.f32.mrf.mxu0
      %v573 = vadd.f32 %v316, %v572
      %v574 = vpop.f32.mrf.mxu0
      %v575 = vpop.f32.mrf.mxu0
      %v576 = vadd.f32 %v316, %v575
      %v577 = vpop.f32.mrf.mxu0
      %578 = vmatprep.mubr.bf16.mxu0 0
      %579 = vmatmul.mubr.bf16.gmra.mxu0 %v399
      %v580 = vpop.f32.mrf.mxu0
      %v581 = vadd.f32 %v316, %v580
      %v582 = vpop.f32.mrf.mxu0
      %v583 = vpop.f32.mrf.mxu0
      %v584 = vadd.f32 %v316, %v583
      %v585 = vpop.f32.mrf.mxu0
      %586 = vmatprep.mubr.bf16.mxu0 0
      %587 = vmatmul.mubr.bf16.gmra.mxu0 %v400
      %v588 = vpop.f32.mrf.mxu0
      %v589 = vadd.f32 %v316, %v588
      %v590 = vpop.f32.mrf.mxu0
      %v591 = vpop.f32.mrf.mxu0
      %v592 = vadd.f32 %v316, %v591
      %v593 = vpop.f32.mrf.mxu0
      %594 = vmatprep.mubr.bf16.mxu0 0
      %595 = vmatmul.mubr.bf16.gmra.mxu0 %v401
      %v596 = vpop.f32.mrf.mxu0
      %v597 = vadd.f32 %v316, %v596
      %v598 = vpop.f32.mrf.mxu0
      %v599 = vpop.f32.mrf.mxu0
      %v600 = vadd.f32 %v316, %v599
      %v601 = vpop.f32.mrf.mxu0
      %602 = vmatprep.mubr.bf16.mxu0 0
      %603 = vmatmul.mubr.bf16.gmra.mxu0 %v402
      %v604 = vpop.f32.mrf.mxu0
      %v605 = vadd.f32 %v316, %v604
      %v606 = vpop.f32.mrf.mxu0
      %v607 = vpop.f32.mrf.mxu0
      %v608 = vadd.f32 %v316, %v607
      %v609 = vpop.f32.mrf.mxu0
      %610 = vmatprep.mubr.bf16.mxu0 0
      %611 = vmatmul.mubr.bf16.gmra.mxu0 %v403
      %v612 = vpop.f32.mrf.mxu0
      %v613 = vadd.f32 %v316, %v612
      %v614 = vpop.f32.mrf.mxu0
      %v615 = vpop.f32.mrf.mxu0
      %v616 = vadd.f32 %v316, %v615
      %v617 = vpop.f32.mrf.mxu0
      %618 = vmatprep.mubr.bf16.mxu0 0
      %619 = vmatmul.mubr.bf16.gmra.mxu0 %v404
      %v620 = vpop.f32.mrf.mxu0
      %v621 = vadd.f32 %v316, %v620
      %v622 = vpop.f32.mrf.mxu0
      %v623 = vpop.f32.mrf.mxu0
      %v624 = vadd.f32 %v316, %v623
      %v625 = vpop.f32.mrf.mxu0
      %626 = vmatprep.mubr.bf16.mxu0 0
      %627 = vmatmul.mubr.bf16.gmra.mxu0 %v405
      %v628 = vpop.f32.mrf.mxu0
      %v629 = vadd.f32 %v316, %v628
      %v630 = vpop.f32.mrf.mxu0
      %v631 = vpop.f32.mrf.mxu0
      %v632 = vadd.f32 %v316, %v631
      %v633 = vpop.f32.mrf.mxu0
      %634 = vmatprep.mubr.bf16.mxu0 0
      %635 = vmatmul.mubr.bf16.gmra.mxu0 %v406
      %v636 = vpop.f32.mrf.mxu0
      %v637 = vadd.f32 %v316, %v636
      %v638 = vpop.f32.mrf.mxu0
      %v639 = vpop.f32.mrf.mxu0
      %v640 = vadd.f32 %v316, %v639
      %v641 = vpop.f32.mrf.mxu0
      %642 = vmatprep.mubr.bf16.mxu0 0
      %643 = vmatmul.mubr.bf16.gmra.mxu0 %v407
      %v644 = vpop.f32.mrf.mxu0
      %v645 = vadd.f32 %v316, %v644
      %v646 = vpop.f32.mrf.mxu0
      %v647 = vpop.f32.mrf.mxu0
      %v648 = vadd.f32 %v316, %v647
      %v649 = vpop.f32.mrf.mxu0
      %650 = vdwg.mxu0
      %651 = vst [vmem:[#allocation2] sm:$0xff] %v509
      %652 = vst [vmem:[#allocation2 + $0x8] sm:$0xff] %v512
      %653 = vst [vmem:[#allocation2 + $0x10] sm:$0xff] %v517
      %654 = vst [vmem:[#allocation2 + $0x18] sm:$0xff] %v520
      %655 = vst [vmem:[#allocation2 + $0x20] sm:$0xff] %v525
      %656 = vst [vmem:[#allocation2 + $0x28] sm:$0xff] %v528
      %657 = vst [vmem:[#allocation2 + $0x30] sm:$0xff] %v533
      %658 = vst [vmem:[#allocation2 + $0x38] sm:$0xff] %v536
      %659 = vst [vmem:[#allocation2 + $0x40] sm:$0xff] %v541
      %660 = vst [vmem:[#allocation2 + $0x48] sm:$0xff] %v544
      %661 = vst [vmem:[#allocation2 + $0x50] sm:$0xff] %v549
      %662 = vst [vmem:[#allocation2 + $0x58] sm:$0xff] %v552
      %663 = vst [vmem:[#allocation2 + $0x60] sm:$0xff] %v557
      %664 = vst [vmem:[#allocation2 + $0x68] sm:$0xff] %v560
      %665 = vst [vmem:[#allocation2 + $0x70] sm:$0xff] %v565
      %666 = vst [vmem:[#allocation2 + $0x78] sm:$0xff] %v568
      %667 = vst [vmem:[#allocation2 + $0x80] sm:$0xff] %v573
      %668 = vst [vmem:[#allocation2 + $0x88] sm:$0xff] %v576
      %669 = vst [vmem:[#allocation2 + $0x90] sm:$0xff] %v581
      %670 = vst [vmem:[#allocation2 + $0x98] sm:$0xff] %v584
      %671 = vst [vmem:[#allocation2 + $0xa0] sm:$0xff] %v589
      %672 = vst [vmem:[#allocation2 + $0xa8] sm:$0xff] %v592
      %673 = vst [vmem:[#allocation2 + $0xb0] sm:$0xff] %v597
      %674 = vst [vmem:[#allocation2 + $0xb8] sm:$0xff] %v600
      %675 = vst [vmem:[#allocation2 + $0xc0] sm:$0xff] %v605
      %676 = vst [vmem:[#allocation2 + $0xc8] sm:$0xff] %v608
      %677 = vst [vmem:[#allocation2 + $0xd0] sm:$0xff] %v613
      %678 = vst [vmem:[#allocation2 + $0xd8] sm:$0xff] %v616
      %679 = vst [vmem:[#allocation2 + $0xe0] sm:$0xff] %v621
      %680 = vst [vmem:[#allocation2 + $0xe8] sm:$0xff] %v624
      %681 = vst [vmem:[#allocation2 + $0xf0] sm:$0xff] %v629
      %682 = vst [vmem:[#allocation2 + $0xf8] sm:$0xff] %v632
      %683 = vst [vmem:[#allocation2 + $0x100] sm:$0xff] %v637
      %684 = vst [vmem:[#allocation2 + $0x108] sm:$0xff] %v640
      %685 = vst [vmem:[#allocation2 + $0x110] sm:$0xff] %v645
      %686 = vst [vmem:[#allocation2 + $0x118] sm:$0xff] %v648
      %v687 = vld [vmem:[%s242] sm:$0xf]
      %v688 = vld [vmem:[%s242 + $0x4] sm:$0xf]
      %v689 = vld [vmem:[%s242 + $0x8] sm:$0xf]
      %v690 = vld [vmem:[%s242 + $0xc] sm:$0xf]
      %v691 = vld [vmem:[%s242 + $0x10] sm:$0xf]
      %v692 = vld [vmem:[%s242 + $0x14] sm:$0xf]
      %v693 = vld [vmem:[%s242 + $0x18] sm:$0xf]
      %v694 = vld [vmem:[%s242 + $0x1c] sm:$0xf]
      %v695 = vld [vmem:[%s242 + $0x20] sm:$0xf]
      %v696 = vld [vmem:[%s242 + $0x24] sm:$0xf]
      %v697 = vld [vmem:[%s242 + $0x28] sm:$0xf]
      %v698 = vld [vmem:[%s242 + $0x2c] sm:$0xf]
      %v699 = vld [vmem:[%s242 + $0x30] sm:$0xf]
      %v700 = vld [vmem:[%s242 + $0x34] sm:$0xf]
      %v701 = vld [vmem:[%s242 + $0x38] sm:$0xf]
      %v702 = vld [vmem:[%s242 + $0x3c] sm:$0xf]
      %v703 = vld [vmem:[%s242 + $0x40] sm:$0xf]
      %v704 = vld [vmem:[%s242 + $0x44] sm:$0xf]
      %v705 = vld [vmem:[%s242 + $0x48] sm:$0xf]
      %v706 = vld [vmem:[%s242 + $0x4c] sm:$0xf]
      %v707 = vld [vmem:[%s242 + $0x50] sm:$0xf]
      %v708 = vld [vmem:[%s242 + $0x54] sm:$0xf]
      %v709 = vld [vmem:[%s242 + $0x58] sm:$0xf]
      %v710 = vld [vmem:[%s242 + $0x5c] sm:$0xf]
      %v711 = vld [vmem:[%s242 + $0x60] sm:$0xf]
      %v712 = vld [vmem:[%s242 + $0x64] sm:$0xf]
      %v713 = vld [vmem:[%s242 + $0x68] sm:$0xf]
      %v714 = vld [vmem:[%s242 + $0x6c] sm:$0xf]
      %v715 = vld [vmem:[%s242 + $0x70] sm:$0xf]
      %v716 = vld [vmem:[%s242 + $0x74] sm:$0xf]
      %v717 = vld [vmem:[%s242 + $0x78] sm:$0xf]
      %v718 = vld [vmem:[%s242 + $0x7c] sm:$0xf]
      %v719 = vld [vmem:[%s242 + $0x80] sm:$0xf]
      %v720 = vld [vmem:[%s242 + $0x84] sm:$0xf]
      %v721 = vld [vmem:[%s242 + $0x88] sm:$0xf]
      %v722 = vld [vmem:[%s242 + $0x8c] sm:$0xf]
      %v723 = vld [vmem:[%s242 + $0x90] sm:$0x1]
      %s724 = scalar_lea.vmem %s1, 64
      %v725 = vld [vmem:[%s724] sm:$0xf]
      %v726 = vld [vmem:[%s724 + $0x4] sm:$0xf]
      %v727 = vld [vmem:[%s724 + $0x8] sm:$0xf]
      %v728 = vld [vmem:[%s724 + $0xc] sm:$0xf]
      %v729 = vld [vmem:[%s724 + $0x10] sm:$0xf]
      %v730 = vld [vmem:[%s724 + $0x14] sm:$0xf]
      %v731 = vld [vmem:[%s724 + $0x18] sm:$0xf]
      %v732 = vld [vmem:[%s724 + $0x1c] sm:$0xf]
      %v733 = vld [vmem:[%s724 + $0x20] sm:$0xf]
      %v734 = vld [vmem:[%s724 + $0x24] sm:$0xf]
      %v735 = vld [vmem:[%s724 + $0x28] sm:$0xf]
      %v736 = vld [vmem:[%s724 + $0x2c] sm:$0xf]
      %v737 = vld [vmem:[%s724 + $0x30] sm:$0xf]
      %v738 = vld [vmem:[%s724 + $0x34] sm:$0xf]
      %v739 = vld [vmem:[%s724 + $0x38] sm:$0xf]
      %v740 = vld [vmem:[%s724 + $0x3c] sm:$0xf]
      %v778 = vunpack.c.l.b16 %v687
      %v779 = vunpack.c.l.b16 %v688
      %v780 = vunpack.c.l.b16 %v689
      %v781 = vunpack.c.l.b16 %v690
      %v782 = vunpack.c.l.b16 %v691
      %v783 = vunpack.c.l.b16 %v692
      %v784 = vunpack.c.l.b16 %v693
      %v785 = vunpack.c.l.b16 %v694
      %v786 = vunpack.c.l.b16 %v695
      %v787 = vunpack.c.l.b16 %v696
      %v788 = vunpack.c.l.b16 %v697
      %v789 = vunpack.c.l.b16 %v698
      %v790 = vunpack.c.l.b16 %v699
      %v791 = vunpack.c.l.b16 %v700
      %v792 = vunpack.c.l.b16 %v701
      %v793 = vunpack.c.l.b16 %v702
      %v794 = vunpack.c.l.b16 %v703
      %v795 = vunpack.c.l.b16 %v704
      %v796 = vunpack.c.l.b16 %v705
      %v797 = vunpack.c.l.b16 %v706
      %v798 = vunpack.c.l.b16 %v707
      %v799 = vunpack.c.l.b16 %v708
      %v800 = vunpack.c.l.b16 %v709
      %v801 = vunpack.c.l.b16 %v710
      %v802 = vunpack.c.l.b16 %v711
      %v803 = vunpack.c.l.b16 %v712
      %v804 = vunpack.c.l.b16 %v713
      %v805 = vunpack.c.l.b16 %v714
      %v806 = vunpack.c.l.b16 %v715
      %v807 = vunpack.c.l.b16 %v716
      %v808 = vunpack.c.l.b16 %v717
      %v809 = vunpack.c.l.b16 %v718
      %v810 = vunpack.c.l.b16 %v719
      %v811 = vunpack.c.l.b16 %v720
      %v812 = vunpack.c.l.b16 %v721
      %v813 = vunpack.c.l.b16 %v722
      %v814 = vunpack.c.l.b16 %v723
      %v815 = vpack.c.b16 %v779, %v778
      %v816 = vpack.c.b16 %v781, %v780
      %v817 = vpack.c.b16 %v783, %v782
      %v818 = vpack.c.b16 %v785, %v784
      %v819 = vpack.c.b16 %v787, %v786
      %v820 = vpack.c.b16 %v789, %v788
      %v821 = vpack.c.b16 %v791, %v790
      %v822 = vpack.c.b16 %v793, %v792
      %v823 = vpack.c.b16 %v795, %v794
      %v824 = vpack.c.b16 %v797, %v796
      %v825 = vpack.c.b16 %v799, %v798
      %v826 = vpack.c.b16 %v801, %v800
      %v827 = vpack.c.b16 %v803, %v802
      %v828 = vpack.c.b16 %v805, %v804
      %v829 = vpack.c.b16 %v807, %v806
      %v830 = vpack.c.b16 %v809, %v808
      %v831 = vpack.c.b16 %v811, %v810
      %v832 = vpack.c.b16 %v813, %v812
      %v833 = vpack.c.b16 %v814, %v814
      %vm834 = vsmask.f32 7424
      %v836 = vshrl.u32 %v815, 16
      %v838 = vshll.u32 %v815, 16
      %v840 = vrot.slane %v838, 1
      %v841 = vor.u32 %v836, %v840
      %v843 = vshll.u32 %v816, 16
      %v845 = vrot.slane %v843, 1
      %v846 = vsel %vm834, %v841, %v845
      %v847 = vshrl.u32 %v816, 16
      %v849 = vor.u32 %v847, %v845
      %v851 = vshll.u32 %v817, 16
      %v853 = vrot.slane %v851, 1
      %v854 = vsel %vm834, %v849, %v853
      %v855 = vshrl.u32 %v817, 16
      %v857 = vor.u32 %v855, %v853
      %v859 = vshll.u32 %v818, 16
      %v861 = vrot.slane %v859, 1
      %v862 = vsel %vm834, %v857, %v861
      %v863 = vshrl.u32 %v818, 16
      %v865 = vor.u32 %v863, %v861
      %v867 = vshll.u32 %v819, 16
      %v869 = vrot.slane %v867, 1
      %v870 = vsel %vm834, %v865, %v869
      %v871 = vshrl.u32 %v819, 16
      %v873 = vor.u32 %v871, %v869
      %v875 = vshll.u32 %v820, 16
      %v877 = vrot.slane %v875, 1
      %v878 = vsel %vm834, %v873, %v877
      %v879 = vshrl.u32 %v820, 16
      %v881 = vor.u32 %v879, %v877
      %v883 = vshll.u32 %v821, 16
      %v885 = vrot.slane %v883, 1
      %v886 = vsel %vm834, %v881, %v885
      %v887 = vshrl.u32 %v821, 16
      %v889 = vor.u32 %v887, %v885
      %v891 = vshll.u32 %v822, 16
      %v893 = vrot.slane %v891, 1
      %v894 = vsel %vm834, %v889, %v893
      %v895 = vshrl.u32 %v822, 16
      %v897 = vor.u32 %v895, %v893
      %v899 = vshll.u32 %v823, 16
      %v901 = vrot.slane %v899, 1
      %v902 = vsel %vm834, %v897, %v901
      %v903 = vshrl.u32 %v823, 16
      %v905 = vor.u32 %v903, %v901
      %v907 = vshll.u32 %v824, 16
      %v909 = vrot.slane %v907, 1
      %v910 = vsel %vm834, %v905, %v909
      %v911 = vshrl.u32 %v824, 16
      %v913 = vor.u32 %v911, %v909
      %v915 = vshll.u32 %v825, 16
      %v917 = vrot.slane %v915, 1
      %v918 = vsel %vm834, %v913, %v917
      %v919 = vshrl.u32 %v825, 16
      %v921 = vor.u32 %v919, %v917
      %v923 = vshll.u32 %v826, 16
      %v925 = vrot.slane %v923, 1
      %v926 = vsel %vm834, %v921, %v925
      %v927 = vshrl.u32 %v826, 16
      %v929 = vor.u32 %v927, %v925
      %v931 = vshll.u32 %v827, 16
      %v933 = vrot.slane %v931, 1
      %v934 = vsel %vm834, %v929, %v933
      %v935 = vshrl.u32 %v827, 16
      %v937 = vor.u32 %v935, %v933
      %v939 = vshll.u32 %v828, 16
      %v941 = vrot.slane %v939, 1
      %v942 = vsel %vm834, %v937, %v941
      %v943 = vshrl.u32 %v828, 16
      %v945 = vor.u32 %v943, %v941
      %v947 = vshll.u32 %v829, 16
      %v949 = vrot.slane %v947, 1
      %v950 = vsel %vm834, %v945, %v949
      %v951 = vshrl.u32 %v829, 16
      %v953 = vor.u32 %v951, %v949
      %v955 = vshll.u32 %v830, 16
      %v957 = vrot.slane %v955, 1
      %v958 = vsel %vm834, %v953, %v957
      %v959 = vshrl.u32 %v830, 16
      %v961 = vor.u32 %v959, %v957
      %v963 = vshll.u32 %v831, 16
      %v965 = vrot.slane %v963, 1
      %v966 = vsel %vm834, %v961, %v965
      %v967 = vshrl.u32 %v831, 16
      %v969 = vor.u32 %v967, %v965
      %v971 = vshll.u32 %v832, 16
      %v973 = vrot.slane %v971, 1
      %v974 = vsel %vm834, %v969, %v973
      %v975 = vshrl.u32 %v832, 16
      %v977 = vor.u32 %v975, %v973
      %v979 = vshll.u32 %v833, 16
      %v981 = vrot.slane %v979, 1
      %v982 = vsel %vm834, %v977, %v981
      %v1017 = vunpack.c.l.b16 %v725
      %v1018 = vunpack.c.l.b16 %v726
      %v1019 = vunpack.c.l.b16 %v727
      %v1020 = vunpack.c.l.b16 %v728
      %v1021 = vunpack.c.l.b16 %v729
      %v1022 = vunpack.c.l.b16 %v730
      %v1023 = vunpack.c.l.b16 %v731
      %v1024 = vunpack.c.l.b16 %v732
      %v1025 = vunpack.c.l.b16 %v733
      %v1026 = vunpack.c.l.b16 %v734
      %v1027 = vunpack.c.l.b16 %v735
      %v1028 = vunpack.c.l.b16 %v736
      %v1029 = vunpack.c.l.b16 %v737
      %v1030 = vunpack.c.l.b16 %v738
      %v1031 = vunpack.c.l.b16 %v739
      %v1032 = vunpack.c.l.b16 %v740
      %v1033 = vpack.c.b16 %v1018, %v1017
      %v1034 = vpack.c.b16 %v1020, %v1019
      %v1035 = vpack.c.b16 %v1022, %v1021
      %v1036 = vpack.c.b16 %v1024, %v1023
      %v1037 = vpack.c.b16 %v1026, %v1025
      %v1038 = vpack.c.b16 %v1028, %v1027
      %v1039 = vpack.c.b16 %v1030, %v1029
      %v1040 = vpack.c.b16 %v1032, %v1031
      %1049 = vmatprep.subr.bf16.mxu0 0
      %1050 = vmatpush1.bf16.msra.mxu0 %v1040
      %1051 = vmatprep.subr.bf16.mxu0 0
      %1052 = vmatpush1.bf16.msra.mxu0 %v1039
      %1053 = vmatprep.subr.bf16.mxu0 0
      %1054 = vmatpush1.bf16.msra.mxu0 %v1038
      %1055 = vmatprep.subr.bf16.mxu0 0
      %1056 = vmatpush1.bf16.msra.mxu0 %v1037
      %1057 = vmatprep.subr.bf16.mxu0 0
      %1058 = vmatpush1.bf16.msra.mxu0 %v1036
      %1059 = vmatprep.subr.bf16.mxu0 0
      %1060 = vmatpush1.bf16.msra.mxu0 %v1035
      %1061 = vmatprep.subr.bf16.mxu0 0
      %1062 = vmatpush1.bf16.msra.mxu0 %v1034
      %1063 = vmatprep.subr.bf16.mxu0 0
      %1064 = vmatpush1.bf16.msra.mxu0 %v1033
      %1065 = vmatprep.subr.bf16.mxu0 0
      %1066 = vmatpush2.bf16.msra.mxu0 0
      %1067 = vmatprep.subr.bf16.mxu0 0
      %1068 = vmatpush2.bf16.msra.mxu0 0
      %1069 = vmatprep.subr.bf16.mxu0 0
      %1070 = vmatpush2.bf16.msra.mxu0 0
      %1071 = vmatprep.subr.bf16.mxu0 0
      %1072 = vmatpush2.bf16.msra.mxu0 0
      %1073 = vmatprep.subr.bf16.mxu0 0
      %1074 = vmatpush2.bf16.msra.mxu0 0
      %1075 = vmatprep.subr.bf16.mxu0 0
      %1076 = vmatpush2.bf16.msra.mxu0 0
      %1077 = vmatprep.subr.bf16.mxu0 0
      %1078 = vmatpush2.bf16.msra.mxu0 0
      %1079 = vmatprep.subr.bf16.mxu0 0
      %1080 = vmatpush2.bf16.msra.mxu0 0
      %1081 = vmatprep.mubr.bf16.mxu0 0
      %1082 = vmatmul.mubr.bf16.gmra.mxu0 %v846
      %v1083 = vpop.f32.mrf.mxu0
      %v1084 = vadd.f32 0.0, %v1083
      %v1085 = vpop.f32.mrf.mxu0
      %v1086 = vpop.f32.mrf.mxu0
      %v1087 = vadd.f32 0.0, %v1086
      %v1088 = vpop.f32.mrf.mxu0
      %1089 = vmatprep.mubr.bf16.mxu0 0
      %1090 = vmatmul.mubr.bf16.gmra.mxu0 %v854
      %v1091 = vpop.f32.mrf.mxu0
      %v1092 = vadd.f32 0.0, %v1091
      %v1093 = vpop.f32.mrf.mxu0
      %v1094 = vpop.f32.mrf.mxu0
      %v1095 = vadd.f32 0.0, %v1094
      %v1096 = vpop.f32.mrf.mxu0
      %1097 = vmatprep.mubr.bf16.mxu0 0
      %1098 = vmatmul.mubr.bf16.gmra.mxu0 %v862
      %v1099 = vpop.f32.mrf.mxu0
      %v1100 = vadd.f32 0.0, %v1099
      %v1101 = vpop.f32.mrf.mxu0
      %v1102 = vpop.f32.mrf.mxu0
      %v1103 = vadd.f32 0.0, %v1102
      %v1104 = vpop.f32.mrf.mxu0
      %1105 = vmatprep.mubr.bf16.mxu0 0
      %1106 = vmatmul.mubr.bf16.gmra.mxu0 %v870
      %v1107 = vpop.f32.mrf.mxu0
      %v1108 = vadd.f32 0.0, %v1107
      %v1109 = vpop.f32.mrf.mxu0
      %v1110 = vpop.f32.mrf.mxu0
      %v1111 = vadd.f32 0.0, %v1110
      %v1112 = vpop.f32.mrf.mxu0
      %1113 = vmatprep.mubr.bf16.mxu0 0
      %1114 = vmatmul.mubr.bf16.gmra.mxu0 %v878
      %v1115 = vpop.f32.mrf.mxu0
      %v1116 = vadd.f32 0.0, %v1115
      %v1117 = vpop.f32.mrf.mxu0
      %v1118 = vpop.f32.mrf.mxu0
      %v1119 = vadd.f32 0.0, %v1118
      %v1120 = vpop.f32.mrf.mxu0
      %1121 = vmatprep.mubr.bf16.mxu0 0
      %1122 = vmatmul.mubr.bf16.gmra.mxu0 %v886
      %v1123 = vpop.f32.mrf.mxu0
      %v1124 = vadd.f32 0.0, %v1123
      %v1125 = vpop.f32.mrf.mxu0
      %v1126 = vpop.f32.mrf.mxu0
      %v1127 = vadd.f32 0.0, %v1126
      %v1128 = vpop.f32.mrf.mxu0
      %1129 = vmatprep.mubr.bf16.mxu0 0
      %1130 = vmatmul.mubr.bf16.gmra.mxu0 %v894
      %v1131 = vpop.f32.mrf.mxu0
      %v1132 = vadd.f32 0.0, %v1131
      %v1133 = vpop.f32.mrf.mxu0
      %v1134 = vpop.f32.mrf.mxu0
      %v1135 = vadd.f32 0.0, %v1134
      %v1136 = vpop.f32.mrf.mxu0
      %1137 = vmatprep.mubr.bf16.mxu0 0
      %1138 = vmatmul.mubr.bf16.gmra.mxu0 %v902
      %v1139 = vpop.f32.mrf.mxu0
      %v1140 = vadd.f32 0.0, %v1139
      %v1141 = vpop.f32.mrf.mxu0
      %v1142 = vpop.f32.mrf.mxu0
      %v1143 = vadd.f32 0.0, %v1142
      %v1144 = vpop.f32.mrf.mxu0
      %1145 = vmatprep.mubr.bf16.mxu0 0
      %1146 = vmatmul.mubr.bf16.gmra.mxu0 %v910
      %v1147 = vpop.f32.mrf.mxu0
      %v1148 = vadd.f32 0.0, %v1147
      %v1149 = vpop.f32.mrf.mxu0
      %v1150 = vpop.f32.mrf.mxu0
      %v1151 = vadd.f32 0.0, %v1150
      %v1152 = vpop.f32.mrf.mxu0
      %1153 = vmatprep.mubr.bf16.mxu0 0
      %1154 = vmatmul.mubr.bf16.gmra.mxu0 %v918
      %v1155 = vpop.f32.mrf.mxu0
      %v1156 = vadd.f32 0.0, %v1155
      %v1157 = vpop.f32.mrf.mxu0
      %v1158 = vpop.f32.mrf.mxu0
      %v1159 = vadd.f32 0.0, %v1158
      %v1160 = vpop.f32.mrf.mxu0
      %1161 = vmatprep.mubr.bf16.mxu0 0
      %1162 = vmatmul.mubr.bf16.gmra.mxu0 %v926
      %v1163 = vpop.f32.mrf.mxu0
      %v1164 = vadd.f32 0.0, %v1163
      %v1165 = vpop.f32.mrf.mxu0
      %v1166 = vpop.f32.mrf.mxu0
      %v1167 = vadd.f32 0.0, %v1166
      %v1168 = vpop.f32.mrf.mxu0
      %1169 = vmatprep.mubr.bf16.mxu0 0
      %1170 = vmatmul.mubr.bf16.gmra.mxu0 %v934
      %v1171 = vpop.f32.mrf.mxu0
      %v1172 = vadd.f32 0.0, %v1171
      %v1173 = vpop.f32.mrf.mxu0
      %v1174 = vpop.f32.mrf.mxu0
      %v1175 = vadd.f32 0.0, %v1174
      %v1176 = vpop.f32.mrf.mxu0
      %1177 = vmatprep.mubr.bf16.mxu0 0
      %1178 = vmatmul.mubr.bf16.gmra.mxu0 %v942
      %v1179 = vpop.f32.mrf.mxu0
      %v1180 = vadd.f32 0.0, %v1179
      %v1181 = vpop.f32.mrf.mxu0
      %v1182 = vpop.f32.mrf.mxu0
      %v1183 = vadd.f32 0.0, %v1182
      %v1184 = vpop.f32.mrf.mxu0
      %1185 = vmatprep.mubr.bf16.mxu0 0
      %1186 = vmatmul.mubr.bf16.gmra.mxu0 %v950
      %v1187 = vpop.f32.mrf.mxu0
      %v1188 = vadd.f32 0.0, %v1187
      %v1189 = vpop.f32.mrf.mxu0
      %v1190 = vpop.f32.mrf.mxu0
      %v1191 = vadd.f32 0.0, %v1190
      %v1192 = vpop.f32.mrf.mxu0
      %1193 = vmatprep.mubr.bf16.mxu0 0
      %1194 = vmatmul.mubr.bf16.gmra.mxu0 %v958
      %v1195 = vpop.f32.mrf.mxu0
      %v1196 = vadd.f32 0.0, %v1195
      %v1197 = vpop.f32.mrf.mxu0
      %v1198 = vpop.f32.mrf.mxu0
      %v1199 = vadd.f32 0.0, %v1198
      %v1200 = vpop.f32.mrf.mxu0
      %1201 = vmatprep.mubr.bf16.mxu0 0
      %1202 = vmatmul.mubr.bf16.gmra.mxu0 %v966
      %v1203 = vpop.f32.mrf.mxu0
      %v1204 = vadd.f32 0.0, %v1203
      %v1205 = vpop.f32.mrf.mxu0
      %v1206 = vpop.f32.mrf.mxu0
      %v1207 = vadd.f32 0.0, %v1206
      %v1208 = vpop.f32.mrf.mxu0
      %1209 = vmatprep.mubr.bf16.mxu0 0
      %1210 = vmatmul.mubr.bf16.gmra.mxu0 %v974
      %v1211 = vpop.f32.mrf.mxu0
      %v1212 = vadd.f32 0.0, %v1211
      %v1213 = vpop.f32.mrf.mxu0
      %v1214 = vpop.f32.mrf.mxu0
      %v1215 = vadd.f32 0.0, %v1214
      %v1216 = vpop.f32.mrf.mxu0
      %1217 = vmatprep.mubr.bf16.mxu0 0
      %1218 = vmatmul.mubr.bf16.gmra.mxu0 %v982
      %v1219 = vpop.f32.mrf.mxu0
      %v1220 = vadd.f32 0.0, %v1219
      %v1221 = vpop.f32.mrf.mxu0
      %v1222 = vpop.f32.mrf.mxu0
      %v1223 = vadd.f32 0.0, %v1222
      %v1224 = vpop.f32.mrf.mxu0
      %1225 = vdwg.mxu0
      %v1226 = vld [vmem:[#allocation2] sm:$0xff]
      %v1227 = vld [vmem:[#allocation2 + $0x8] sm:$0xff]
      %v1228 = vld [vmem:[#allocation2 + $0x10] sm:$0xff]
      %v1229 = vld [vmem:[#allocation2 + $0x18] sm:$0xff]
      %v1230 = vld [vmem:[#allocation2 + $0x20] sm:$0xff]
      %v1231 = vld [vmem:[#allocation2 + $0x28] sm:$0xff]
      %v1232 = vld [vmem:[#allocation2 + $0x30] sm:$0xff]
      %v1233 = vld [vmem:[#allocation2 + $0x38] sm:$0xff]
      %v1234 = vld [vmem:[#allocation2 + $0x40] sm:$0xff]
      %v1235 = vld [vmem:[#allocation2 + $0x48] sm:$0xff]
      %v1236 = vld [vmem:[#allocation2 + $0x50] sm:$0xff]
      %v1237 = vld [vmem:[#allocation2 + $0x58] sm:$0xff]
      %v1238 = vld [vmem:[#allocation2 + $0x60] sm:$0xff]
      %v1239 = vld [vmem:[#allocation2 + $0x68] sm:$0xff]
      %v1240 = vld [vmem:[#allocation2 + $0x70] sm:$0xff]
      %v1241 = vld [vmem:[#allocation2 + $0x78] sm:$0xff]
      %v1242 = vld [vmem:[#allocation2 + $0x80] sm:$0xff]
      %v1243 = vld [vmem:[#allocation2 + $0x88] sm:$0xff]
      %v1244 = vld [vmem:[#allocation2 + $0x90] sm:$0xff]
      %v1245 = vld [vmem:[#allocation2 + $0x98] sm:$0xff]
      %v1246 = vld [vmem:[#allocation2 + $0xa0] sm:$0xff]
      %v1247 = vld [vmem:[#allocation2 + $0xa8] sm:$0xff]
      %v1248 = vld [vmem:[#allocation2 + $0xb0] sm:$0xff]
      %v1249 = vld [vmem:[#allocation2 + $0xb8] sm:$0xff]
      %v1250 = vld [vmem:[#allocation2 + $0xc0] sm:$0xff]
      %v1251 = vld [vmem:[#allocation2 + $0xc8] sm:$0xff]
      %v1252 = vld [vmem:[#allocation2 + $0xd0] sm:$0xff]
      %v1253 = vld [vmem:[#allocation2 + $0xd8] sm:$0xff]
      %v1254 = vld [vmem:[#allocation2 + $0xe0] sm:$0xff]
      %v1255 = vld [vmem:[#allocation2 + $0xe8] sm:$0xff]
      %v1256 = vld [vmem:[#allocation2 + $0xf0] sm:$0xff]
      %v1257 = vld [vmem:[#allocation2 + $0xf8] sm:$0xff]
      %v1258 = vld [vmem:[#allocation2 + $0x100] sm:$0xff]
      %v1259 = vld [vmem:[#allocation2 + $0x108] sm:$0xff]
      %v1260 = vld [vmem:[#allocation2 + $0x110] sm:$0xff]
      %v1261 = vld [vmem:[#allocation2 + $0x118] sm:$0xff]
      %v1262 = vadd.f32 %v1226, %v1084
      %v1263 = vadd.f32 %v1227, %v1087
      %v1264 = vadd.f32 %v1228, %v1092
      %v1265 = vadd.f32 %v1229, %v1095
      %v1266 = vadd.f32 %v1230, %v1100
      %v1267 = vadd.f32 %v1231, %v1103
      %v1268 = vadd.f32 %v1232, %v1108
      %v1269 = vadd.f32 %v1233, %v1111
      %v1270 = vadd.f32 %v1234, %v1116
      %v1271 = vadd.f32 %v1235, %v1119
      %v1272 = vadd.f32 %v1236, %v1124
      %v1273 = vadd.f32 %v1237, %v1127
      %v1274 = vadd.f32 %v1238, %v1132
      %v1275 = vadd.f32 %v1239, %v1135
      %v1276 = vadd.f32 %v1240, %v1140
      %v1277 = vadd.f32 %v1241, %v1143
      %v1278 = vadd.f32 %v1242, %v1148
      %v1279 = vadd.f32 %v1243, %v1151
      %v1280 = vadd.f32 %v1244, %v1156
      %v1281 = vadd.f32 %v1245, %v1159
      %v1282 = vadd.f32 %v1246, %v1164
      %v1283 = vadd.f32 %v1247, %v1167
      %v1284 = vadd.f32 %v1248, %v1172
      %v1285 = vadd.f32 %v1249, %v1175
      %v1286 = vadd.f32 %v1250, %v1180
      %v1287 = vadd.f32 %v1251, %v1183
      %v1288 = vadd.f32 %v1252, %v1188
      %v1289 = vadd.f32 %v1253, %v1191
      %v1290 = vadd.f32 %v1254, %v1196
      %v1291 = vadd.f32 %v1255, %v1199
      %v1292 = vadd.f32 %v1256, %v1204
      %v1293 = vadd.f32 %v1257, %v1207
      %v1294 = vadd.f32 %v1258, %v1212
      %v1295 = vadd.f32 %v1259, %v1215
      %v1296 = vadd.f32 %v1260, %v1220
      %v1297 = vadd.f32 %v1261, %v1223
      %1298 = vst [vmem:[#allocation2] sm:$0xff] %v1262
      %1299 = vst [vmem:[#allocation2 + $0x8] sm:$0xff] %v1263
      %1300 = vst [vmem:[#allocation2 + $0x10] sm:$0xff] %v1264
      %1301 = vst [vmem:[#allocation2 + $0x18] sm:$0xff] %v1265
      %1302 = vst [vmem:[#allocation2 + $0x20] sm:$0xff] %v1266
      %1303 = vst [vmem:[#allocation2 + $0x28] sm:$0xff] %v1267
      %1304 = vst [vmem:[#allocation2 + $0x30] sm:$0xff] %v1268
      %1305 = vst [vmem:[#allocation2 + $0x38] sm:$0xff] %v1269
      %1306 = vst [vmem:[#allocation2 + $0x40] sm:$0xff] %v1270
      %1307 = vst [vmem:[#allocation2 + $0x48] sm:$0xff] %v1271
      %1308 = vst [vmem:[#allocation2 + $0x50] sm:$0xff] %v1272
      %1309 = vst [vmem:[#allocation2 + $0x58] sm:$0xff] %v1273
      %1310 = vst [vmem:[#allocation2 + $0x60] sm:$0xff] %v1274
      %1311 = vst [vmem:[#allocation2 + $0x68] sm:$0xff] %v1275
      %1312 = vst [vmem:[#allocation2 + $0x70] sm:$0xff] %v1276
      %1313 = vst [vmem:[#allocation2 + $0x78] sm:$0xff] %v1277
      %1314 = vst [vmem:[#allocation2 + $0x80] sm:$0xff] %v1278
      %1315 = vst [vmem:[#allocation2 + $0x88] sm:$0xff] %v1279
      %1316 = vst [vmem:[#allocation2 + $0x90] sm:$0xff] %v1280
      %1317 = vst [vmem:[#allocation2 + $0x98] sm:$0xff] %v1281
      %1318 = vst [vmem:[#allocation2 + $0xa0] sm:$0xff] %v1282
      %1319 = vst [vmem:[#allocation2 + $0xa8] sm:$0xff] %v1283
      %1320 = vst [vmem:[#allocation2 + $0xb0] sm:$0xff] %v1284
      %1321 = vst [vmem:[#allocation2 + $0xb8] sm:$0xff] %v1285
      %1322 = vst [vmem:[#allocation2 + $0xc0] sm:$0xff] %v1286
      %1323 = vst [vmem:[#allocation2 + $0xc8] sm:$0xff] %v1287
      %1324 = vst [vmem:[#allocation2 + $0xd0] sm:$0xff] %v1288
      %1325 = vst [vmem:[#allocation2 + $0xd8] sm:$0xff] %v1289
      %1326 = vst [vmem:[#allocation2 + $0xe0] sm:$0xff] %v1290
      %1327 = vst [vmem:[#allocation2 + $0xe8] sm:$0xff] %v1291
      %1328 = vst [vmem:[#allocation2 + $0xf0] sm:$0xff] %v1292
      %1329 = vst [vmem:[#allocation2 + $0xf8] sm:$0xff] %v1293
      %1330 = vst [vmem:[#allocation2 + $0x100] sm:$0xff] %v1294
      %1331 = vst [vmem:[#allocation2 + $0x108] sm:$0xff] %v1295
      %1332 = vst [vmem:[#allocation2 + $0x110] sm:$0xff] %v1296
      %1333 = vst [vmem:[#allocation2 + $0x118] sm:$0xff] %v1297
      %v1334 = vld [vmem:[%s242] sm:$0xe]
      %v1335 = vld [vmem:[%s242 + $0x4] sm:$0xf]
      %v1336 = vld [vmem:[%s242 + $0x8] sm:$0xf]
      %v1337 = vld [vmem:[%s242 + $0xc] sm:$0xf]
      %v1338 = vld [vmem:[%s242 + $0x10] sm:$0xf]
      %v1339 = vld [vmem:[%s242 + $0x14] sm:$0xf]
      %v1340 = vld [vmem:[%s242 + $0x18] sm:$0xf]
      %v1341 = vld [vmem:[%s242 + $0x1c] sm:$0xf]
      %v1342 = vld [vmem:[%s242 + $0x20] sm:$0xf]
      %v1343 = vld [vmem:[%s242 + $0x24] sm:$0xf]
      %v1344 = vld [vmem:[%s242 + $0x28] sm:$0xf]
      %v1345 = vld [vmem:[%s242 + $0x2c] sm:$0xf]
      %v1346 = vld [vmem:[%s242 + $0x30] sm:$0xf]
      %v1347 = vld [vmem:[%s242 + $0x34] sm:$0xf]
      %v1348 = vld [vmem:[%s242 + $0x38] sm:$0xf]
      %v1349 = vld [vmem:[%s242 + $0x3c] sm:$0xf]
      %v1350 = vld [vmem:[%s242 + $0x40] sm:$0xf]
      %v1351 = vld [vmem:[%s242 + $0x44] sm:$0xf]
      %v1352 = vld [vmem:[%s242 + $0x48] sm:$0xf]
      %v1353 = vld [vmem:[%s242 + $0x4c] sm:$0xf]
      %v1354 = vld [vmem:[%s242 + $0x50] sm:$0xf]
      %v1355 = vld [vmem:[%s242 + $0x54] sm:$0xf]
      %v1356 = vld [vmem:[%s242 + $0x58] sm:$0xf]
      %v1357 = vld [vmem:[%s242 + $0x5c] sm:$0xf]
      %v1358 = vld [vmem:[%s242 + $0x60] sm:$0xf]
      %v1359 = vld [vmem:[%s242 + $0x64] sm:$0xf]
      %v1360 = vld [vmem:[%s242 + $0x68] sm:$0xf]
      %v1361 = vld [vmem:[%s242 + $0x6c] sm:$0xf]
      %v1362 = vld [vmem:[%s242 + $0x70] sm:$0xf]
      %v1363 = vld [vmem:[%s242 + $0x74] sm:$0xf]
      %v1364 = vld [vmem:[%s242 + $0x78] sm:$0xf]
      %v1365 = vld [vmem:[%s242 + $0x7c] sm:$0xf]
      %v1366 = vld [vmem:[%s242 + $0x80] sm:$0xf]
      %v1367 = vld [vmem:[%s242 + $0x84] sm:$0xf]
      %v1368 = vld [vmem:[%s242 + $0x88] sm:$0xf]
      %v1369 = vld [vmem:[%s242 + $0x8c] sm:$0xf]
      %v1370 = vld [vmem:[%s242 + $0x90] sm:$0x1]
      %s1371 = scalar_lea.vmem %s1, 128
      %v1372 = vld [vmem:[%s1371] sm:$0xf]
      %v1373 = vld [vmem:[%s1371 + $0x4] sm:$0xf]
      %v1374 = vld [vmem:[%s1371 + $0x8] sm:$0xf]
      %v1375 = vld [vmem:[%s1371 + $0xc] sm:$0xf]
      %v1376 = vld [vmem:[%s1371 + $0x10] sm:$0xf]
      %v1377 = vld [vmem:[%s1371 + $0x14] sm:$0xf]
      %v1378 = vld [vmem:[%s1371 + $0x18] sm:$0xf]
      %v1379 = vld [vmem:[%s1371 + $0x1c] sm:$0xf]
      %v1380 = vld [vmem:[%s1371 + $0x20] sm:$0xf]
      %v1381 = vld [vmem:[%s1371 + $0x24] sm:$0xf]
      %v1382 = vld [vmem:[%s1371 + $0x28] sm:$0xf]
      %v1383 = vld [vmem:[%s1371 + $0x2c] sm:$0xf]
      %v1384 = vld [vmem:[%s1371 + $0x30] sm:$0xf]
      %v1385 = vld [vmem:[%s1371 + $0x34] sm:$0xf]
      %v1386 = vld [vmem:[%s1371 + $0x38] sm:$0xf]
      %v1387 = vld [vmem:[%s1371 + $0x3c] sm:$0xf]
      %v1425 = vunpack.c.l.b16 %v1334
      %v1426 = vunpack.c.l.b16 %v1335
      %v1427 = vunpack.c.l.b16 %v1336
      %v1428 = vunpack.c.l.b16 %v1337
      %v1429 = vunpack.c.l.b16 %v1338
      %v1430 = vunpack.c.l.b16 %v1339
      %v1431 = vunpack.c.l.b16 %v1340
      %v1432 = vunpack.c.l.b16 %v1341
      %v1433 = vunpack.c.l.b16 %v1342
      %v1434 = vunpack.c.l.b16 %v1343
      %v1435 = vunpack.c.l.b16 %v1344
      %v1436 = vunpack.c.l.b16 %v1345
      %v1437 = vunpack.c.l.b16 %v1346
      %v1438 = vunpack.c.l.b16 %v1347
      %v1439 = vunpack.c.l.b16 %v1348
      %v1440 = vunpack.c.l.b16 %v1349
      %v1441 = vunpack.c.l.b16 %v1350
      %v1442 = vunpack.c.l.b16 %v1351
      %v1443 = vunpack.c.l.b16 %v1352
      %v1444 = vunpack.c.l.b16 %v1353
      %v1445 = vunpack.c.l.b16 %v1354
      %v1446 = vunpack.c.l.b16 %v1355
      %v1447 = vunpack.c.l.b16 %v1356
      %v1448 = vunpack.c.l.b16 %v1357
      %v1449 = vunpack.c.l.b16 %v1358
      %v1450 = vunpack.c.l.b16 %v1359
      %v1451 = vunpack.c.l.b16 %v1360
      %v1452 = vunpack.c.l.b16 %v1361
      %v1453 = vunpack.c.l.b16 %v1362
      %v1454 = vunpack.c.l.b16 %v1363
      %v1455 = vunpack.c.l.b16 %v1364
      %v1456 = vunpack.c.l.b16 %v1365
      %v1457 = vunpack.c.l.b16 %v1366
      %v1458 = vunpack.c.l.b16 %v1367
      %v1459 = vunpack.c.l.b16 %v1368
      %v1460 = vunpack.c.l.b16 %v1369
      %v1461 = vunpack.c.l.b16 %v1370
      %v1462 = vpack.c.b16 %v1426, %v1425
      %v1463 = vpack.c.b16 %v1428, %v1427
      %v1464 = vpack.c.b16 %v1430, %v1429
      %v1465 = vpack.c.b16 %v1432, %v1431
      %v1466 = vpack.c.b16 %v1434, %v1433
      %v1467 = vpack.c.b16 %v1436, %v1435
      %v1468 = vpack.c.b16 %v1438, %v1437
      %v1469 = vpack.c.b16 %v1440, %v1439
      %v1470 = vpack.c.b16 %v1442, %v1441
      %v1471 = vpack.c.b16 %v1444, %v1443
      %v1472 = vpack.c.b16 %v1446, %v1445
      %v1473 = vpack.c.b16 %v1448, %v1447
      %v1474 = vpack.c.b16 %v1450, %v1449
      %v1475 = vpack.c.b16 %v1452, %v1451
      %v1476 = vpack.c.b16 %v1454, %v1453
      %v1477 = vpack.c.b16 %v1456, %v1455
      %v1478 = vpack.c.b16 %v1458, %v1457
      %v1479 = vpack.c.b16 %v1460, %v1459
      %v1480 = vpack.c.b16 %v1461, %v1461
      %vm1481 = vcmask 1046528
      %v1482 = vrot.slane %v1462, 1
      %v1483 = vrot.slane %v1463, 1
      %v1484 = vsel %vm1481, %v1482, %v1483
      %v1485 = vrot.slane %v1464, 1
      %v1486 = vsel %vm1481, %v1483, %v1485
      %v1487 = vrot.slane %v1465, 1
      %v1488 = vsel %vm1481, %v1485, %v1487
      %v1489 = vrot.slane %v1466, 1
      %v1490 = vsel %vm1481, %v1487, %v1489
      %v1491 = vrot.slane %v1467, 1
      %v1492 = vsel %vm1481, %v1489, %v1491
      %v1493 = vrot.slane %v1468, 1
      %v1494 = vsel %vm1481, %v1491, %v1493
      %v1495 = vrot.slane %v1469, 1
      %v1496 = vsel %vm1481, %v1493, %v1495
      %v1497 = vrot.slane %v1470, 1
      %v1498 = vsel %vm1481, %v1495, %v1497
      %v1499 = vrot.slane %v1471, 1
      %v1500 = vsel %vm1481, %v1497, %v1499
      %v1501 = vrot.slane %v1472, 1
      %v1502 = vsel %vm1481, %v1499, %v1501
      %v1503 = vrot.slane %v1473, 1
      %v1504 = vsel %vm1481, %v1501, %v1503
      %v1505 = vrot.slane %v1474, 1
      %v1506 = vsel %vm1481, %v1503, %v1505
      %v1507 = vrot.slane %v1475, 1
      %v1508 = vsel %vm1481, %v1505, %v1507
      %v1509 = vrot.slane %v1476, 1
      %v1510 = vsel %vm1481, %v1507, %v1509
      %v1511 = vrot.slane %v1477, 1
      %v1512 = vsel %vm1481, %v1509, %v1511
      %v1513 = vrot.slane %v1478, 1
      %v1514 = vsel %vm1481, %v1511, %v1513
      %v1515 = vrot.slane %v1479, 1
      %v1516 = vsel %vm1481, %v1513, %v1515
      %v1517 = vrot.slane %v1480, 1
      %v1518 = vsel %vm1481, %v1515, %v1517
      %v1553 = vunpack.c.l.b16 %v1372
      %v1554 = vunpack.c.l.b16 %v1373
      %v1555 = vunpack.c.l.b16 %v1374
      %v1556 = vunpack.c.l.b16 %v1375
      %v1557 = vunpack.c.l.b16 %v1376
      %v1558 = vunpack.c.l.b16 %v1377
      %v1559 = vunpack.c.l.b16 %v1378
      %v1560 = vunpack.c.l.b16 %v1379
      %v1561 = vunpack.c.l.b16 %v1380
      %v1562 = vunpack.c.l.b16 %v1381
      %v1563 = vunpack.c.l.b16 %v1382
      %v1564 = vunpack.c.l.b16 %v1383
      %v1565 = vunpack.c.l.b16 %v1384
      %v1566 = vunpack.c.l.b16 %v1385
      %v1567 = vunpack.c.l.b16 %v1386
      %v1568 = vunpack.c.l.b16 %v1387
      %v1569 = vpack.c.b16 %v1554, %v1553
      %v1570 = vpack.c.b16 %v1556, %v1555
      %v1571 = vpack.c.b16 %v1558, %v1557
      %v1572 = vpack.c.b16 %v1560, %v1559
      %v1573 = vpack.c.b16 %v1562, %v1561
      %v1574 = vpack.c.b16 %v1564, %v1563
      %v1575 = vpack.c.b16 %v1566, %v1565
      %v1576 = vpack.c.b16 %v1568, %v1567
      %1585 = vmatprep.subr.bf16.mxu0 0
      %1586 = vmatpush1.bf16.msra.mxu0 %v1576
      %1587 = vmatprep.subr.bf16.mxu0 0
      %1588 = vmatpush1.bf16.msra.mxu0 %v1575
      %1589 = vmatprep.subr.bf16.mxu0 0
      %1590 = vmatpush1.bf16.msra.mxu0 %v1574
      %1591 = vmatprep.subr.bf16.mxu0 0
      %1592 = vmatpush1.bf16.msra.mxu0 %v1573
      %1593 = vmatprep.subr.bf16.mxu0 0
      %1594 = vmatpush1.bf16.msra.mxu0 %v1572
      %1595 = vmatprep.subr.bf16.mxu0 0
      %1596 = vmatpush1.bf16.msra.mxu0 %v1571
      %1597 = vmatprep.subr.bf16.mxu0 0
      %1598 = vmatpush1.bf16.msra.mxu0 %v1570
      %1599 = vmatprep.subr.bf16.mxu0 0
      %1600 = vmatpush1.bf16.msra.mxu0 %v1569
      %1601 = vmatprep.subr.bf16.mxu0 0
      %1602 = vmatpush2.bf16.msra.mxu0 0
      %1603 = vmatprep.subr.bf16.mxu0 0
      %1604 = vmatpush2.bf16.msra.mxu0 0
      %1605 = vmatprep.subr.bf16.mxu0 0
      %1606 = vmatpush2.bf16.msra.mxu0 0
      %1607 = vmatprep.subr.bf16.mxu0 0
      %1608 = vmatpush2.bf16.msra.mxu0 0
      %1609 = vmatprep.subr.bf16.mxu0 0
      %1610 = vmatpush2.bf16.msra.mxu0 0
      %1611 = vmatprep.subr.bf16.mxu0 0
      %1612 = vmatpush2.bf16.msra.mxu0 0
      %1613 = vmatprep.subr.bf16.mxu0 0
      %1614 = vmatpush2.bf16.msra.mxu0 0
      %1615 = vmatprep.subr.bf16.mxu0 0
      %1616 = vmatpush2.bf16.msra.mxu0 0
      %1617 = vmatprep.mubr.bf16.mxu0 0
      %1618 = vmatmul.mubr.bf16.gmra.mxu0 %v1484
      %v1619 = vpop.f32.mrf.mxu0
      %v1620 = vadd.f32 0.0, %v1619
      %v1621 = vpop.f32.mrf.mxu0
      %v1622 = vpop.f32.mrf.mxu0
      %v1623 = vadd.f32 0.0, %v1622
      %v1624 = vpop.f32.mrf.mxu0
      %1625 = vmatprep.mubr.bf16.mxu0 0
      %1626 = vmatmul.mubr.bf16.gmra.mxu0 %v1486
      %v1627 = vpop.f32.mrf.mxu0
      %v1628 = vadd.f32 0.0, %v1627
      %v1629 = vpop.f32.mrf.mxu0
      %v1630 = vpop.f32.mrf.mxu0
      %v1631 = vadd.f32 0.0, %v1630
      %v1632 = vpop.f32.mrf.mxu0
      %1633 = vmatprep.mubr.bf16.mxu0 0
      %1634 = vmatmul.mubr.bf16.gmra.mxu0 %v1488
      %v1635 = vpop.f32.mrf.mxu0
      %v1636 = vadd.f32 0.0, %v1635
      %v1637 = vpop.f32.mrf.mxu0
      %v1638 = vpop.f32.mrf.mxu0
      %v1639 = vadd.f32 0.0, %v1638
      %v1640 = vpop.f32.mrf.mxu0
      %1641 = vmatprep.mubr.bf16.mxu0 0
      %1642 = vmatmul.mubr.bf16.gmra.mxu0 %v1490
      %v1643 = vpop.f32.mrf.mxu0
      %v1644 = vadd.f32 0.0, %v1643
      %v1645 = vpop.f32.mrf.mxu0
      %v1646 = vpop.f32.mrf.mxu0
      %v1647 = vadd.f32 0.0, %v1646
      %v1648 = vpop.f32.mrf.mxu0
      %1649 = vmatprep.mubr.bf16.mxu0 0
      %1650 = vmatmul.mubr.bf16.gmra.mxu0 %v1492
      %v1651 = vpop.f32.mrf.mxu0
      %v1652 = vadd.f32 0.0, %v1651
      %v1653 = vpop.f32.mrf.mxu0
      %v1654 = vpop.f32.mrf.mxu0
      %v1655 = vadd.f32 0.0, %v1654
      %v1656 = vpop.f32.mrf.mxu0
      %1657 = vmatprep.mubr.bf16.mxu0 0
      %1658 = vmatmul.mubr.bf16.gmra.mxu0 %v1494
      %v1659 = vpop.f32.mrf.mxu0
      %v1660 = vadd.f32 0.0, %v1659
      %v1661 = vpop.f32.mrf.mxu0
      %v1662 = vpop.f32.mrf.mxu0
      %v1663 = vadd.f32 0.0, %v1662
      %v1664 = vpop.f32.mrf.mxu0
      %1665 = vmatprep.mubr.bf16.mxu0 0
      %1666 = vmatmul.mubr.bf16.gmra.mxu0 %v1496
      %v1667 = vpop.f32.mrf.mxu0
      %v1668 = vadd.f32 0.0, %v1667
      %v1669 = vpop.f32.mrf.mxu0
      %v1670 = vpop.f32.mrf.mxu0
      %v1671 = vadd.f32 0.0, %v1670
      %v1672 = vpop.f32.mrf.mxu0
      %1673 = vmatprep.mubr.bf16.mxu0 0
      %1674 = vmatmul.mubr.bf16.gmra.mxu0 %v1498
      %v1675 = vpop.f32.mrf.mxu0
      %v1676 = vadd.f32 0.0, %v1675
      %v1677 = vpop.f32.mrf.mxu0
      %v1678 = vpop.f32.mrf.mxu0
      %v1679 = vadd.f32 0.0, %v1678
      %v1680 = vpop.f32.mrf.mxu0
      %1681 = vmatprep.mubr.bf16.mxu0 0
      %1682 = vmatmul.mubr.bf16.gmra.mxu0 %v1500
      %v1683 = vpop.f32.mrf.mxu0
      %v1684 = vadd.f32 0.0, %v1683
      %v1685 = vpop.f32.mrf.mxu0
      %v1686 = vpop.f32.mrf.mxu0
      %v1687 = vadd.f32 0.0, %v1686
      %v1688 = vpop.f32.mrf.mxu0
      %1689 = vmatprep.mubr.bf16.mxu0 0
      %1690 = vmatmul.mubr.bf16.gmra.mxu0 %v1502
      %v1691 = vpop.f32.mrf.mxu0
      %v1692 = vadd.f32 0.0, %v1691
      %v1693 = vpop.f32.mrf.mxu0
      %v1694 = vpop.f32.mrf.mxu0
      %v1695 = vadd.f32 0.0, %v1694
      %v1696 = vpop.f32.mrf.mxu0
      %1697 = vmatprep.mubr.bf16.mxu0 0
      %1698 = vmatmul.mubr.bf16.gmra.mxu0 %v1504
      %v1699 = vpop.f32.mrf.mxu0
      %v1700 = vadd.f32 0.0, %v1699
      %v1701 = vpop.f32.mrf.mxu0
      %v1702 = vpop.f32.mrf.mxu0
      %v1703 = vadd.f32 0.0, %v1702
      %v1704 = vpop.f32.mrf.mxu0
      %1705 = vmatprep.mubr.bf16.mxu0 0
      %1706 = vmatmul.mubr.bf16.gmra.mxu0 %v1506
      %v1707 = vpop.f32.mrf.mxu0
      %v1708 = vadd.f32 0.0, %v1707
      %v1709 = vpop.f32.mrf.mxu0
      %v1710 = vpop.f32.mrf.mxu0
      %v1711 = vadd.f32 0.0, %v1710
      %v1712 = vpop.f32.mrf.mxu0
      %1713 = vmatprep.mubr.bf16.mxu0 0
      %1714 = vmatmul.mubr.bf16.gmra.mxu0 %v1508
      %v1715 = vpop.f32.mrf.mxu0
      %v1716 = vadd.f32 0.0, %v1715
      %v1717 = vpop.f32.mrf.mxu0
      %v1718 = vpop.f32.mrf.mxu0
      %v1719 = vadd.f32 0.0, %v1718
      %v1720 = vpop.f32.mrf.mxu0
      %1721 = vmatprep.mubr.bf16.mxu0 0
      %1722 = vmatmul.mubr.bf16.gmra.mxu0 %v1510
      %v1723 = vpop.f32.mrf.mxu0
      %v1724 = vadd.f32 0.0, %v1723
      %v1725 = vpop.f32.mrf.mxu0
      %v1726 = vpop.f32.mrf.mxu0
      %v1727 = vadd.f32 0.0, %v1726
      %v1728 = vpop.f32.mrf.mxu0
      %1729 = vmatprep.mubr.bf16.mxu0 0
      %1730 = vmatmul.mubr.bf16.gmra.mxu0 %v1512
      %v1731 = vpop.f32.mrf.mxu0
      %v1732 = vadd.f32 0.0, %v1731
      %v1733 = vpop.f32.mrf.mxu0
      %v1734 = vpop.f32.mrf.mxu0
      %v1735 = vadd.f32 0.0, %v1734
      %v1736 = vpop.f32.mrf.mxu0
      %1737 = vmatprep.mubr.bf16.mxu0 0
      %1738 = vmatmul.mubr.bf16.gmra.mxu0 %v1514
      %v1739 = vpop.f32.mrf.mxu0
      %v1740 = vadd.f32 0.0, %v1739
      %v1741 = vpop.f32.mrf.mxu0
      %v1742 = vpop.f32.mrf.mxu0
      %v1743 = vadd.f32 0.0, %v1742
      %v1744 = vpop.f32.mrf.mxu0
      %1745 = vmatprep.mubr.bf16.mxu0 0
      %1746 = vmatmul.mubr.bf16.gmra.mxu0 %v1516
      %v1747 = vpop.f32.mrf.mxu0
      %v1748 = vadd.f32 0.0, %v1747
      %v1749 = vpop.f32.mrf.mxu0
      %v1750 = vpop.f32.mrf.mxu0
      %v1751 = vadd.f32 0.0, %v1750
      %v1752 = vpop.f32.mrf.mxu0
      %1753 = vmatprep.mubr.bf16.mxu0 0
      %1754 = vmatmul.mubr.bf16.gmra.mxu0 %v1518
      %v1755 = vpop.f32.mrf.mxu0
      %v1756 = vadd.f32 0.0, %v1755
      %v1757 = vpop.f32.mrf.mxu0
      %v1758 = vpop.f32.mrf.mxu0
      %v1759 = vadd.f32 0.0, %v1758
      %v1760 = vpop.f32.mrf.mxu0
      %1761 = vdwg.mxu0
      %v1762 = vld [vmem:[#allocation2] sm:$0xff]
      %v1763 = vld [vmem:[#allocation2 + $0x8] sm:$0xff]
      %v1764 = vld [vmem:[#allocation2 + $0x10] sm:$0xff]
      %v1765 = vld [vmem:[#allocation2 + $0x18] sm:$0xff]
      %v1766 = vld [vmem:[#allocation2 + $0x20] sm:$0xff]
      %v1767 = vld [vmem:[#allocation2 + $0x28] sm:$0xff]
      %v1768 = vld [vmem:[#allocation2 + $0x30] sm:$0xff]
      %v1769 = vld [vmem:[#allocation2 + $0x38] sm:$0xff]
      %v1770 = vld [vmem:[#allocation2 + $0x40] sm:$0xff]
      %v1771 = vld [vmem:[#allocation2 + $0x48] sm:$0xff]
      %v1772 = vld [vmem:[#allocation2 + $0x50] sm:$0xff]
      %v1773 = vld [vmem:[#allocation2 + $0x58] sm:$0xff]
      %v1774 = vld [vmem:[#allocation2 + $0x60] sm:$0xff]
      %v1775 = vld [vmem:[#allocation2 + $0x68] sm:$0xff]
      %v1776 = vld [vmem:[#allocation2 + $0x70] sm:$0xff]
      %v1777 = vld [vmem:[#allocation2 + $0x78] sm:$0xff]
      %v1778 = vld [vmem:[#allocation2 + $0x80] sm:$0xff]
      %v1779 = vld [vmem:[#allocation2 + $0x88] sm:$0xff]
      %v1780 = vld [vmem:[#allocation2 + $0x90] sm:$0xff]
      %v1781 = vld [vmem:[#allocation2 + $0x98] sm:$0xff]
      %v1782 = vld [vmem:[#allocation2 + $0xa0] sm:$0xff]
      %v1783 = vld [vmem:[#allocation2 + $0xa8] sm:$0xff]
      %v1784 = vld [vmem:[#allocation2 + $0xb0] sm:$0xff]
      %v1785 = vld [vmem:[#allocation2 + $0xb8] sm:$0xff]
      %v1786 = vld [vmem:[#allocation2 + $0xc0] sm:$0xff]
      %v1787 = vld [vmem:[#allocation2 + $0xc8] sm:$0xff]
      %v1788 = vld [vmem:[#allocation2 + $0xd0] sm:$0xff]
      %v1789 = vld [vmem:[#allocation2 + $0xd8] sm:$0xff]
      %v1790 = vld [vmem:[#allocation2 + $0xe0] sm:$0xff]
      %v1791 = vld [vmem:[#allocation2 + $0xe8] sm:$0xff]
      %v1792 = vld [vmem:[#allocation2 + $0xf0] sm:$0xff]
      %v1793 = vld [vmem:[#allocation2 + $0xf8] sm:$0xff]
      %v1794 = vld [vmem:[#allocation2 + $0x100] sm:$0xff]
      %v1795 = vld [vmem:[#allocation2 + $0x108] sm:$0xff]
      %v1796 = vld [vmem:[#allocation2 + $0x110] sm:$0xff]
      %v1797 = vld [vmem:[#allocation2 + $0x118] sm:$0xff]
      %v1798 = vadd.f32 %v1762, %v1620
      %v1799 = vadd.f32 %v1763, %v1623
      %v1800 = vadd.f32 %v1764, %v1628
      %v1801 = vadd.f32 %v1765, %v1631
      %v1802 = vadd.f32 %v1766, %v1636
      %v1803 = vadd.f32 %v1767, %v1639
      %v1804 = vadd.f32 %v1768, %v1644
      %v1805 = vadd.f32 %v1769, %v1647
      %v1806 = vadd.f32 %v1770, %v1652
      %v1807 = vadd.f32 %v1771, %v1655
      %v1808 = vadd.f32 %v1772, %v1660
      %v1809 = vadd.f32 %v1773, %v1663
      %v1810 = vadd.f32 %v1774, %v1668
      %v1811 = vadd.f32 %v1775, %v1671
      %v1812 = vadd.f32 %v1776, %v1676
      %v1813 = vadd.f32 %v1777, %v1679
      %v1814 = vadd.f32 %v1778, %v1684
      %v1815 = vadd.f32 %v1779, %v1687
      %v1816 = vadd.f32 %v1780, %v1692
      %v1817 = vadd.f32 %v1781, %v1695
      %v1818 = vadd.f32 %v1782, %v1700
      %v1819 = vadd.f32 %v1783, %v1703
      %v1820 = vadd.f32 %v1784, %v1708
      %v1821 = vadd.f32 %v1785, %v1711
      %v1822 = vadd.f32 %v1786, %v1716
      %v1823 = vadd.f32 %v1787, %v1719
      %v1824 = vadd.f32 %v1788, %v1724
      %v1825 = vadd.f32 %v1789, %v1727
      %v1826 = vadd.f32 %v1790, %v1732
      %v1827 = vadd.f32 %v1791, %v1735
      %v1828 = vadd.f32 %v1792, %v1740
      %v1829 = vadd.f32 %v1793, %v1743
      %v1830 = vadd.f32 %v1794, %v1748
      %v1831 = vadd.f32 %v1795, %v1751
      %v1832 = vadd.f32 %v1796, %v1756
      %v1833 = vadd.f32 %v1797, %v1759
      %1834 = vst [vmem:[#allocation2] sm:$0xff] %v1798
      %1835 = vst [vmem:[#allocation2 + $0x8] sm:$0xff] %v1799
      %1836 = vst [vmem:[#allocation2 + $0x10] sm:$0xff] %v1800
      %1837 = vst [vmem:[#allocation2 + $0x18] sm:$0xff] %v1801
      %1838 = vst [vmem:[#allocation2 + $0x20] sm:$0xff] %v1802
      %1839 = vst [vmem:[#allocation2 + $0x28] sm:$0xff] %v1803
      %1840 = vst [vmem:[#allocation2 + $0x30] sm:$0xff] %v1804
      %1841 = vst [vmem:[#allocation2 + $0x38] sm:$0xff] %v1805
      %1842 = vst [vmem:[#allocation2 + $0x40] sm:$0xff] %v1806
      %1843 = vst [vmem:[#allocation2 + $0x48] sm:$0xff] %v1807
      %1844 = vst [vmem:[#allocation2 + $0x50] sm:$0xff] %v1808
      %1845 = vst [vmem:[#allocation2 + $0x58] sm:$0xff] %v1809
      %1846 = vst [vmem:[#allocation2 + $0x60] sm:$0xff] %v1810
      %1847 = vst [vmem:[#allocation2 + $0x68] sm:$0xff] %v1811
      %1848 = vst [vmem:[#allocation2 + $0x70] sm:$0xff] %v1812
      %1849 = vst [vmem:[#allocation2 + $0x78] sm:$0xff] %v1813
      %1850 = vst [vmem:[#allocation2 + $0x80] sm:$0xff] %v1814
      %1851 = vst [vmem:[#allocation2 + $0x88] sm:$0xff] %v1815
      %1852 = vst [vmem:[#allocation2 + $0x90] sm:$0xff] %v1816
      %1853 = vst [vmem:[#allocation2 + $0x98] sm:$0xff] %v1817
      %1854 = vst [vmem:[#allocation2 + $0xa0] sm:$0xff] %v1818
      %1855 = vst [vmem:[#allocation2 + $0xa8] sm:$0xff] %v1819
      %1856 = vst [vmem:[#allocation2 + $0xb0] sm:$0xff] %v1820
      %1857 = vst [vmem:[#allocation2 + $0xb8] sm:$0xff] %v1821
      %1858 = vst [vmem:[#allocation2 + $0xc0] sm:$0xff] %v1822
      %1859 = vst [vmem:[#allocation2 + $0xc8] sm:$0xff] %v1823
      %1860 = vst [vmem:[#allocation2 + $0xd0] sm:$0xff] %v1824
      %1861 = vst [vmem:[#allocation2 + $0xd8] sm:$0xff] %v1825
      %1862 = vst [vmem:[#allocation2 + $0xe0] sm:$0xff] %v1826
      %1863 = vst [vmem:[#allocation2 + $0xe8] sm:$0xff] %v1827
      %1864 = vst [vmem:[#allocation2 + $0xf0] sm:$0xff] %v1828
      %1865 = vst [vmem:[#allocation2 + $0xf8] sm:$0xff] %v1829
      %1866 = vst [vmem:[#allocation2 + $0x100] sm:$0xff] %v1830
      %1867 = vst [vmem:[#allocation2 + $0x108] sm:$0xff] %v1831
      %1868 = vst [vmem:[#allocation2 + $0x110] sm:$0xff] %v1832
      %1869 = vst [vmem:[#allocation2 + $0x118] sm:$0xff] %v1833
      %v1870 = vld [vmem:[%s242 + $0x8] sm:$0xe]
      %v1871 = vld [vmem:[%s242 + $0xc] sm:$0xf]
      %v1872 = vld [vmem:[%s242 + $0x10] sm:$0xf]
      %v1873 = vld [vmem:[%s242 + $0x14] sm:$0xf]
      %v1874 = vld [vmem:[%s242 + $0x18] sm:$0xf]
      %v1875 = vld [vmem:[%s242 + $0x1c] sm:$0xf]
      %v1876 = vld [vmem:[%s242 + $0x20] sm:$0xf]
      %v1877 = vld [vmem:[%s242 + $0x24] sm:$0xf]
      %v1878 = vld [vmem:[%s242 + $0x28] sm:$0xf]
      %v1879 = vld [vmem:[%s242 + $0x2c] sm:$0xf]
      %v1880 = vld [vmem:[%s242 + $0x30] sm:$0xf]
      %v1881 = vld [vmem:[%s242 + $0x34] sm:$0xf]
      %v1882 = vld [vmem:[%s242 + $0x38] sm:$0xf]
      %v1883 = vld [vmem:[%s242 + $0x3c] sm:$0xf]
      %v1884 = vld [vmem:[%s242 + $0x40] sm:$0xf]
      %v1885 = vld [vmem:[%s242 + $0x44] sm:$0xf]
      %v1886 = vld [vmem:[%s242 + $0x48] sm:$0xf]
      %v1887 = vld [vmem:[%s242 + $0x4c] sm:$0xf]
      %v1888 = vld [vmem:[%s242 + $0x50] sm:$0xf]
      %v1889 = vld [vmem:[%s242 + $0x54] sm:$0xf]
      %v1890 = vld [vmem:[%s242 + $0x58] sm:$0xf]
      %v1891 = vld [vmem:[%s242 + $0x5c] sm:$0xf]
      %v1892 = vld [vmem:[%s242 + $0x60] sm:$0xf]
      %v1893 = vld [vmem:[%s242 + $0x64] sm:$0xf]
      %v1894 = vld [vmem:[%s242 + $0x68] sm:$0xf]
      %v1895 = vld [vmem:[%s242 + $0x6c] sm:$0xf]
      %v1896 = vld [vmem:[%s242 + $0x70] sm:$0xf]
      %v1897 = vld [vmem:[%s242 + $0x74] sm:$0xf]
      %v1898 = vld [vmem:[%s242 + $0x78] sm:$0xf]
      %v1899 = vld [vmem:[%s242 + $0x7c] sm:$0xf]
      %v1900 = vld [vmem:[%s242 + $0x80] sm:$0xf]
      %v1901 = vld [vmem:[%s242 + $0x84] sm:$0xf]
      %v1902 = vld [vmem:[%s242 + $0x88] sm:$0xf]
      %v1903 = vld [vmem:[%s242 + $0x8c] sm:$0xf]
      %v1904 = vld [vmem:[%s242 + $0x90] sm:$0xf]
      %v1905 = vld [vmem:[%s242 + $0x94] sm:$0xf]
      %v1906 = vld [vmem:[%s242 + $0x98] sm:$0x1]
      %s1907 = scalar_lea.vmem %s1, 192
      %v1908 = vld [vmem:[%s1907] sm:$0xf]
      %v1909 = vld [vmem:[%s1907 + $0x4] sm:$0xf]
      %v1910 = vld [vmem:[%s1907 + $0x8] sm:$0xf]
      %v1911 = vld [vmem:[%s1907 + $0xc] sm:$0xf]
      %v1912 = vld [vmem:[%s1907 + $0x10] sm:$0xf]
      %v1913 = vld [vmem:[%s1907 + $0x14] sm:$0xf]
      %v1914 = vld [vmem:[%s1907 + $0x18] sm:$0xf]
      %v1915 = vld [vmem:[%s1907 + $0x1c] sm:$0xf]
      %v1916 = vld [vmem:[%s1907 + $0x20] sm:$0xf]
      %v1917 = vld [vmem:[%s1907 + $0x24] sm:$0xf]
      %v1918 = vld [vmem:[%s1907 + $0x28] sm:$0xf]
      %v1919 = vld [vmem:[%s1907 + $0x2c] sm:$0xf]
      %v1920 = vld [vmem:[%s1907 + $0x30] sm:$0xf]
      %v1921 = vld [vmem:[%s1907 + $0x34] sm:$0xf]
      %v1922 = vld [vmem:[%s1907 + $0x38] sm:$0xf]
      %v1923 = vld [vmem:[%s1907 + $0x3c] sm:$0xf]
      %v1961 = vunpack.c.l.b16 %v1870
      %v1962 = vunpack.c.l.b16 %v1871
      %v1963 = vunpack.c.l.b16 %v1872
      %v1964 = vunpack.c.l.b16 %v1873
      %v1965 = vunpack.c.l.b16 %v1874
      %v1966 = vunpack.c.l.b16 %v1875
      %v1967 = vunpack.c.l.b16 %v1876
      %v1968 = vunpack.c.l.b16 %v1877
      %v1969 = vunpack.c.l.b16 %v1878
      %v1970 = vunpack.c.l.b16 %v1879
      %v1971 = vunpack.c.l.b16 %v1880
      %v1972 = vunpack.c.l.b16 %v1881
      %v1973 = vunpack.c.l.b16 %v1882
      %v1974 = vunpack.c.l.b16 %v1883
      %v1975 = vunpack.c.l.b16 %v1884
      %v1976 = vunpack.c.l.b16 %v1885
      %v1977 = vunpack.c.l.b16 %v1886
      %v1978 = vunpack.c.l.b16 %v1887
      %v1979 = vunpack.c.l.b16 %v1888
      %v1980 = vunpack.c.l.b16 %v1889
      %v1981 = vunpack.c.l.b16 %v1890
      %v1982 = vunpack.c.l.b16 %v1891
      %v1983 = vunpack.c.l.b16 %v1892
      %v1984 = vunpack.c.l.b16 %v1893
      %v1985 = vunpack.c.l.b16 %v1894
      %v1986 = vunpack.c.l.b16 %v1895
      %v1987 = vunpack.c.l.b16 %v1896
      %v1988 = vunpack.c.l.b16 %v1897
      %v1989 = vunpack.c.l.b16 %v1898
      %v1990 = vunpack.c.l.b16 %v1899
      %v1991 = vunpack.c.l.b16 %v1900
      %v1992 = vunpack.c.l.b16 %v1901
      %v1993 = vunpack.c.l.b16 %v1902
      %v1994 = vunpack.c.l.b16 %v1903
      %v1995 = vunpack.c.l.b16 %v1904
      %v1996 = vunpack.c.l.b16 %v1905
      %v1997 = vunpack.c.l.b16 %v1906
      %v1998 = vpack.c.b16 %v1962, %v1961
      %v1999 = vpack.c.b16 %v1964, %v1963
      %v2000 = vpack.c.b16 %v1966, %v1965
      %v2001 = vpack.c.b16 %v1968, %v1967
      %v2002 = vpack.c.b16 %v1970, %v1969
      %v2003 = vpack.c.b16 %v1972, %v1971
      %v2004 = vpack.c.b16 %v1974, %v1973
      %v2005 = vpack.c.b16 %v1976, %v1975
      %v2006 = vpack.c.b16 %v1978, %v1977
      %v2007 = vpack.c.b16 %v1980, %v1979
      %v2008 = vpack.c.b16 %v1982, %v1981
      %v2009 = vpack.c.b16 %v1984, %v1983
      %v2010 = vpack.c.b16 %v1986, %v1985
      %v2011 = vpack.c.b16 %v1988, %v1987
      %v2012 = vpack.c.b16 %v1990, %v1989
      %v2013 = vpack.c.b16 %v1992, %v1991
      %v2014 = vpack.c.b16 %v1994, %v1993
      %v2015 = vpack.c.b16 %v1996, %v1995
      %v2016 = vpack.c.b16 %v1997, %v1997
      %v2017 = vrot.slane %v1998, 1
      %v2018 = vrot.slane %v1999, 1
      %v2019 = vsel %vm1481, %v2017, %v2018
      %v2020 = vrot.slane %v2000, 1
      %v2021 = vsel %vm1481, %v2018, %v2020
      %v2022 = vrot.slane %v2001, 1
      %v2023 = vsel %vm1481, %v2020, %v2022
      %v2024 = vrot.slane %v2002, 1
      %v2025 = vsel %vm1481, %v2022, %v2024
      %v2026 = vrot.slane %v2003, 1
      %v2027 = vsel %vm1481, %v2024, %v2026
      %v2028 = vrot.slane %v2004, 1
      %v2029 = vsel %vm1481, %v2026, %v2028
      %v2030 = vrot.slane %v2005, 1
      %v2031 = vsel %vm1481, %v2028, %v2030
      %v2032 = vrot.slane %v2006, 1
      %v2033 = vsel %vm1481, %v2030, %v2032
      %v2034 = vrot.slane %v2007, 1
      %v2035 = vsel %vm1481, %v2032, %v2034
      %v2036 = vrot.slane %v2008, 1
      %v2037 = vsel %vm1481, %v2034, %v2036
      %v2038 = vrot.slane %v2009, 1
      %v2039 = vsel %vm1481, %v2036, %v2038
      %v2040 = vrot.slane %v2010, 1
      %v2041 = vsel %vm1481, %v2038, %v2040
      %v2042 = vrot.slane %v2011, 1
      %v2043 = vsel %vm1481, %v2040, %v2042
      %v2044 = vrot.slane %v2012, 1
      %v2045 = vsel %vm1481, %v2042, %v2044
      %v2046 = vrot.slane %v2013, 1
      %v2047 = vsel %vm1481, %v2044, %v2046
      %v2048 = vrot.slane %v2014, 1
      %v2049 = vsel %vm1481, %v2046, %v2048
      %v2050 = vrot.slane %v2015, 1
      %v2051 = vsel %vm1481, %v2048, %v2050
      %v2052 = vrot.slane %v2016, 1
      %v2053 = vsel %vm1481, %v2050, %v2052
      %v2088 = vunpack.c.l.b16 %v1908
      %v2089 = vunpack.c.l.b16 %v1909
      %v2090 = vunpack.c.l.b16 %v1910
      %v2091 = vunpack.c.l.b16 %v1911
      %v2092 = vunpack.c.l.b16 %v1912
      %v2093 = vunpack.c.l.b16 %v1913
      %v2094 = vunpack.c.l.b16 %v1914
      %v2095 = vunpack.c.l.b16 %v1915
      %v2096 = vunpack.c.l.b16 %v1916
      %v2097 = vunpack.c.l.b16 %v1917
      %v2098 = vunpack.c.l.b16 %v1918
      %v2099 = vunpack.c.l.b16 %v1919
      %v2100 = vunpack.c.l.b16 %v1920
      %v2101 = vunpack.c.l.b16 %v1921
      %v2102 = vunpack.c.l.b16 %v1922
      %v2103 = vunpack.c.l.b16 %v1923
      %v2104 = vpack.c.b16 %v2089, %v2088
      %v2105 = vpack.c.b16 %v2091, %v2090
      %v2106 = vpack.c.b16 %v2093, %v2092
      %v2107 = vpack.c.b16 %v2095, %v2094
      %v2108 = vpack.c.b16 %v2097, %v2096
      %v2109 = vpack.c.b16 %v2099, %v2098
      %v2110 = vpack.c.b16 %v2101, %v2100
      %v2111 = vpack.c.b16 %v2103, %v2102
      %2120 = vmatprep.subr.bf16.mxu0 0
      %2121 = vmatpush1.bf16.msra.mxu0 %v2111
      %2122 = vmatprep.subr.bf16.mxu0 0
      %2123 = vmatpush1.bf16.msra.mxu0 %v2110
      %2124 = vmatprep.subr.bf16.mxu0 0
      %2125 = vmatpush1.bf16.msra.mxu0 %v2109
      %2126 = vmatprep.subr.bf16.mxu0 0
      %2127 = vmatpush1.bf16.msra.mxu0 %v2108
      %2128 = vmatprep.subr.bf16.mxu0 0
      %2129 = vmatpush1.bf16.msra.mxu0 %v2107
      %2130 = vmatprep.subr.bf16.mxu0 0
      %2131 = vmatpush1.bf16.msra.mxu0 %v2106
      %2132 = vmatprep.subr.bf16.mxu0 0
      %2133 = vmatpush1.bf16.msra.mxu0 %v2105
      %2134 = vmatprep.subr.bf16.mxu0 0
      %2135 = vmatpush1.bf16.msra.mxu0 %v2104
      %2136 = vmatprep.subr.bf16.mxu0 0
      %2137 = vmatpush2.bf16.msra.mxu0 0
      %2138 = vmatprep.subr.bf16.mxu0 0
      %2139 = vmatpush2.bf16.msra.mxu0 0
      %2140 = vmatprep.subr.bf16.mxu0 0
      %2141 = vmatpush2.bf16.msra.mxu0 0
      %2142 = vmatprep.subr.bf16.mxu0 0
      %2143 = vmatpush2.bf16.msra.mxu0 0
      %2144 = vmatprep.subr.bf16.mxu0 0
      %2145 = vmatpush2.bf16.msra.mxu0 0
      %2146 = vmatprep.subr.bf16.mxu0 0
      %2147 = vmatpush2.bf16.msra.mxu0 0
      %2148 = vmatprep.subr.bf16.mxu0 0
      %2149 = vmatpush2.bf16.msra.mxu0 0
      %2150 = vmatprep.subr.bf16.mxu0 0
      %2151 = vmatpush2.bf16.msra.mxu0 0
      %2152 = vmatprep.mubr.bf16.mxu0 0
      %2153 = vmatmul.mubr.bf16.gmra.mxu0 %v2019
      %v2154 = vpop.f32.mrf.mxu0
      %v2155 = vadd.f32 0.0, %v2154
      %v2156 = vpop.f32.mrf.mxu0
      %v2157 = vpop.f32.mrf.mxu0
      %v2158 = vadd.f32 0.0, %v2157
      %v2159 = vpop.f32.mrf.mxu0
      %2160 = vmatprep.mubr.bf16.mxu0 0
      %2161 = vmatmul.mubr.bf16.gmra.mxu0 %v2021
      %v2162 = vpop.f32.mrf.mxu0
      %v2163 = vadd.f32 0.0, %v2162
      %v2164 = vpop.f32.mrf.mxu0
      %v2165 = vpop.f32.mrf.mxu0
      %v2166 = vadd.f32 0.0, %v2165
      %v2167 = vpop.f32.mrf.mxu0
      %2168 = vmatprep.mubr.bf16.mxu0 0
      %2169 = vmatmul.mubr.bf16.gmra.mxu0 %v2023
      %v2170 = vpop.f32.mrf.mxu0
      %v2171 = vadd.f32 0.0, %v2170
      %v2172 = vpop.f32.mrf.mxu0
      %v2173 = vpop.f32.mrf.mxu0
      %v2174 = vadd.f32 0.0, %v2173
      %v2175 = vpop.f32.mrf.mxu0
      %2176 = vmatprep.mubr.bf16.mxu0 0
      %2177 = vmatmul.mubr.bf16.gmra.mxu0 %v2025
      %v2178 = vpop.f32.mrf.mxu0
      %v2179 = vadd.f32 0.0, %v2178
      %v2180 = vpop.f32.mrf.mxu0
      %v2181 = vpop.f32.mrf.mxu0
      %v2182 = vadd.f32 0.0, %v2181
      %v2183 = vpop.f32.mrf.mxu0
      %2184 = vmatprep.mubr.bf16.mxu0 0
      %2185 = vmatmul.mubr.bf16.gmra.mxu0 %v2027
      %v2186 = vpop.f32.mrf.mxu0
      %v2187 = vadd.f32 0.0, %v2186
      %v2188 = vpop.f32.mrf.mxu0
      %v2189 = vpop.f32.mrf.mxu0
      %v2190 = vadd.f32 0.0, %v2189
      %v2191 = vpop.f32.mrf.mxu0
      %2192 = vmatprep.mubr.bf16.mxu0 0
      %2193 = vmatmul.mubr.bf16.gmra.mxu0 %v2029
      %v2194 = vpop.f32.mrf.mxu0
      %v2195 = vadd.f32 0.0, %v2194
      %v2196 = vpop.f32.mrf.mxu0
      %v2197 = vpop.f32.mrf.mxu0
      %v2198 = vadd.f32 0.0, %v2197
      %v2199 = vpop.f32.mrf.mxu0
      %2200 = vmatprep.mubr.bf16.mxu0 0
      %2201 = vmatmul.mubr.bf16.gmra.mxu0 %v2031
      %v2202 = vpop.f32.mrf.mxu0
      %v2203 = vadd.f32 0.0, %v2202
      %v2204 = vpop.f32.mrf.mxu0
      %v2205 = vpop.f32.mrf.mxu0
      %v2206 = vadd.f32 0.0, %v2205
      %v2207 = vpop.f32.mrf.mxu0
      %2208 = vmatprep.mubr.bf16.mxu0 0
      %2209 = vmatmul.mubr.bf16.gmra.mxu0 %v2033
      %v2210 = vpop.f32.mrf.mxu0
      %v2211 = vadd.f32 0.0, %v2210
      %v2212 = vpop.f32.mrf.mxu0
      %v2213 = vpop.f32.mrf.mxu0
      %v2214 = vadd.f32 0.0, %v2213
      %v2215 = vpop.f32.mrf.mxu0
      %2216 = vmatprep.mubr.bf16.mxu0 0
      %2217 = vmatmul.mubr.bf16.gmra.mxu0 %v2035
      %v2218 = vpop.f32.mrf.mxu0
      %v2219 = vadd.f32 0.0, %v2218
      %v2220 = vpop.f32.mrf.mxu0
      %v2221 = vpop.f32.mrf.mxu0
      %v2222 = vadd.f32 0.0, %v2221
      %v2223 = vpop.f32.mrf.mxu0
      %2224 = vmatprep.mubr.bf16.mxu0 0
      %2225 = vmatmul.mubr.bf16.gmra.mxu0 %v2037
      %v2226 = vpop.f32.mrf.mxu0
      %v2227 = vadd.f32 0.0, %v2226
      %v2228 = vpop.f32.mrf.mxu0
      %v2229 = vpop.f32.mrf.mxu0
      %v2230 = vadd.f32 0.0, %v2229
      %v2231 = vpop.f32.mrf.mxu0
      %2232 = vmatprep.mubr.bf16.mxu0 0
      %2233 = vmatmul.mubr.bf16.gmra.mxu0 %v2039
      %v2234 = vpop.f32.mrf.mxu0
      %v2235 = vadd.f32 0.0, %v2234
      %v2236 = vpop.f32.mrf.mxu0
      %v2237 = vpop.f32.mrf.mxu0
      %v2238 = vadd.f32 0.0, %v2237
      %v2239 = vpop.f32.mrf.mxu0
      %2240 = vmatprep.mubr.bf16.mxu0 0
      %2241 = vmatmul.mubr.bf16.gmra.mxu0 %v2041
      %v2242 = vpop.f32.mrf.mxu0
      %v2243 = vadd.f32 0.0, %v2242
      %v2244 = vpop.f32.mrf.mxu0
      %v2245 = vpop.f32.mrf.mxu0
      %v2246 = vadd.f32 0.0, %v2245
      %v2247 = vpop.f32.mrf.mxu0
      %2248 = vmatprep.mubr.bf16.mxu0 0
      %2249 = vmatmul.mubr.bf16.gmra.mxu0 %v2043
      %v2250 = vpop.f32.mrf.mxu0
      %v2251 = vadd.f32 0.0, %v2250
      %v2252 = vpop.f32.mrf.mxu0
      %v2253 = vpop.f32.mrf.mxu0
      %v2254 = vadd.f32 0.0, %v2253
      %v2255 = vpop.f32.mrf.mxu0
      %2256 = vmatprep.mubr.bf16.mxu0 0
      %2257 = vmatmul.mubr.bf16.gmra.mxu0 %v2045
      %v2258 = vpop.f32.mrf.mxu0
      %v2259 = vadd.f32 0.0, %v2258
      %v2260 = vpop.f32.mrf.mxu0
      %v2261 = vpop.f32.mrf.mxu0
      %v2262 = vadd.f32 0.0, %v2261
      %v2263 = vpop.f32.mrf.mxu0
      %2264 = vmatprep.mubr.bf16.mxu0 0
      %2265 = vmatmul.mubr.bf16.gmra.mxu0 %v2047
      %v2266 = vpop.f32.mrf.mxu0
      %v2267 = vadd.f32 0.0, %v2266
      %v2268 = vpop.f32.mrf.mxu0
      %v2269 = vpop.f32.mrf.mxu0
      %v2270 = vadd.f32 0.0, %v2269
      %v2271 = vpop.f32.mrf.mxu0
      %2272 = vmatprep.mubr.bf16.mxu0 0
      %2273 = vmatmul.mubr.bf16.gmra.mxu0 %v2049
      %v2274 = vpop.f32.mrf.mxu0
      %v2275 = vadd.f32 0.0, %v2274
      %v2276 = vpop.f32.mrf.mxu0
      %v2277 = vpop.f32.mrf.mxu0
      %v2278 = vadd.f32 0.0, %v2277
      %v2279 = vpop.f32.mrf.mxu0
      %2280 = vmatprep.mubr.bf16.mxu0 0
      %2281 = vmatmul.mubr.bf16.gmra.mxu0 %v2051
      %v2282 = vpop.f32.mrf.mxu0
      %v2283 = vadd.f32 0.0, %v2282
      %v2284 = vpop.f32.mrf.mxu0
      %v2285 = vpop.f32.mrf.mxu0
      %v2286 = vadd.f32 0.0, %v2285
      %v2287 = vpop.f32.mrf.mxu0
      %2288 = vmatprep.mubr.bf16.mxu0 0
      %2289 = vmatmul.mubr.bf16.gmra.mxu0 %v2053
      %v2290 = vpop.f32.mrf.mxu0
      %v2291 = vadd.f32 0.0, %v2290
      %v2292 = vpop.f32.mrf.mxu0
      %v2293 = vpop.f32.mrf.mxu0
      %v2294 = vadd.f32 0.0, %v2293
      %v2295 = vpop.f32.mrf.mxu0
      %2296 = vdwg.mxu0
      %v2297 = vld [vmem:[#allocation2] sm:$0xff]
      %v2298 = vld [vmem:[#allocation2 + $0x8] sm:$0xff]
      %v2299 = vld [vmem:[#allocation2 + $0x10] sm:$0xff]
      %v2300 = vld [vmem:[#allocation2 + $0x18] sm:$0xff]
      %v2301 = vld [vmem:[#allocation2 + $0x20] sm:$0xff]
      %v2302 = vld [vmem:[#allocation2 + $0x28] sm:$0xff]
      %v2303 = vld [vmem:[#allocation2 + $0x30] sm:$0xff]
      %v2304 = vld [vmem:[#allocation2 + $0x38] sm:$0xff]
      %v2305 = vld [vmem:[#allocation2 + $0x40] sm:$0xff]
      %v2306 = vld [vmem:[#allocation2 + $0x48] sm:$0xff]
      %v2307 = vld [vmem:[#allocation2 + $0x50] sm:$0xff]
      %v2308 = vld [vmem:[#allocation2 + $0x58] sm:$0xff]
      %v2309 = vld [vmem:[#allocation2 + $0x60] sm:$0xff]
      %v2310 = vld [vmem:[#allocation2 + $0x68] sm:$0xff]
      %v2311 = vld [vmem:[#allocation2 + $0x70] sm:$0xff]
      %v2312 = vld [vmem:[#allocation2 + $0x78] sm:$0xff]
      %v2313 = vld [vmem:[#allocation2 + $0x80] sm:$0xff]
      %v2314 = vld [vmem:[#allocation2 + $0x88] sm:$0xff]
      %v2315 = vld [vmem:[#allocation2 + $0x90] sm:$0xff]
      %v2316 = vld [vmem:[#allocation2 + $0x98] sm:$0xff]
      %v2317 = vld [vmem:[#allocation2 + $0xa0] sm:$0xff]
      %v2318 = vld [vmem:[#allocation2 + $0xa8] sm:$0xff]
      %v2319 = vld [vmem:[#allocation2 + $0xb0] sm:$0xff]
      %v2320 = vld [vmem:[#allocation2 + $0xb8] sm:$0xff]
      %v2321 = vld [vmem:[#allocation2 + $0xc0] sm:$0xff]
      %v2322 = vld [vmem:[#allocation2 + $0xc8] sm:$0xff]
      %v2323 = vld [vmem:[#allocation2 + $0xd0] sm:$0xff]
      %v2324 = vld [vmem:[#allocation2 + $0xd8] sm:$0xff]
      %v2325 = vld [vmem:[#allocation2 + $0xe0] sm:$0xff]
      %v2326 = vld [vmem:[#allocation2 + $0xe8] sm:$0xff]
      %v2327 = vld [vmem:[#allocation2 + $0xf0] sm:$0xff]
      %v2328 = vld [vmem:[#allocation2 + $0xf8] sm:$0xff]
      %v2329 = vld [vmem:[#allocation2 + $0x100] sm:$0xff]
      %v2330 = vld [vmem:[#allocation2 + $0x108] sm:$0xff]
      %v2331 = vld [vmem:[#allocation2 + $0x110] sm:$0xff]
      %v2332 = vld [vmem:[#allocation2 + $0x118] sm:$0xff]
      %v2333 = vadd.f32 %v2297, %v2155
      %v2334 = vadd.f32 %v2298, %v2158
      %v2335 = vadd.f32 %v2299, %v2163
      %v2336 = vadd.f32 %v2300, %v2166
      %v2337 = vadd.f32 %v2301, %v2171
      %v2338 = vadd.f32 %v2302, %v2174
      %v2339 = vadd.f32 %v2303, %v2179
      %v2340 = vadd.f32 %v2304, %v2182
      %v2341 = vadd.f32 %v2305, %v2187
      %v2342 = vadd.f32 %v2306, %v2190
      %v2343 = vadd.f32 %v2307, %v2195
      %v2344 = vadd.f32 %v2308, %v2198
      %v2345 = vadd.f32 %v2309, %v2203
      %v2346 = vadd.f32 %v2310, %v2206
      %v2347 = vadd.f32 %v2311, %v2211
      %v2348 = vadd.f32 %v2312, %v2214
      %v2349 = vadd.f32 %v2313, %v2219
      %v2350 = vadd.f32 %v2314, %v2222
      %v2351 = vadd.f32 %v2315, %v2227
      %v2352 = vadd.f32 %v2316, %v2230
      %v2353 = vadd.f32 %v2317, %v2235
      %v2354 = vadd.f32 %v2318, %v2238
      %v2355 = vadd.f32 %v2319, %v2243
      %v2356 = vadd.f32 %v2320, %v2246
      %v2357 = vadd.f32 %v2321, %v2251
      %v2358 = vadd.f32 %v2322, %v2254
      %v2359 = vadd.f32 %v2323, %v2259
      %v2360 = vadd.f32 %v2324, %v2262
      %v2361 = vadd.f32 %v2325, %v2267
      %v2362 = vadd.f32 %v2326, %v2270
      %v2363 = vadd.f32 %v2327, %v2275
      %v2364 = vadd.f32 %v2328, %v2278
      %v2365 = vadd.f32 %v2329, %v2283
      %v2366 = vadd.f32 %v2330, %v2286
      %v2367 = vadd.f32 %v2331, %v2291
      %v2368 = vadd.f32 %v2332, %v2294
      %2369 = vst [vmem:[#allocation2] sm:$0xff] %v2333
      %2370 = vst [vmem:[#allocation2 + $0x8] sm:$0xff] %v2334
      %2371 = vst [vmem:[#allocation2 + $0x10] sm:$0xff] %v2335
      %2372 = vst [vmem:[#allocation2 + $0x18] sm:$0xff] %v2336
      %2373 = vst [vmem:[#allocation2 + $0x20] sm:$0xff] %v2337
      %2374 = vst [vmem:[#allocation2 + $0x28] sm:$0xff] %v2338
      %2375 = vst [vmem:[#allocation2 + $0x30] sm:$0xff] %v2339
      %2376 = vst [vmem:[#allocation2 + $0x38] sm:$0xff] %v2340
      %2377 = vst [vmem:[#allocation2 + $0x40] sm:$0xff] %v2341
      %2378 = vst [vmem:[#allocation2 + $0x48] sm:$0xff] %v2342
      %2379 = vst [vmem:[#allocation2 + $0x50] sm:$0xff] %v2343
      %2380 = vst [vmem:[#allocation2 + $0x58] sm:$0xff] %v2344
      %2381 = vst [vmem:[#allocation2 + $0x60] sm:$0xff] %v2345
      %2382 = vst [vmem:[#allocation2 + $0x68] sm:$0xff] %v2346
      %2383 = vst [vmem:[#allocation2 + $0x70] sm:$0xff] %v2347
      %2384 = vst [vmem:[#allocation2 + $0x78] sm:$0xff] %v2348
      %2385 = vst [vmem:[#allocation2 + $0x80] sm:$0xff] %v2349
      %2386 = vst [vmem:[#allocation2 + $0x88] sm:$0xff] %v2350
      %2387 = vst [vmem:[#allocation2 + $0x90] sm:$0xff] %v2351
      %2388 = vst [vmem:[#allocation2 + $0x98] sm:$0xff] %v2352
      %2389 = vst [vmem:[#allocation2 + $0xa0] sm:$0xff] %v2353
      %2390 = vst [vmem:[#allocation2 + $0xa8] sm:$0xff] %v2354
      %2391 = vst [vmem:[#allocation2 + $0xb0] sm:$0xff] %v2355
      %2392 = vst [vmem:[#allocation2 + $0xb8] sm:$0xff] %v2356
      %2393 = vst [vmem:[#allocation2 + $0xc0] sm:$0xff] %v2357
      %2394 = vst [vmem:[#allocation2 + $0xc8] sm:$0xff] %v2358
      %2395 = vst [vmem:[#allocation2 + $0xd0] sm:$0xff] %v2359
      %2396 = vst [vmem:[#allocation2 + $0xd8] sm:$0xff] %v2360
      %2397 = vst [vmem:[#allocation2 + $0xe0] sm:$0xff] %v2361
      %2398 = vst [vmem:[#allocation2 + $0xe8] sm:$0xff] %v2362
      %2399 = vst [vmem:[#allocation2 + $0xf0] sm:$0xff] %v2363
      %2400 = vst [vmem:[#allocation2 + $0xf8] sm:$0xff] %v2364
      %2401 = vst [vmem:[#allocation2 + $0x100] sm:$0xff] %v2365
      %2402 = vst [vmem:[#allocation2 + $0x108] sm:$0xff] %v2366
      %2403 = vst [vmem:[#allocation2 + $0x110] sm:$0xff] %v2367
      %2404 = vst [vmem:[#allocation2 + $0x118] sm:$0xff] %v2368
      %v2405 = vld [vmem:[%s242 + $0x8] sm:$0xe]
      %v2406 = vld [vmem:[%s242 + $0xc] sm:$0xf]
      %v2407 = vld [vmem:[%s242 + $0x10] sm:$0xf]
      %v2408 = vld [vmem:[%s242 + $0x14] sm:$0xf]
      %v2409 = vld [vmem:[%s242 + $0x18] sm:$0xf]
      %v2410 = vld [vmem:[%s242 + $0x1c] sm:$0xf]
      %v2411 = vld [vmem:[%s242 + $0x20] sm:$0xf]
      %v2412 = vld [vmem:[%s242 + $0x24] sm:$0xf]
      %v2413 = vld [vmem:[%s242 + $0x28] sm:$0xf]
      %v2414 = vld [vmem:[%s242 + $0x2c] sm:$0xf]
      %v2415 = vld [vmem:[%s242 + $0x30] sm:$0xf]
      %v2416 = vld [vmem:[%s242 + $0x34] sm:$0xf]
      %v2417 = vld [vmem:[%s242 + $0x38] sm:$0xf]
      %v2418 = vld [vmem:[%s242 + $0x3c] sm:$0xf]
      %v2419 = vld [vmem:[%s242 + $0x40] sm:$0xf]
      %v2420 = vld [vmem:[%s242 + $0x44] sm:$0xf]
      %v2421 = vld [vmem:[%s242 + $0x48] sm:$0xf]
      %v2422 = vld [vmem:[%s242 + $0x4c] sm:$0xf]
      %v2423 = vld [vmem:[%s242 + $0x50] sm:$0xf]
      %v2424 = vld [vmem:[%s242 + $0x54] sm:$0xf]
      %v2425 = vld [vmem:[%s242 + $0x58] sm:$0xf]
      %v2426 = vld [vmem:[%s242 + $0x5c] sm:$0xf]
      %v2427 = vld [vmem:[%s242 + $0x60] sm:$0xf]
      %v2428 = vld [vmem:[%s242 + $0x64] sm:$0xf]
      %v2429 = vld [vmem:[%s242 + $0x68] sm:$0xf]
      %v2430 = vld [vmem:[%s242 + $0x6c] sm:$0xf]
      %v2431 = vld [vmem:[%s242 + $0x70] sm:$0xf]
      %v2432 = vld [vmem:[%s242 + $0x74] sm:$0xf]
      %v2433 = vld [vmem:[%s242 + $0x78] sm:$0xf]
      %v2434 = vld [vmem:[%s242 + $0x7c] sm:$0xf]
      %v2435 = vld [vmem:[%s242 + $0x80] sm:$0xf]
      %v2436 = vld [vmem:[%s242 + $0x84] sm:$0xf]
      %v2437 = vld [vmem:[%s242 + $0x88] sm:$0xf]
      %v2438 = vld [vmem:[%s242 + $0x8c] sm:$0xf]
      %v2439 = vld [vmem:[%s242 + $0x90] sm:$0xf]
      %v2440 = vld [vmem:[%s242 + $0x94] sm:$0xf]
      %v2441 = vld [vmem:[%s242 + $0x98] sm:$0x3]
      %s2442 = scalar_lea.vmem %s1, 256
      %v2443 = vld [vmem:[%s2442] sm:$0xf]
      %v2444 = vld [vmem:[%s2442 + $0x4] sm:$0xf]
      %v2445 = vld [vmem:[%s2442 + $0x8] sm:$0xf]
      %v2446 = vld [vmem:[%s2442 + $0xc] sm:$0xf]
      %v2447 = vld [vmem:[%s2442 + $0x10] sm:$0xf]
      %v2448 = vld [vmem:[%s2442 + $0x14] sm:$0xf]
      %v2449 = vld [vmem:[%s2442 + $0x18] sm:$0xf]
      %v2450 = vld [vmem:[%s2442 + $0x1c] sm:$0xf]
      %v2451 = vld [vmem:[%s2442 + $0x20] sm:$0xf]
      %v2452 = vld [vmem:[%s2442 + $0x24] sm:$0xf]
      %v2453 = vld [vmem:[%s2442 + $0x28] sm:$0xf]
      %v2454 = vld [vmem:[%s2442 + $0x2c] sm:$0xf]
      %v2455 = vld [vmem:[%s2442 + $0x30] sm:$0xf]
      %v2456 = vld [vmem:[%s2442 + $0x34] sm:$0xf]
      %v2457 = vld [vmem:[%s2442 + $0x38] sm:$0xf]
      %v2458 = vld [vmem:[%s2442 + $0x3c] sm:$0xf]
      %v2496 = vunpack.c.l.b16 %v2405
      %v2497 = vunpack.c.l.b16 %v2406
      %v2498 = vunpack.c.l.b16 %v2407
      %v2499 = vunpack.c.l.b16 %v2408
      %v2500 = vunpack.c.l.b16 %v2409
      %v2501 = vunpack.c.l.b16 %v2410
      %v2502 = vunpack.c.l.b16 %v2411
      %v2503 = vunpack.c.l.b16 %v2412
      %v2504 = vunpack.c.l.b16 %v2413
      %v2505 = vunpack.c.l.b16 %v2414
      %v2506 = vunpack.c.l.b16 %v2415
      %v2507 = vunpack.c.l.b16 %v2416
      %v2508 = vunpack.c.l.b16 %v2417
      %v2509 = vunpack.c.l.b16 %v2418
      %v2510 = vunpack.c.l.b16 %v2419
      %v2511 = vunpack.c.l.b16 %v2420
      %v2512 = vunpack.c.l.b16 %v2421
      %v2513 = vunpack.c.l.b16 %v2422
      %v2514 = vunpack.c.l.b16 %v2423
      %v2515 = vunpack.c.l.b16 %v2424
      %v2516 = vunpack.c.l.b16 %v2425
      %v2517 = vunpack.c.l.b16 %v2426
      %v2518 = vunpack.c.l.b16 %v2427
      %v2519 = vunpack.c.l.b16 %v2428
      %v2520 = vunpack.c.l.b16 %v2429
      %v2521 = vunpack.c.l.b16 %v2430
      %v2522 = vunpack.c.l.b16 %v2431
      %v2523 = vunpack.c.l.b16 %v2432
      %v2524 = vunpack.c.l.b16 %v2433
      %v2525 = vunpack.c.l.b16 %v2434
      %v2526 = vunpack.c.l.b16 %v2435
      %v2527 = vunpack.c.l.b16 %v2436
      %v2528 = vunpack.c.l.b16 %v2437
      %v2529 = vunpack.c.l.b16 %v2438
      %v2530 = vunpack.c.l.b16 %v2439
      %v2531 = vunpack.c.l.b16 %v2440
      %v2532 = vunpack.c.l.b16 %v2441
      %v2533 = vpack.c.b16 %v2497, %v2496
      %v2534 = vpack.c.b16 %v2499, %v2498
      %v2535 = vpack.c.b16 %v2501, %v2500
      %v2536 = vpack.c.b16 %v2503, %v2502
      %v2537 = vpack.c.b16 %v2505, %v2504
      %v2538 = vpack.c.b16 %v2507, %v2506
      %v2539 = vpack.c.b16 %v2509, %v2508
      %v2540 = vpack.c.b16 %v2511, %v2510
      %v2541 = vpack.c.b16 %v2513, %v2512
      %v2542 = vpack.c.b16 %v2515, %v2514
      %v2543 = vpack.c.b16 %v2517, %v2516
      %v2544 = vpack.c.b16 %v2519, %v2518
      %v2545 = vpack.c.b16 %v2521, %v2520
      %v2546 = vpack.c.b16 %v2523, %v2522
      %v2547 = vpack.c.b16 %v2525, %v2524
      %v2548 = vpack.c.b16 %v2527, %v2526
      %v2549 = vpack.c.b16 %v2529, %v2528
      %v2550 = vpack.c.b16 %v2531, %v2530
      %v2551 = vpack.c.b16 %v2532, %v2532
      %vm2552 = vsmask.f32 6400
      %v2554 = vshrl.u32 %v2533, 16
      %v2556 = vrot.slane %v2554, 1
      %v2557 = vshll.u32 %v2533, 16
      %v2559 = vrot.slane %v2557, 2
      %v2560 = vor.u32 %v2556, %v2559
      %v2562 = vshrl.u32 %v2534, 16
      %v2564 = vrot.slane %v2562, 1
      %v2565 = vshll.u32 %v2534, 16
      %v2567 = vrot.slane %v2565, 2
      %v2568 = vor.u32 %v2564, %v2567
      %v2569 = vsel %vm2552, %v2560, %v2568
      %v2571 = vshrl.u32 %v2535, 16
      %v2573 = vrot.slane %v2571, 1
      %v2574 = vshll.u32 %v2535, 16
      %v2576 = vrot.slane %v2574, 2
      %v2577 = vor.u32 %v2573, %v2576
      %v2578 = vsel %vm2552, %v2568, %v2577
      %v2580 = vshrl.u32 %v2536, 16
      %v2582 = vrot.slane %v2580, 1
      %v2583 = vshll.u32 %v2536, 16
      %v2585 = vrot.slane %v2583, 2
      %v2586 = vor.u32 %v2582, %v2585
      %v2587 = vsel %vm2552, %v2577, %v2586
      %v2589 = vshrl.u32 %v2537, 16
      %v2591 = vrot.slane %v2589, 1
      %v2592 = vshll.u32 %v2537, 16
      %v2594 = vrot.slane %v2592, 2
      %v2595 = vor.u32 %v2591, %v2594
      %v2596 = vsel %vm2552, %v2586, %v2595
      %v2598 = vshrl.u32 %v2538, 16
      %v2600 = vrot.slane %v2598, 1
      %v2601 = vshll.u32 %v2538, 16
      %v2603 = vrot.slane %v2601, 2
      %v2604 = vor.u32 %v2600, %v2603
      %v2605 = vsel %vm2552, %v2595, %v2604
      %v2607 = vshrl.u32 %v2539, 16
      %v2609 = vrot.slane %v2607, 1
      %v2610 = vshll.u32 %v2539, 16
      %v2612 = vrot.slane %v2610, 2
      %v2613 = vor.u32 %v2609, %v2612
      %v2614 = vsel %vm2552, %v2604, %v2613
      %v2616 = vshrl.u32 %v2540, 16
      %v2618 = vrot.slane %v2616, 1
      %v2619 = vshll.u32 %v2540, 16
      %v2621 = vrot.slane %v2619, 2
      %v2622 = vor.u32 %v2618, %v2621
      %v2623 = vsel %vm2552, %v2613, %v2622
      %v2625 = vshrl.u32 %v2541, 16
      %v2627 = vrot.slane %v2625, 1
      %v2628 = vshll.u32 %v2541, 16
      %v2630 = vrot.slane %v2628, 2
      %v2631 = vor.u32 %v2627, %v2630
      %v2632 = vsel %vm2552, %v2622, %v2631
      %v2634 = vshrl.u32 %v2542, 16
      %v2636 = vrot.slane %v2634, 1
      %v2637 = vshll.u32 %v2542, 16
      %v2639 = vrot.slane %v2637, 2
      %v2640 = vor.u32 %v2636, %v2639
      %v2641 = vsel %vm2552, %v2631, %v2640
      %v2643 = vshrl.u32 %v2543, 16
      %v2645 = vrot.slane %v2643, 1
      %v2646 = vshll.u32 %v2543, 16
      %v2648 = vrot.slane %v2646, 2
      %v2649 = vor.u32 %v2645, %v2648
      %v2650 = vsel %vm2552, %v2640, %v2649
      %v2652 = vshrl.u32 %v2544, 16
      %v2654 = vrot.slane %v2652, 1
      %v2655 = vshll.u32 %v2544, 16
      %v2657 = vrot.slane %v2655, 2
      %v2658 = vor.u32 %v2654, %v2657
      %v2659 = vsel %vm2552, %v2649, %v2658
      %v2661 = vshrl.u32 %v2545, 16
      %v2663 = vrot.slane %v2661, 1
      %v2664 = vshll.u32 %v2545, 16
      %v2666 = vrot.slane %v2664, 2
      %v2667 = vor.u32 %v2663, %v2666
      %v2668 = vsel %vm2552, %v2658, %v2667
      %v2670 = vshrl.u32 %v2546, 16
      %v2672 = vrot.slane %v2670, 1
      %v2673 = vshll.u32 %v2546, 16
      %v2675 = vrot.slane %v2673, 2
      %v2676 = vor.u32 %v2672, %v2675
      %v2677 = vsel %vm2552, %v2667, %v2676
      %v2679 = vshrl.u32 %v2547, 16
      %v2681 = vrot.slane %v2679, 1
      %v2682 = vshll.u32 %v2547, 16
      %v2684 = vrot.slane %v2682, 2
      %v2685 = vor.u32 %v2681, %v2684
      %v2686 = vsel %vm2552, %v2676, %v2685
      %v2688 = vshrl.u32 %v2548, 16
      %v2690 = vrot.slane %v2688, 1
      %v2691 = vshll.u32 %v2548, 16
      %v2693 = vrot.slane %v2691, 2
      %v2694 = vor.u32 %v2690, %v2693
      %v2695 = vsel %vm2552, %v2685, %v2694
      %v2697 = vshrl.u32 %v2549, 16
      %v2699 = vrot.slane %v2697, 1
      %v2700 = vshll.u32 %v2549, 16
      %v2702 = vrot.slane %v2700, 2
      %v2703 = vor.u32 %v2699, %v2702
      %v2704 = vsel %vm2552, %v2694, %v2703
      %v2706 = vshrl.u32 %v2550, 16
      %v2708 = vrot.slane %v2706, 1
      %v2709 = vshll.u32 %v2550, 16
      %v2711 = vrot.slane %v2709, 2
      %v2712 = vor.u32 %v2708, %v2711
      %v2713 = vsel %vm2552, %v2703, %v2712
      %v2715 = vshrl.u32 %v2551, 16
      %v2717 = vrot.slane %v2715, 1
      %v2718 = vshll.u32 %v2551, 16
      %v2720 = vrot.slane %v2718, 2
      %v2721 = vor.u32 %v2717, %v2720
      %v2722 = vsel %vm2552, %v2712, %v2721
      %v2757 = vunpack.c.l.b16 %v2443
      %v2758 = vunpack.c.l.b16 %v2444
      %v2759 = vunpack.c.l.b16 %v2445
      %v2760 = vunpack.c.l.b16 %v2446
      %v2761 = vunpack.c.l.b16 %v2447
      %v2762 = vunpack.c.l.b16 %v2448
      %v2763 = vunpack.c.l.b16 %v2449
      %v2764 = vunpack.c.l.b16 %v2450
      %v2765 = vunpack.c.l.b16 %v2451
      %v2766 = vunpack.c.l.b16 %v2452
      %v2767 = vunpack.c.l.b16 %v2453
      %v2768 = vunpack.c.l.b16 %v2454
      %v2769 = vunpack.c.l.b16 %v2455
      %v2770 = vunpack.c.l.b16 %v2456
      %v2771 = vunpack.c.l.b16 %v2457
      %v2772 = vunpack.c.l.b16 %v2458
      %v2773 = vpack.c.b16 %v2758, %v2757
      %v2774 = vpack.c.b16 %v2760, %v2759
      %v2775 = vpack.c.b16 %v2762, %v2761
      %v2776 = vpack.c.b16 %v2764, %v2763
      %v2777 = vpack.c.b16 %v2766, %v2765
      %v2778 = vpack.c.b16 %v2768, %v2767
      %v2779 = vpack.c.b16 %v2770, %v2769
      %v2780 = vpack.c.b16 %v2772, %v2771
      %2789 = vmatprep.subr.bf16.mxu0 0
      %2790 = vmatpush1.bf16.msra.mxu0 %v2780
      %2791 = vmatprep.subr.bf16.mxu0 0
      %2792 = vmatpush1.bf16.msra.mxu0 %v2779
      %2793 = vmatprep.subr.bf16.mxu0 0
      %2794 = vmatpush1.bf16.msra.mxu0 %v2778
      %2795 = vmatprep.subr.bf16.mxu0 0
      %2796 = vmatpush1.bf16.msra.mxu0 %v2777
      %2797 = vmatprep.subr.bf16.mxu0 0
      %2798 = vmatpush1.bf16.msra.mxu0 %v2776
      %2799 = vmatprep.subr.bf16.mxu0 0
      %2800 = vmatpush1.bf16.msra.mxu0 %v2775
      %2801 = vmatprep.subr.bf16.mxu0 0
      %2802 = vmatpush1.bf16.msra.mxu0 %v2774
      %2803 = vmatprep.subr.bf16.mxu0 0
      %2804 = vmatpush1.bf16.msra.mxu0 %v2773
      %2805 = vmatprep.subr.bf16.mxu0 0
      %2806 = vmatpush2.bf16.msra.mxu0 0
      %2807 = vmatprep.subr.bf16.mxu0 0
      %2808 = vmatpush2.bf16.msra.mxu0 0
      %2809 = vmatprep.subr.bf16.mxu0 0
      %2810 = vmatpush2.bf16.msra.mxu0 0
      %2811 = vmatprep.subr.bf16.mxu0 0
      %2812 = vmatpush2.bf16.msra.mxu0 0
      %2813 = vmatprep.subr.bf16.mxu0 0
      %2814 = vmatpush2.bf16.msra.mxu0 0
      %2815 = vmatprep.subr.bf16.mxu0 0
      %2816 = vmatpush2.bf16.msra.mxu0 0
      %2817 = vmatprep.subr.bf16.mxu0 0
      %2818 = vmatpush2.bf16.msra.mxu0 0
      %2819 = vmatprep.subr.bf16.mxu0 0
      %2820 = vmatpush2.bf16.msra.mxu0 0
      %2821 = vmatprep.mubr.bf16.mxu0 0
      %2822 = vmatmul.mubr.bf16.gmra.mxu0 %v2569
      %v2823 = vpop.f32.mrf.mxu0
      %v2824 = vadd.f32 0.0, %v2823
      %v2825 = vpop.f32.mrf.mxu0
      %v2826 = vpop.f32.mrf.mxu0
      %v2827 = vadd.f32 0.0, %v2826
      %v2828 = vpop.f32.mrf.mxu0
      %2829 = vmatprep.mubr.bf16.mxu0 0
      %2830 = vmatmul.mubr.bf16.gmra.mxu0 %v2578
      %v2831 = vpop.f32.mrf.mxu0
      %v2832 = vadd.f32 0.0, %v2831
      %v2833 = vpop.f32.mrf.mxu0
      %v2834 = vpop.f32.mrf.mxu0
      %v2835 = vadd.f32 0.0, %v2834
      %v2836 = vpop.f32.mrf.mxu0
      %2837 = vmatprep.mubr.bf16.mxu0 0
      %2838 = vmatmul.mubr.bf16.gmra.mxu0 %v2587
      %v2839 = vpop.f32.mrf.mxu0
      %v2840 = vadd.f32 0.0, %v2839
      %v2841 = vpop.f32.mrf.mxu0
      %v2842 = vpop.f32.mrf.mxu0
      %v2843 = vadd.f32 0.0, %v2842
      %v2844 = vpop.f32.mrf.mxu0
      %2845 = vmatprep.mubr.bf16.mxu0 0
      %2846 = vmatmul.mubr.bf16.gmra.mxu0 %v2596
      %v2847 = vpop.f32.mrf.mxu0
      %v2848 = vadd.f32 0.0, %v2847
      %v2849 = vpop.f32.mrf.mxu0
      %v2850 = vpop.f32.mrf.mxu0
      %v2851 = vadd.f32 0.0, %v2850
      %v2852 = vpop.f32.mrf.mxu0
      %2853 = vmatprep.mubr.bf16.mxu0 0
      %2854 = vmatmul.mubr.bf16.gmra.mxu0 %v2605
      %v2855 = vpop.f32.mrf.mxu0
      %v2856 = vadd.f32 0.0, %v2855
      %v2857 = vpop.f32.mrf.mxu0
      %v2858 = vpop.f32.mrf.mxu0
      %v2859 = vadd.f32 0.0, %v2858
      %v2860 = vpop.f32.mrf.mxu0
      %2861 = vmatprep.mubr.bf16.mxu0 0
      %2862 = vmatmul.mubr.bf16.gmra.mxu0 %v2614
      %v2863 = vpop.f32.mrf.mxu0
      %v2864 = vadd.f32 0.0, %v2863
      %v2865 = vpop.f32.mrf.mxu0
      %v2866 = vpop.f32.mrf.mxu0
      %v2867 = vadd.f32 0.0, %v2866
      %v2868 = vpop.f32.mrf.mxu0
      %2869 = vmatprep.mubr.bf16.mxu0 0
      %2870 = vmatmul.mubr.bf16.gmra.mxu0 %v2623
      %v2871 = vpop.f32.mrf.mxu0
      %v2872 = vadd.f32 0.0, %v2871
      %v2873 = vpop.f32.mrf.mxu0
      %v2874 = vpop.f32.mrf.mxu0
      %v2875 = vadd.f32 0.0, %v2874
      %v2876 = vpop.f32.mrf.mxu0
      %2877 = vmatprep.mubr.bf16.mxu0 0
      %2878 = vmatmul.mubr.bf16.gmra.mxu0 %v2632
      %v2879 = vpop.f32.mrf.mxu0
      %v2880 = vadd.f32 0.0, %v2879
      %v2881 = vpop.f32.mrf.mxu0
      %v2882 = vpop.f32.mrf.mxu0
      %v2883 = vadd.f32 0.0, %v2882
      %v2884 = vpop.f32.mrf.mxu0
      %2885 = vmatprep.mubr.bf16.mxu0 0
      %2886 = vmatmul.mubr.bf16.gmra.mxu0 %v2641
      %v2887 = vpop.f32.mrf.mxu0
      %v2888 = vadd.f32 0.0, %v2887
      %v2889 = vpop.f32.mrf.mxu0
      %v2890 = vpop.f32.mrf.mxu0
      %v2891 = vadd.f32 0.0, %v2890
      %v2892 = vpop.f32.mrf.mxu0
      %2893 = vmatprep.mubr.bf16.mxu0 0
      %2894 = vmatmul.mubr.bf16.gmra.mxu0 %v2650
      %v2895 = vpop.f32.mrf.mxu0
      %v2896 = vadd.f32 0.0, %v2895
      %v2897 = vpop.f32.mrf.mxu0
      %v2898 = vpop.f32.mrf.mxu0
      %v2899 = vadd.f32 0.0, %v2898
      %v2900 = vpop.f32.mrf.mxu0
      %2901 = vmatprep.mubr.bf16.mxu0 0
      %2902 = vmatmul.mubr.bf16.gmra.mxu0 %v2659
      %v2903 = vpop.f32.mrf.mxu0
      %v2904 = vadd.f32 0.0, %v2903
      %v2905 = vpop.f32.mrf.mxu0
      %v2906 = vpop.f32.mrf.mxu0
      %v2907 = vadd.f32 0.0, %v2906
      %v2908 = vpop.f32.mrf.mxu0
      %2909 = vmatprep.mubr.bf16.mxu0 0
      %2910 = vmatmul.mubr.bf16.gmra.mxu0 %v2668
      %v2911 = vpop.f32.mrf.mxu0
      %v2912 = vadd.f32 0.0, %v2911
      %v2913 = vpop.f32.mrf.mxu0
      %v2914 = vpop.f32.mrf.mxu0
      %v2915 = vadd.f32 0.0, %v2914
      %v2916 = vpop.f32.mrf.mxu0
      %2917 = vmatprep.mubr.bf16.mxu0 0
      %2918 = vmatmul.mubr.bf16.gmra.mxu0 %v2677
      %v2919 = vpop.f32.mrf.mxu0
      %v2920 = vadd.f32 0.0, %v2919
      %v2921 = vpop.f32.mrf.mxu0
      %v2922 = vpop.f32.mrf.mxu0
      %v2923 = vadd.f32 0.0, %v2922
      %v2924 = vpop.f32.mrf.mxu0
      %2925 = vmatprep.mubr.bf16.mxu0 0
      %2926 = vmatmul.mubr.bf16.gmra.mxu0 %v2686
      %v2927 = vpop.f32.mrf.mxu0
      %v2928 = vadd.f32 0.0, %v2927
      %v2929 = vpop.f32.mrf.mxu0
      %v2930 = vpop.f32.mrf.mxu0
      %v2931 = vadd.f32 0.0, %v2930
      %v2932 = vpop.f32.mrf.mxu0
      %2933 = vmatprep.mubr.bf16.mxu0 0
      %2934 = vmatmul.mubr.bf16.gmra.mxu0 %v2695
      %v2935 = vpop.f32.mrf.mxu0
      %v2936 = vadd.f32 0.0, %v2935
      %v2937 = vpop.f32.mrf.mxu0
      %v2938 = vpop.f32.mrf.mxu0
      %v2939 = vadd.f32 0.0, %v2938
      %v2940 = vpop.f32.mrf.mxu0
      %2941 = vmatprep.mubr.bf16.mxu0 0
      %2942 = vmatmul.mubr.bf16.gmra.mxu0 %v2704
      %v2943 = vpop.f32.mrf.mxu0
      %v2944 = vadd.f32 0.0, %v2943
      %v2945 = vpop.f32.mrf.mxu0
      %v2946 = vpop.f32.mrf.mxu0
      %v2947 = vadd.f32 0.0, %v2946
      %v2948 = vpop.f32.mrf.mxu0
      %2949 = vmatprep.mubr.bf16.mxu0 0
      %2950 = vmatmul.mubr.bf16.gmra.mxu0 %v2713
      %v2951 = vpop.f32.mrf.mxu0
      %v2952 = vadd.f32 0.0, %v2951
      %v2953 = vpop.f32.mrf.mxu0
      %v2954 = vpop.f32.mrf.mxu0
      %v2955 = vadd.f32 0.0, %v2954
      %v2956 = vpop.f32.mrf.mxu0
      %2957 = vmatprep.mubr.bf16.mxu0 0
      %2958 = vmatmul.mubr.bf16.gmra.mxu0 %v2722
      %v2959 = vpop.f32.mrf.mxu0
      %v2960 = vadd.f32 0.0, %v2959
      %v2961 = vpop.f32.mrf.mxu0
      %v2962 = vpop.f32.mrf.mxu0
      %v2963 = vadd.f32 0.0, %v2962
      %v2964 = vpop.f32.mrf.mxu0
      %2965 = vdwg.mxu0
      %v2966 = vld [vmem:[#allocation2] sm:$0xff]
      %v2967 = vld [vmem:[#allocation2 + $0x8] sm:$0xff]
      %v2968 = vld [vmem:[#allocation2 + $0x10] sm:$0xff]
      %v2969 = vld [vmem:[#allocation2 + $0x18] sm:$0xff]
      %v2970 = vld [vmem:[#allocation2 + $0x20] sm:$0xff]
      %v2971 = vld [vmem:[#allocation2 + $0x28] sm:$0xff]
      %v2972 = vld [vmem:[#allocation2 + $0x30] sm:$0xff]
      %v2973 = vld [vmem:[#allocation2 + $0x38] sm:$0xff]
      %v2974 = vld [vmem:[#allocation2 + $0x40] sm:$0xff]
      %v2975 = vld [vmem:[#allocation2 + $0x48] sm:$0xff]
      %v2976 = vld [vmem:[#allocation2 + $0x50] sm:$0xff]
      %v2977 = vld [vmem:[#allocation2 + $0x58] sm:$0xff]
      %v2978 = vld [vmem:[#allocation2 + $0x60] sm:$0xff]
      %v2979 = vld [vmem:[#allocation2 + $0x68] sm:$0xff]
      %v2980 = vld [vmem:[#allocation2 + $0x70] sm:$0xff]
      %v2981 = vld [vmem:[#allocation2 + $0x78] sm:$0xff]
      %v2982 = vld [vmem:[#allocation2 + $0x80] sm:$0xff]
      %v2983 = vld [vmem:[#allocation2 + $0x88] sm:$0xff]
      %v2984 = vld [vmem:[#allocation2 + $0x90] sm:$0xff]
      %v2985 = vld [vmem:[#allocation2 + $0x98] sm:$0xff]
      %v2986 = vld [vmem:[#allocation2 + $0xa0] sm:$0xff]
      %v2987 = vld [vmem:[#allocation2 + $0xa8] sm:$0xff]
      %v2988 = vld [vmem:[#allocation2 + $0xb0] sm:$0xff]
      %v2989 = vld [vmem:[#allocation2 + $0xb8] sm:$0xff]
      %v2990 = vld [vmem:[#allocation2 + $0xc0] sm:$0xff]
      %v2991 = vld [vmem:[#allocation2 + $0xc8] sm:$0xff]
      %v2992 = vld [vmem:[#allocation2 + $0xd0] sm:$0xff]
      %v2993 = vld [vmem:[#allocation2 + $0xd8] sm:$0xff]
      %v2994 = vld [vmem:[#allocation2 + $0xe0] sm:$0xff]
      %v2995 = vld [vmem:[#allocation2 + $0xe8] sm:$0xff]
      %v2996 = vld [vmem:[#allocation2 + $0xf0] sm:$0xff]
      %v2997 = vld [vmem:[#allocation2 + $0xf8] sm:$0xff]
      %v2998 = vld [vmem:[#allocation2 + $0x100] sm:$0xff]
      %v2999 = vld [vmem:[#allocation2 + $0x108] sm:$0xff]
      %v3000 = vld [vmem:[#allocation2 + $0x110] sm:$0xff]
      %v3001 = vld [vmem:[#allocation2 + $0x118] sm:$0xff]
      %v3002 = vadd.f32 %v2966, %v2824
      %v3003 = vadd.f32 %v2967, %v2827
      %v3004 = vadd.f32 %v2968, %v2832
      %v3005 = vadd.f32 %v2969, %v2835
      %v3006 = vadd.f32 %v2970, %v2840
      %v3007 = vadd.f32 %v2971, %v2843
      %v3008 = vadd.f32 %v2972, %v2848
      %v3009 = vadd.f32 %v2973, %v2851
      %v3010 = vadd.f32 %v2974, %v2856
      %v3011 = vadd.f32 %v2975, %v2859
      %v3012 = vadd.f32 %v2976, %v2864
      %v3013 = vadd.f32 %v2977, %v2867
      %v3014 = vadd.f32 %v2978, %v2872
      %v3015 = vadd.f32 %v2979, %v2875
      %v3016 = vadd.f32 %v2980, %v2880
      %v3017 = vadd.f32 %v2981, %v2883
      %v3018 = vadd.f32 %v2982, %v2888
      %v3019 = vadd.f32 %v2983, %v2891
      %v3020 = vadd.f32 %v2984, %v2896
      %v3021 = vadd.f32 %v2985, %v2899
      %v3022 = vadd.f32 %v2986, %v2904
      %v3023 = vadd.f32 %v2987, %v2907
      %v3024 = vadd.f32 %v2988, %v2912
      %v3025 = vadd.f32 %v2989, %v2915
      %v3026 = vadd.f32 %v2990, %v2920
      %v3027 = vadd.f32 %v2991, %v2923
      %v3028 = vadd.f32 %v2992, %v2928
      %v3029 = vadd.f32 %v2993, %v2931
      %v3030 = vadd.f32 %v2994, %v2936
      %v3031 = vadd.f32 %v2995, %v2939
      %v3032 = vadd.f32 %v2996, %v2944
      %v3033 = vadd.f32 %v2997, %v2947
      %v3034 = vadd.f32 %v2998, %v2952
      %v3035 = vadd.f32 %v2999, %v2955
      %v3036 = vadd.f32 %v3000, %v2960
      %v3037 = vadd.f32 %v3001, %v2963
      %3038 = vst [vmem:[#allocation2] sm:$0xff] %v3002
      %3039 = vst [vmem:[#allocation2 + $0x8] sm:$0xff] %v3003
      %3040 = vst [vmem:[#allocation2 + $0x10] sm:$0xff] %v3004
      %3041 = vst [vmem:[#allocation2 + $0x18] sm:$0xff] %v3005
      %3042 = vst [vmem:[#allocation2 + $0x20] sm:$0xff] %v3006
      %3043 = vst [vmem:[#allocation2 + $0x28] sm:$0xff] %v3007
      %3044 = vst [vmem:[#allocation2 + $0x30] sm:$0xff] %v3008
      %3045 = vst [vmem:[#allocation2 + $0x38] sm:$0xff] %v3009
      %3046 = vst [vmem:[#allocation2 + $0x40] sm:$0xff] %v3010
      %3047 = vst [vmem:[#allocation2 + $0x48] sm:$0xff] %v3011
      %3048 = vst [vmem:[#allocation2 + $0x50] sm:$0xff] %v3012
      %3049 = vst [vmem:[#allocation2 + $0x58] sm:$0xff] %v3013
      %3050 = vst [vmem:[#allocation2 + $0x60] sm:$0xff] %v3014
      %3051 = vst [vmem:[#allocation2 + $0x68] sm:$0xff] %v3015
      %3052 = vst [vmem:[#allocation2 + $0x70] sm:$0xff] %v3016
      %3053 = vst [vmem:[#allocation2 + $0x78] sm:$0xff] %v3017
      %3054 = vst [vmem:[#allocation2 + $0x80] sm:$0xff] %v3018
      %3055 = vst [vmem:[#allocation2 + $0x88] sm:$0xff] %v3019
      %3056 = vst [vmem:[#allocation2 + $0x90] sm:$0xff] %v3020
      %3057 = vst [vmem:[#allocation2 + $0x98] sm:$0xff] %v3021
      %3058 = vst [vmem:[#allocation2 + $0xa0] sm:$0xff] %v3022
      %3059 = vst [vmem:[#allocation2 + $0xa8] sm:$0xff] %v3023
      %3060 = vst [vmem:[#allocation2 + $0xb0] sm:$0xff] %v3024
      %3061 = vst [vmem:[#allocation2 + $0xb8] sm:$0xff] %v3025
      %3062 = vst [vmem:[#allocation2 + $0xc0] sm:$0xff] %v3026
      %3063 = vst [vmem:[#allocation2 + $0xc8] sm:$0xff] %v3027
      %3064 = vst [vmem:[#allocation2 + $0xd0] sm:$0xff] %v3028
      %3065 = vst [vmem:[#allocation2 + $0xd8] sm:$0xff] %v3029
      %3066 = vst [vmem:[#allocation2 + $0xe0] sm:$0xff] %v3030
      %3067 = vst [vmem:[#allocation2 + $0xe8] sm:$0xff] %v3031
      %3068 = vst [vmem:[#allocation2 + $0xf0] sm:$0xff] %v3032
      %3069 = vst [vmem:[#allocation2 + $0xf8] sm:$0xff] %v3033
      %3070 = vst [vmem:[#allocation2 + $0x100] sm:$0xff] %v3034
      %3071 = vst [vmem:[#allocation2 + $0x108] sm:$0xff] %v3035
      %3072 = vst [vmem:[#allocation2 + $0x110] sm:$0xff] %v3036
      %3073 = vst [vmem:[#allocation2 + $0x118] sm:$0xff] %v3037
      %v3074 = vld [vmem:[%s242 + $0x8] sm:$0xc]
      %v3075 = vld [vmem:[%s242 + $0xc] sm:$0xf]
      %v3076 = vld [vmem:[%s242 + $0x10] sm:$0xf]
      %v3077 = vld [vmem:[%s242 + $0x14] sm:$0xf]
      %v3078 = vld [vmem:[%s242 + $0x18] sm:$0xf]
      %v3079 = vld [vmem:[%s242 + $0x1c] sm:$0xf]
      %v3080 = vld [vmem:[%s242 + $0x20] sm:$0xf]
      %v3081 = vld [vmem:[%s242 + $0x24] sm:$0xf]
      %v3082 = vld [vmem:[%s242 + $0x28] sm:$0xf]
      %v3083 = vld [vmem:[%s242 + $0x2c] sm:$0xf]
      %v3084 = vld [vmem:[%s242 + $0x30] sm:$0xf]
      %v3085 = vld [vmem:[%s242 + $0x34] sm:$0xf]
      %v3086 = vld [vmem:[%s242 + $0x38] sm:$0xf]
      %v3087 = vld [vmem:[%s242 + $0x3c] sm:$0xf]
      %v3088 = vld [vmem:[%s242 + $0x40] sm:$0xf]
      %v3089 = vld [vmem:[%s242 + $0x44] sm:$0xf]
      %v3090 = vld [vmem:[%s242 + $0x48] sm:$0xf]
      %v3091 = vld [vmem:[%s242 + $0x4c] sm:$0xf]
      %v3092 = vld [vmem:[%s242 + $0x50] sm:$0xf]
      %v3093 = vld [vmem:[%s242 + $0x54] sm:$0xf]
      %v3094 = vld [vmem:[%s242 + $0x58] sm:$0xf]
      %v3095 = vld [vmem:[%s242 + $0x5c] sm:$0xf]
      %v3096 = vld [vmem:[%s242 + $0x60] sm:$0xf]
      %v3097 = vld [vmem:[%s242 + $0x64] sm:$0xf]
      %v3098 = vld [vmem:[%s242 + $0x68] sm:$0xf]
      %v3099 = vld [vmem:[%s242 + $0x6c] sm:$0xf]
      %v3100 = vld [vmem:[%s242 + $0x70] sm:$0xf]
      %v3101 = vld [vmem:[%s242 + $0x74] sm:$0xf]
      %v3102 = vld [vmem:[%s242 + $0x78] sm:$0xf]
      %v3103 = vld [vmem:[%s242 + $0x7c] sm:$0xf]
      %v3104 = vld [vmem:[%s242 + $0x80] sm:$0xf]
      %v3105 = vld [vmem:[%s242 + $0x84] sm:$0xf]
      %v3106 = vld [vmem:[%s242 + $0x88] sm:$0xf]
      %v3107 = vld [vmem:[%s242 + $0x8c] sm:$0xf]
      %v3108 = vld [vmem:[%s242 + $0x90] sm:$0xf]
      %v3109 = vld [vmem:[%s242 + $0x94] sm:$0xf]
      %v3110 = vld [vmem:[%s242 + $0x98] sm:$0x3]
      %s3111 = scalar_lea.vmem %s1, 320
      %v3112 = vld [vmem:[%s3111] sm:$0xf]
      %v3113 = vld [vmem:[%s3111 + $0x4] sm:$0xf]
      %v3114 = vld [vmem:[%s3111 + $0x8] sm:$0xf]
      %v3115 = vld [vmem:[%s3111 + $0xc] sm:$0xf]
      %v3116 = vld [vmem:[%s3111 + $0x10] sm:$0xf]
      %v3117 = vld [vmem:[%s3111 + $0x14] sm:$0xf]
      %v3118 = vld [vmem:[%s3111 + $0x18] sm:$0xf]
      %v3119 = vld [vmem:[%s3111 + $0x1c] sm:$0xf]
      %v3120 = vld [vmem:[%s3111 + $0x20] sm:$0xf]
      %v3121 = vld [vmem:[%s3111 + $0x24] sm:$0xf]
      %v3122 = vld [vmem:[%s3111 + $0x28] sm:$0xf]
      %v3123 = vld [vmem:[%s3111 + $0x2c] sm:$0xf]
      %v3124 = vld [vmem:[%s3111 + $0x30] sm:$0xf]
      %v3125 = vld [vmem:[%s3111 + $0x34] sm:$0xf]
      %v3126 = vld [vmem:[%s3111 + $0x38] sm:$0xf]
      %v3127 = vld [vmem:[%s3111 + $0x3c] sm:$0xf]
      %v3165 = vunpack.c.l.b16 %v3074
      %v3166 = vunpack.c.l.b16 %v3075
      %v3167 = vunpack.c.l.b16 %v3076
      %v3168 = vunpack.c.l.b16 %v3077
      %v3169 = vunpack.c.l.b16 %v3078
      %v3170 = vunpack.c.l.b16 %v3079
      %v3171 = vunpack.c.l.b16 %v3080
      %v3172 = vunpack.c.l.b16 %v3081
      %v3173 = vunpack.c.l.b16 %v3082
      %v3174 = vunpack.c.l.b16 %v3083
      %v3175 = vunpack.c.l.b16 %v3084
      %v3176 = vunpack.c.l.b16 %v3085
      %v3177 = vunpack.c.l.b16 %v3086
      %v3178 = vunpack.c.l.b16 %v3087
      %v3179 = vunpack.c.l.b16 %v3088
      %v3180 = vunpack.c.l.b16 %v3089
      %v3181 = vunpack.c.l.b16 %v3090
      %v3182 = vunpack.c.l.b16 %v3091
      %v3183 = vunpack.c.l.b16 %v3092
      %v3184 = vunpack.c.l.b16 %v3093
      %v3185 = vunpack.c.l.b16 %v3094
      %v3186 = vunpack.c.l.b16 %v3095
      %v3187 = vunpack.c.l.b16 %v3096
      %v3188 = vunpack.c.l.b16 %v3097
      %v3189 = vunpack.c.l.b16 %v3098
      %v3190 = vunpack.c.l.b16 %v3099
      %v3191 = vunpack.c.l.b16 %v3100
      %v3192 = vunpack.c.l.b16 %v3101
      %v3193 = vunpack.c.l.b16 %v3102
      %v3194 = vunpack.c.l.b16 %v3103
      %v3195 = vunpack.c.l.b16 %v3104
      %v3196 = vunpack.c.l.b16 %v3105
      %v3197 = vunpack.c.l.b16 %v3106
      %v3198 = vunpack.c.l.b16 %v3107
      %v3199 = vunpack.c.l.b16 %v3108
      %v3200 = vunpack.c.l.b16 %v3109
      %v3201 = vunpack.c.l.b16 %v3110
      %v3202 = vpack.c.b16 %v3166, %v3165
      %v3203 = vpack.c.b16 %v3168, %v3167
      %v3204 = vpack.c.b16 %v3170, %v3169
      %v3205 = vpack.c.b16 %v3172, %v3171
      %v3206 = vpack.c.b16 %v3174, %v3173
      %v3207 = vpack.c.b16 %v3176, %v3175
      %v3208 = vpack.c.b16 %v3178, %v3177
      %v3209 = vpack.c.b16 %v3180, %v3179
      %v3210 = vpack.c.b16 %v3182, %v3181
      %v3211 = vpack.c.b16 %v3184, %v3183
      %v3212 = vpack.c.b16 %v3186, %v3185
      %v3213 = vpack.c.b16 %v3188, %v3187
      %v3214 = vpack.c.b16 %v3190, %v3189
      %v3215 = vpack.c.b16 %v3192, %v3191
      %v3216 = vpack.c.b16 %v3194, %v3193
      %v3217 = vpack.c.b16 %v3196, %v3195
      %v3218 = vpack.c.b16 %v3198, %v3197
      %v3219 = vpack.c.b16 %v3200, %v3199
      %v3220 = vpack.c.b16 %v3201, %v3201
      %vm3221 = vcmask 1045504
      %v3222 = vrot.slane %v3202, 2
      %v3223 = vrot.slane %v3203, 2
      %v3224 = vsel %vm3221, %v3222, %v3223
      %v3225 = vrot.slane %v3204, 2
      %v3226 = vsel %vm3221, %v3223, %v3225
      %v3227 = vrot.slane %v3205, 2
      %v3228 = vsel %vm3221, %v3225, %v3227
      %v3229 = vrot.slane %v3206, 2
      %v3230 = vsel %vm3221, %v3227, %v3229
      %v3231 = vrot.slane %v3207, 2
      %v3232 = vsel %vm3221, %v3229, %v3231
      %v3233 = vrot.slane %v3208, 2
      %v3234 = vsel %vm3221, %v3231, %v3233
      %v3235 = vrot.slane %v3209, 2
      %v3236 = vsel %vm3221, %v3233, %v3235
      %v3237 = vrot.slane %v3210, 2
      %v3238 = vsel %vm3221, %v3235, %v3237
      %v3239 = vrot.slane %v3211, 2
      %v3240 = vsel %vm3221, %v3237, %v3239
      %v3241 = vrot.slane %v3212, 2
      %v3242 = vsel %vm3221, %v3239, %v3241
      %v3243 = vrot.slane %v3213, 2
      %v3244 = vsel %vm3221, %v3241, %v3243
      %v3245 = vrot.slane %v3214, 2
      %v3246 = vsel %vm3221, %v3243, %v3245
      %v3247 = vrot.slane %v3215, 2
      %v3248 = vsel %vm3221, %v3245, %v3247
      %v3249 = vrot.slane %v3216, 2
      %v3250 = vsel %vm3221, %v3247, %v3249
      %v3251 = vrot.slane %v3217, 2
      %v3252 = vsel %vm3221, %v3249, %v3251
      %v3253 = vrot.slane %v3218, 2
      %v3254 = vsel %vm3221, %v3251, %v3253
      %v3255 = vrot.slane %v3219, 2
      %v3256 = vsel %vm3221, %v3253, %v3255
      %v3257 = vrot.slane %v3220, 2
      %v3258 = vsel %vm3221, %v3255, %v3257
      %v3293 = vunpack.c.l.b16 %v3112
      %v3294 = vunpack.c.l.b16 %v3113
      %v3295 = vunpack.c.l.b16 %v3114
      %v3296 = vunpack.c.l.b16 %v3115
      %v3297 = vunpack.c.l.b16 %v3116
      %v3298 = vunpack.c.l.b16 %v3117
      %v3299 = vunpack.c.l.b16 %v3118
      %v3300 = vunpack.c.l.b16 %v3119
      %v3301 = vunpack.c.l.b16 %v3120
      %v3302 = vunpack.c.l.b16 %v3121
      %v3303 = vunpack.c.l.b16 %v3122
      %v3304 = vunpack.c.l.b16 %v3123
      %v3305 = vunpack.c.l.b16 %v3124
      %v3306 = vunpack.c.l.b16 %v3125
      %v3307 = vunpack.c.l.b16 %v3126
      %v3308 = vunpack.c.l.b16 %v3127
      %v3309 = vpack.c.b16 %v3294, %v3293
      %v3310 = vpack.c.b16 %v3296, %v3295
      %v3311 = vpack.c.b16 %v3298, %v3297
      %v3312 = vpack.c.b16 %v3300, %v3299
      %v3313 = vpack.c.b16 %v3302, %v3301
      %v3314 = vpack.c.b16 %v3304, %v3303
      %v3315 = vpack.c.b16 %v3306, %v3305
      %v3316 = vpack.c.b16 %v3308, %v3307
      %3325 = vmatprep.subr.bf16.mxu0 0
      %3326 = vmatpush1.bf16.msra.mxu0 %v3316
      %3327 = vmatprep.subr.bf16.mxu0 0
      %3328 = vmatpush1.bf16.msra.mxu0 %v3315
      %3329 = vmatprep.subr.bf16.mxu0 0
      %3330 = vmatpush1.bf16.msra.mxu0 %v3314
      %3331 = vmatprep.subr.bf16.mxu0 0
      %3332 = vmatpush1.bf16.msra.mxu0 %v3313
      %3333 = vmatprep.subr.bf16.mxu0 0
      %3334 = vmatpush1.bf16.msra.mxu0 %v3312
      %3335 = vmatprep.subr.bf16.mxu0 0
      %3336 = vmatpush1.bf16.msra.mxu0 %v3311
      %3337 = vmatprep.subr.bf16.mxu0 0
      %3338 = vmatpush1.bf16.msra.mxu0 %v3310
      %3339 = vmatprep.subr.bf16.mxu0 0
      %3340 = vmatpush1.bf16.msra.mxu0 %v3309
      %3341 = vmatprep.subr.bf16.mxu0 0
      %3342 = vmatpush2.bf16.msra.mxu0 0
      %3343 = vmatprep.subr.bf16.mxu0 0
      %3344 = vmatpush2.bf16.msra.mxu0 0
      %3345 = vmatprep.subr.bf16.mxu0 0
      %3346 = vmatpush2.bf16.msra.mxu0 0
      %3347 = vmatprep.subr.bf16.mxu0 0
      %3348 = vmatpush2.bf16.msra.mxu0 0
      %3349 = vmatprep.subr.bf16.mxu0 0
      %3350 = vmatpush2.bf16.msra.mxu0 0
      %3351 = vmatprep.subr.bf16.mxu0 0
      %3352 = vmatpush2.bf16.msra.mxu0 0
      %3353 = vmatprep.subr.bf16.mxu0 0
      %3354 = vmatpush2.bf16.msra.mxu0 0
      %3355 = vmatprep.subr.bf16.mxu0 0
      %3356 = vmatpush2.bf16.msra.mxu0 0
      %3357 = vmatprep.mubr.bf16.mxu0 0
      %3358 = vmatmul.mubr.bf16.gmra.mxu0 %v3224
      %v3359 = vpop.f32.mrf.mxu0
      %v3360 = vadd.f32 0.0, %v3359
      %v3361 = vpop.f32.mrf.mxu0
      %v3362 = vpop.f32.mrf.mxu0
      %v3363 = vadd.f32 0.0, %v3362
      %v3364 = vpop.f32.mrf.mxu0
      %3365 = vmatprep.mubr.bf16.mxu0 0
      %3366 = vmatmul.mubr.bf16.gmra.mxu0 %v3226
      %v3367 = vpop.f32.mrf.mxu0
      %v3368 = vadd.f32 0.0, %v3367
      %v3369 = vpop.f32.mrf.mxu0
      %v3370 = vpop.f32.mrf.mxu0
      %v3371 = vadd.f32 0.0, %v3370
      %v3372 = vpop.f32.mrf.mxu0
      %3373 = vmatprep.mubr.bf16.mxu0 0
      %3374 = vmatmul.mubr.bf16.gmra.mxu0 %v3228
      %v3375 = vpop.f32.mrf.mxu0
      %v3376 = vadd.f32 0.0, %v3375
      %v3377 = vpop.f32.mrf.mxu0
      %v3378 = vpop.f32.mrf.mxu0
      %v3379 = vadd.f32 0.0, %v3378
      %v3380 = vpop.f32.mrf.mxu0
      %3381 = vmatprep.mubr.bf16.mxu0 0
      %3382 = vmatmul.mubr.bf16.gmra.mxu0 %v3230
      %v3383 = vpop.f32.mrf.mxu0
      %v3384 = vadd.f32 0.0, %v3383
      %v3385 = vpop.f32.mrf.mxu0
      %v3386 = vpop.f32.mrf.mxu0
      %v3387 = vadd.f32 0.0, %v3386
      %v3388 = vpop.f32.mrf.mxu0
      %3389 = vmatprep.mubr.bf16.mxu0 0
      %3390 = vmatmul.mubr.bf16.gmra.mxu0 %v3232
      %v3391 = vpop.f32.mrf.mxu0
      %v3392 = vadd.f32 0.0, %v3391
      %v3393 = vpop.f32.mrf.mxu0
      %v3394 = vpop.f32.mrf.mxu0
      %v3395 = vadd.f32 0.0, %v3394
      %v3396 = vpop.f32.mrf.mxu0
      %3397 = vmatprep.mubr.bf16.mxu0 0
      %3398 = vmatmul.mubr.bf16.gmra.mxu0 %v3234
      %v3399 = vpop.f32.mrf.mxu0
      %v3400 = vadd.f32 0.0, %v3399
      %v3401 = vpop.f32.mrf.mxu0
      %v3402 = vpop.f32.mrf.mxu0
      %v3403 = vadd.f32 0.0, %v3402
      %v3404 = vpop.f32.mrf.mxu0
      %3405 = vmatprep.mubr.bf16.mxu0 0
      %3406 = vmatmul.mubr.bf16.gmra.mxu0 %v3236
      %v3407 = vpop.f32.mrf.mxu0
      %v3408 = vadd.f32 0.0, %v3407
      %v3409 = vpop.f32.mrf.mxu0
      %v3410 = vpop.f32.mrf.mxu0
      %v3411 = vadd.f32 0.0, %v3410
      %v3412 = vpop.f32.mrf.mxu0
      %3413 = vmatprep.mubr.bf16.mxu0 0
      %3414 = vmatmul.mubr.bf16.gmra.mxu0 %v3238
      %v3415 = vpop.f32.mrf.mxu0
      %v3416 = vadd.f32 0.0, %v3415
      %v3417 = vpop.f32.mrf.mxu0
      %v3418 = vpop.f32.mrf.mxu0
      %v3419 = vadd.f32 0.0, %v3418
      %v3420 = vpop.f32.mrf.mxu0
      %3421 = vmatprep.mubr.bf16.mxu0 0
      %3422 = vmatmul.mubr.bf16.gmra.mxu0 %v3240
      %v3423 = vpop.f32.mrf.mxu0
      %v3424 = vadd.f32 0.0, %v3423
      %v3425 = vpop.f32.mrf.mxu0
      %v3426 = vpop.f32.mrf.mxu0
      %v3427 = vadd.f32 0.0, %v3426
      %v3428 = vpop.f32.mrf.mxu0
      %3429 = vmatprep.mubr.bf16.mxu0 0
      %3430 = vmatmul.mubr.bf16.gmra.mxu0 %v3242
      %v3431 = vpop.f32.mrf.mxu0
      %v3432 = vadd.f32 0.0, %v3431
      %v3433 = vpop.f32.mrf.mxu0
      %v3434 = vpop.f32.mrf.mxu0
      %v3435 = vadd.f32 0.0, %v3434
      %v3436 = vpop.f32.mrf.mxu0
      %3437 = vmatprep.mubr.bf16.mxu0 0
      %3438 = vmatmul.mubr.bf16.gmra.mxu0 %v3244
      %v3439 = vpop.f32.mrf.mxu0
      %v3440 = vadd.f32 0.0, %v3439
      %v3441 = vpop.f32.mrf.mxu0
      %v3442 = vpop.f32.mrf.mxu0
      %v3443 = vadd.f32 0.0, %v3442
      %v3444 = vpop.f32.mrf.mxu0
      %3445 = vmatprep.mubr.bf16.mxu0 0
      %3446 = vmatmul.mubr.bf16.gmra.mxu0 %v3246
      %v3447 = vpop.f32.mrf.mxu0
      %v3448 = vadd.f32 0.0, %v3447
      %v3449 = vpop.f32.mrf.mxu0
      %v3450 = vpop.f32.mrf.mxu0
      %v3451 = vadd.f32 0.0, %v3450
      %v3452 = vpop.f32.mrf.mxu0
      %3453 = vmatprep.mubr.bf16.mxu0 0
      %3454 = vmatmul.mubr.bf16.gmra.mxu0 %v3248
      %v3455 = vpop.f32.mrf.mxu0
      %v3456 = vadd.f32 0.0, %v3455
      %v3457 = vpop.f32.mrf.mxu0
      %v3458 = vpop.f32.mrf.mxu0
      %v3459 = vadd.f32 0.0, %v3458
      %v3460 = vpop.f32.mrf.mxu0
      %3461 = vmatprep.mubr.bf16.mxu0 0
      %3462 = vmatmul.mubr.bf16.gmra.mxu0 %v3250
      %v3463 = vpop.f32.mrf.mxu0
      %v3464 = vadd.f32 0.0, %v3463
      %v3465 = vpop.f32.mrf.mxu0
      %v3466 = vpop.f32.mrf.mxu0
      %v3467 = vadd.f32 0.0, %v3466
      %v3468 = vpop.f32.mrf.mxu0
      %3469 = vmatprep.mubr.bf16.mxu0 0
      %3470 = vmatmul.mubr.bf16.gmra.mxu0 %v3252
      %v3471 = vpop.f32.mrf.mxu0
      %v3472 = vadd.f32 0.0, %v3471
      %v3473 = vpop.f32.mrf.mxu0
      %v3474 = vpop.f32.mrf.mxu0
      %v3475 = vadd.f32 0.0, %v3474
      %v3476 = vpop.f32.mrf.mxu0
      %3477 = vmatprep.mubr.bf16.mxu0 0
      %3478 = vmatmul.mubr.bf16.gmra.mxu0 %v3254
      %v3479 = vpop.f32.mrf.mxu0
      %v3480 = vadd.f32 0.0, %v3479
      %v3481 = vpop.f32.mrf.mxu0
      %v3482 = vpop.f32.mrf.mxu0
      %v3483 = vadd.f32 0.0, %v3482
      %v3484 = vpop.f32.mrf.mxu0
      %3485 = vmatprep.mubr.bf16.mxu0 0
      %3486 = vmatmul.mubr.bf16.gmra.mxu0 %v3256
      %v3487 = vpop.f32.mrf.mxu0
      %v3488 = vadd.f32 0.0, %v3487
      %v3489 = vpop.f32.mrf.mxu0
      %v3490 = vpop.f32.mrf.mxu0
      %v3491 = vadd.f32 0.0, %v3490
      %v3492 = vpop.f32.mrf.mxu0
      %3493 = vmatprep.mubr.bf16.mxu0 0
      %3494 = vmatmul.mubr.bf16.gmra.mxu0 %v3258
      %v3495 = vpop.f32.mrf.mxu0
      %v3496 = vadd.f32 0.0, %v3495
      %v3497 = vpop.f32.mrf.mxu0
      %v3498 = vpop.f32.mrf.mxu0
      %v3499 = vadd.f32 0.0, %v3498
      %v3500 = vpop.f32.mrf.mxu0
      %3501 = vdwg.mxu0
      %v3502 = vld [vmem:[#allocation2] sm:$0xff]
      %v3503 = vld [vmem:[#allocation2 + $0x8] sm:$0xff]
      %v3504 = vld [vmem:[#allocation2 + $0x10] sm:$0xff]
      %v3505 = vld [vmem:[#allocation2 + $0x18] sm:$0xff]
      %v3506 = vld [vmem:[#allocation2 + $0x20] sm:$0xff]
      %v3507 = vld [vmem:[#allocation2 + $0x28] sm:$0xff]
      %v3508 = vld [vmem:[#allocation2 + $0x30] sm:$0xff]
      %v3509 = vld [vmem:[#allocation2 + $0x38] sm:$0xff]
      %v3510 = vld [vmem:[#allocation2 + $0x40] sm:$0xff]
      %v3511 = vld [vmem:[#allocation2 + $0x48] sm:$0xff]
      %v3512 = vld [vmem:[#allocation2 + $0x50] sm:$0xff]
      %v3513 = vld [vmem:[#allocation2 + $0x58] sm:$0xff]
      %v3514 = vld [vmem:[#allocation2 + $0x60] sm:$0xff]
      %v3515 = vld [vmem:[#allocation2 + $0x68] sm:$0xff]
      %v3516 = vld [vmem:[#allocation2 + $0x70] sm:$0xff]
      %v3517 = vld [vmem:[#allocation2 + $0x78] sm:$0xff]
      %v3518 = vld [vmem:[#allocation2 + $0x80] sm:$0xff]
      %v3519 = vld [vmem:[#allocation2 + $0x88] sm:$0xff]
      %v3520 = vld [vmem:[#allocation2 + $0x90] sm:$0xff]
      %v3521 = vld [vmem:[#allocation2 + $0x98] sm:$0xff]
      %v3522 = vld [vmem:[#allocation2 + $0xa0] sm:$0xff]
      %v3523 = vld [vmem:[#allocation2 + $0xa8] sm:$0xff]
      %v3524 = vld [vmem:[#allocation2 + $0xb0] sm:$0xff]
      %v3525 = vld [vmem:[#allocation2 + $0xb8] sm:$0xff]
      %v3526 = vld [vmem:[#allocation2 + $0xc0] sm:$0xff]
      %v3527 = vld [vmem:[#allocation2 + $0xc8] sm:$0xff]
      %v3528 = vld [vmem:[#allocation2 + $0xd0] sm:$0xff]
      %v3529 = vld [vmem:[#allocation2 + $0xd8] sm:$0xff]
      %v3530 = vld [vmem:[#allocation2 + $0xe0] sm:$0xff]
      %v3531 = vld [vmem:[#allocation2 + $0xe8] sm:$0xff]
      %v3532 = vld [vmem:[#allocation2 + $0xf0] sm:$0xff]
      %v3533 = vld [vmem:[#allocation2 + $0xf8] sm:$0xff]
      %v3534 = vld [vmem:[#allocation2 + $0x100] sm:$0xff]
      %v3535 = vld [vmem:[#allocation2 + $0x108] sm:$0xff]
      %v3536 = vld [vmem:[#allocation2 + $0x110] sm:$0xff]
      %v3537 = vld [vmem:[#allocation2 + $0x118] sm:$0xff]
      %v3538 = vadd.f32 %v3502, %v3360
      %v3539 = vadd.f32 %v3503, %v3363
      %v3540 = vadd.f32 %v3504, %v3368
      %v3541 = vadd.f32 %v3505, %v3371
      %v3542 = vadd.f32 %v3506, %v3376
      %v3543 = vadd.f32 %v3507, %v3379
      %v3544 = vadd.f32 %v3508, %v3384
      %v3545 = vadd.f32 %v3509, %v3387
      %v3546 = vadd.f32 %v3510, %v3392
      %v3547 = vadd.f32 %v3511, %v3395
      %v3548 = vadd.f32 %v3512, %v3400
      %v3549 = vadd.f32 %v3513, %v3403
      %v3550 = vadd.f32 %v3514, %v3408
      %v3551 = vadd.f32 %v3515, %v3411
      %v3552 = vadd.f32 %v3516, %v3416
      %v3553 = vadd.f32 %v3517, %v3419
      %v3554 = vadd.f32 %v3518, %v3424
      %v3555 = vadd.f32 %v3519, %v3427
      %v3556 = vadd.f32 %v3520, %v3432
      %v3557 = vadd.f32 %v3521, %v3435
      %v3558 = vadd.f32 %v3522, %v3440
      %v3559 = vadd.f32 %v3523, %v3443
      %v3560 = vadd.f32 %v3524, %v3448
      %v3561 = vadd.f32 %v3525, %v3451
      %v3562 = vadd.f32 %v3526, %v3456
      %v3563 = vadd.f32 %v3527, %v3459
      %v3564 = vadd.f32 %v3528, %v3464
      %v3565 = vadd.f32 %v3529, %v3467
      %v3566 = vadd.f32 %v3530, %v3472
      %v3567 = vadd.f32 %v3531, %v3475
      %v3568 = vadd.f32 %v3532, %v3480
      %v3569 = vadd.f32 %v3533, %v3483
      %v3570 = vadd.f32 %v3534, %v3488
      %v3571 = vadd.f32 %v3535, %v3491
      %v3572 = vadd.f32 %v3536, %v3496
      %v3573 = vadd.f32 %v3537, %v3499
      %3574 = vst [vmem:[#allocation2] sm:$0xff] %v3538
      %3575 = vst [vmem:[#allocation2 + $0x8] sm:$0xff] %v3539
      %3576 = vst [vmem:[#allocation2 + $0x10] sm:$0xff] %v3540
      %3577 = vst [vmem:[#allocation2 + $0x18] sm:$0xff] %v3541
      %3578 = vst [vmem:[#allocation2 + $0x20] sm:$0xff] %v3542
      %3579 = vst [vmem:[#allocation2 + $0x28] sm:$0xff] %v3543
      %3580 = vst [vmem:[#allocation2 + $0x30] sm:$0xff] %v3544
      %3581 = vst [vmem:[#allocation2 + $0x38] sm:$0xff] %v3545
      %3582 = vst [vmem:[#allocation2 + $0x40] sm:$0xff] %v3546
      %3583 = vst [vmem:[#allocation2 + $0x48] sm:$0xff] %v3547
      %3584 = vst [vmem:[#allocation2 + $0x50] sm:$0xff] %v3548
      %3585 = vst [vmem:[#allocation2 + $0x58] sm:$0xff] %v3549
      %3586 = vst [vmem:[#allocation2 + $0x60] sm:$0xff] %v3550
      %3587 = vst [vmem:[#allocation2 + $0x68] sm:$0xff] %v3551
      %3588 = vst [vmem:[#allocation2 + $0x70] sm:$0xff] %v3552
      %3589 = vst [vmem:[#allocation2 + $0x78] sm:$0xff] %v3553
      %3590 = vst [vmem:[#allocation2 + $0x80] sm:$0xff] %v3554
      %3591 = vst [vmem:[#allocation2 + $0x88] sm:$0xff] %v3555
      %3592 = vst [vmem:[#allocation2 + $0x90] sm:$0xff] %v3556
      %3593 = vst [vmem:[#allocation2 + $0x98] sm:$0xff] %v3557
      %3594 = vst [vmem:[#allocation2 + $0xa0] sm:$0xff] %v3558
      %3595 = vst [vmem:[#allocation2 + $0xa8] sm:$0xff] %v3559
      %3596 = vst [vmem:[#allocation2 + $0xb0] sm:$0xff] %v3560
      %3597 = vst [vmem:[#allocation2 + $0xb8] sm:$0xff] %v3561
      %3598 = vst [vmem:[#allocation2 + $0xc0] sm:$0xff] %v3562
      %3599 = vst [vmem:[#allocation2 + $0xc8] sm:$0xff] %v3563
      %3600 = vst [vmem:[#allocation2 + $0xd0] sm:$0xff] %v3564
      %3601 = vst [vmem:[#allocation2 + $0xd8] sm:$0xff] %v3565
      %3602 = vst [vmem:[#allocation2 + $0xe0] sm:$0xff] %v3566
      %3603 = vst [vmem:[#allocation2 + $0xe8] sm:$0xff] %v3567
      %3604 = vst [vmem:[#allocation2 + $0xf0] sm:$0xff] %v3568
      %3605 = vst [vmem:[#allocation2 + $0xf8] sm:$0xff] %v3569
      %3606 = vst [vmem:[#allocation2 + $0x100] sm:$0xff] %v3570
      %3607 = vst [vmem:[#allocation2 + $0x108] sm:$0xff] %v3571
      %3608 = vst [vmem:[#allocation2 + $0x110] sm:$0xff] %v3572
      %3609 = vst [vmem:[#allocation2 + $0x118] sm:$0xff] %v3573
      %v3610 = vld [vmem:[%s242 + $0x10] sm:$0xc]
      %v3611 = vld [vmem:[%s242 + $0x14] sm:$0xf]
      %v3612 = vld [vmem:[%s242 + $0x18] sm:$0xf]
      %v3613 = vld [vmem:[%s242 + $0x1c] sm:$0xf]
      %v3614 = vld [vmem:[%s242 + $0x20] sm:$0xf]
      %v3615 = vld [vmem:[%s242 + $0x24] sm:$0xf]
      %v3616 = vld [vmem:[%s242 + $0x28] sm:$0xf]
      %v3617 = vld [vmem:[%s242 + $0x2c] sm:$0xf]
      %v3618 = vld [vmem:[%s242 + $0x30] sm:$0xf]
      %v3619 = vld [vmem:[%s242 + $0x34] sm:$0xf]
      %v3620 = vld [vmem:[%s242 + $0x38] sm:$0xf]
      %v3621 = vld [vmem:[%s242 + $0x3c] sm:$0xf]
      %v3622 = vld [vmem:[%s242 + $0x40] sm:$0xf]
      %v3623 = vld [vmem:[%s242 + $0x44] sm:$0xf]
      %v3624 = vld [vmem:[%s242 + $0x48] sm:$0xf]
      %v3625 = vld [vmem:[%s242 + $0x4c] sm:$0xf]
      %v3626 = vld [vmem:[%s242 + $0x50] sm:$0xf]
      %v3627 = vld [vmem:[%s242 + $0x54] sm:$0xf]
      %v3628 = vld [vmem:[%s242 + $0x58] sm:$0xf]
      %v3629 = vld [vmem:[%s242 + $0x5c] sm:$0xf]
      %v3630 = vld [vmem:[%s242 + $0x60] sm:$0xf]
      %v3631 = vld [vmem:[%s242 + $0x64] sm:$0xf]
      %v3632 = vld [vmem:[%s242 + $0x68] sm:$0xf]
      %v3633 = vld [vmem:[%s242 + $0x6c] sm:$0xf]
      %v3634 = vld [vmem:[%s242 + $0x70] sm:$0xf]
      %v3635 = vld [vmem:[%s242 + $0x74] sm:$0xf]
      %v3636 = vld [vmem:[%s242 + $0x78] sm:$0xf]
      %v3637 = vld [vmem:[%s242 + $0x7c] sm:$0xf]
      %v3638 = vld [vmem:[%s242 + $0x80] sm:$0xf]
      %v3639 = vld [vmem:[%s242 + $0x84] sm:$0xf]
      %v3640 = vld [vmem:[%s242 + $0x88] sm:$0xf]
      %v3641 = vld [vmem:[%s242 + $0x8c] sm:$0xf]
      %v3642 = vld [vmem:[%s242 + $0x90] sm:$0xf]
      %v3643 = vld [vmem:[%s242 + $0x94] sm:$0xf]
      %v3644 = vld [vmem:[%s242 + $0x98] sm:$0xf]
      %v3645 = vld [vmem:[%s242 + $0x9c] sm:$0xf]
      %v3646 = vld [vmem:[%s242 + $0xa0] sm:$0x3]
      %s3647 = scalar_lea.vmem %s1, 384
      %v3648 = vld [vmem:[%s3647] sm:$0xf]
      %v3649 = vld [vmem:[%s3647 + $0x4] sm:$0xf]
      %v3650 = vld [vmem:[%s3647 + $0x8] sm:$0xf]
      %v3651 = vld [vmem:[%s3647 + $0xc] sm:$0xf]
      %v3652 = vld [vmem:[%s3647 + $0x10] sm:$0xf]
      %v3653 = vld [vmem:[%s3647 + $0x14] sm:$0xf]
      %v3654 = vld [vmem:[%s3647 + $0x18] sm:$0xf]
      %v3655 = vld [vmem:[%s3647 + $0x1c] sm:$0xf]
      %v3656 = vld [vmem:[%s3647 + $0x20] sm:$0xf]
      %v3657 = vld [vmem:[%s3647 + $0x24] sm:$0xf]
      %v3658 = vld [vmem:[%s3647 + $0x28] sm:$0xf]
      %v3659 = vld [vmem:[%s3647 + $0x2c] sm:$0xf]
      %v3660 = vld [vmem:[%s3647 + $0x30] sm:$0xf]
      %v3661 = vld [vmem:[%s3647 + $0x34] sm:$0xf]
      %v3662 = vld [vmem:[%s3647 + $0x38] sm:$0xf]
      %v3663 = vld [vmem:[%s3647 + $0x3c] sm:$0xf]
      %v3701 = vunpack.c.l.b16 %v3610
      %v3702 = vunpack.c.l.b16 %v3611
      %v3703 = vunpack.c.l.b16 %v3612
      %v3704 = vunpack.c.l.b16 %v3613
      %v3705 = vunpack.c.l.b16 %v3614
      %v3706 = vunpack.c.l.b16 %v3615
      %v3707 = vunpack.c.l.b16 %v3616
      %v3708 = vunpack.c.l.b16 %v3617
      %v3709 = vunpack.c.l.b16 %v3618
      %v3710 = vunpack.c.l.b16 %v3619
      %v3711 = vunpack.c.l.b16 %v3620
      %v3712 = vunpack.c.l.b16 %v3621
      %v3713 = vunpack.c.l.b16 %v3622
      %v3714 = vunpack.c.l.b16 %v3623
      %v3715 = vunpack.c.l.b16 %v3624
      %v3716 = vunpack.c.l.b16 %v3625
      %v3717 = vunpack.c.l.b16 %v3626
      %v3718 = vunpack.c.l.b16 %v3627
      %v3719 = vunpack.c.l.b16 %v3628
      %v3720 = vunpack.c.l.b16 %v3629
      %v3721 = vunpack.c.l.b16 %v3630
      %v3722 = vunpack.c.l.b16 %v3631
      %v3723 = vunpack.c.l.b16 %v3632
      %v3724 = vunpack.c.l.b16 %v3633
      %v3725 = vunpack.c.l.b16 %v3634
      %v3726 = vunpack.c.l.b16 %v3635
      %v3727 = vunpack.c.l.b16 %v3636
      %v3728 = vunpack.c.l.b16 %v3637
      %v3729 = vunpack.c.l.b16 %v3638
      %v3730 = vunpack.c.l.b16 %v3639
      %v3731 = vunpack.c.l.b16 %v3640
      %v3732 = vunpack.c.l.b16 %v3641
      %v3733 = vunpack.c.l.b16 %v3642
      %v3734 = vunpack.c.l.b16 %v3643
      %v3735 = vunpack.c.l.b16 %v3644
      %v3736 = vunpack.c.l.b16 %v3645
      %v3737 = vunpack.c.l.b16 %v3646
      %v3738 = vpack.c.b16 %v3702, %v3701
      %v3739 = vpack.c.b16 %v3704, %v3703
      %v3740 = vpack.c.b16 %v3706, %v3705
      %v3741 = vpack.c.b16 %v3708, %v3707
      %v3742 = vpack.c.b16 %v3710, %v3709
      %v3743 = vpack.c.b16 %v3712, %v3711
      %v3744 = vpack.c.b16 %v3714, %v3713
      %v3745 = vpack.c.b16 %v3716, %v3715
      %v3746 = vpack.c.b16 %v3718, %v3717
      %v3747 = vpack.c.b16 %v3720, %v3719
      %v3748 = vpack.c.b16 %v3722, %v3721
      %v3749 = vpack.c.b16 %v3724, %v3723
      %v3750 = vpack.c.b16 %v3726, %v3725
      %v3751 = vpack.c.b16 %v3728, %v3727
      %v3752 = vpack.c.b16 %v3730, %v3729
      %v3753 = vpack.c.b16 %v3732, %v3731
      %v3754 = vpack.c.b16 %v3734, %v3733
      %v3755 = vpack.c.b16 %v3736, %v3735
      %v3756 = vpack.c.b16 %v3737, %v3737
      %v3757 = vrot.slane %v3738, 2
      %v3758 = vrot.slane %v3739, 2
      %v3759 = vsel %vm3221, %v3757, %v3758
      %v3760 = vrot.slane %v3740, 2
      %v3761 = vsel %vm3221, %v3758, %v3760
      %v3762 = vrot.slane %v3741, 2
      %v3763 = vsel %vm3221, %v3760, %v3762
      %v3764 = vrot.slane %v3742, 2
      %v3765 = vsel %vm3221, %v3762, %v3764
      %v3766 = vrot.slane %v3743, 2
      %v3767 = vsel %vm3221, %v3764, %v3766
      %v3768 = vrot.slane %v3744, 2
      %v3769 = vsel %vm3221, %v3766, %v3768
      %v3770 = vrot.slane %v3745, 2
      %v3771 = vsel %vm3221, %v3768, %v3770
      %v3772 = vrot.slane %v3746, 2
      %v3773 = vsel %vm3221, %v3770, %v3772
      %v3774 = vrot.slane %v3747, 2
      %v3775 = vsel %vm3221, %v3772, %v3774
      %v3776 = vrot.slane %v3748, 2
      %v3777 = vsel %vm3221, %v3774, %v3776
      %v3778 = vrot.slane %v3749, 2
      %v3779 = vsel %vm3221, %v3776, %v3778
      %v3780 = vrot.slane %v3750, 2
      %v3781 = vsel %vm3221, %v3778, %v3780
      %v3782 = vrot.slane %v3751, 2
      %v3783 = vsel %vm3221, %v3780, %v3782
      %v3784 = vrot.slane %v3752, 2
      %v3785 = vsel %vm3221, %v3782, %v3784
      %v3786 = vrot.slane %v3753, 2
      %v3787 = vsel %vm3221, %v3784, %v3786
      %v3788 = vrot.slane %v3754, 2
      %v3789 = vsel %vm3221, %v3786, %v3788
      %v3790 = vrot.slane %v3755, 2
      %v3791 = vsel %vm3221, %v3788, %v3790
      %v3792 = vrot.slane %v3756, 2
      %v3793 = vsel %vm3221, %v3790, %v3792
      %v3828 = vunpack.c.l.b16 %v3648
      %v3829 = vunpack.c.l.b16 %v3649
      %v3830 = vunpack.c.l.b16 %v3650
      %v3831 = vunpack.c.l.b16 %v3651
      %v3832 = vunpack.c.l.b16 %v3652
      %v3833 = vunpack.c.l.b16 %v3653
      %v3834 = vunpack.c.l.b16 %v3654
      %v3835 = vunpack.c.l.b16 %v3655
      %v3836 = vunpack.c.l.b16 %v3656
      %v3837 = vunpack.c.l.b16 %v3657
      %v3838 = vunpack.c.l.b16 %v3658
      %v3839 = vunpack.c.l.b16 %v3659
      %v3840 = vunpack.c.l.b16 %v3660
      %v3841 = vunpack.c.l.b16 %v3661
      %v3842 = vunpack.c.l.b16 %v3662
      %v3843 = vunpack.c.l.b16 %v3663
      %v3844 = vpack.c.b16 %v3829, %v3828
      %v3845 = vpack.c.b16 %v3831, %v3830
      %v3846 = vpack.c.b16 %v3833, %v3832
      %v3847 = vpack.c.b16 %v3835, %v3834
      %v3848 = vpack.c.b16 %v3837, %v3836
      %v3849 = vpack.c.b16 %v3839, %v3838
      %v3850 = vpack.c.b16 %v3841, %v3840
      %v3851 = vpack.c.b16 %v3843, %v3842
      %3860 = vmatprep.subr.bf16.mxu0 0
      %3861 = vmatpush1.bf16.msra.mxu0 %v3851
      %3862 = vmatprep.subr.bf16.mxu0 0
      %3863 = vmatpush1.bf16.msra.mxu0 %v3850
      %3864 = vmatprep.subr.bf16.mxu0 0
      %3865 = vmatpush1.bf16.msra.mxu0 %v3849
      %3866 = vmatprep.subr.bf16.mxu0 0
      %3867 = vmatpush1.bf16.msra.mxu0 %v3848
      %3868 = vmatprep.subr.bf16.mxu0 0
      %3869 = vmatpush1.bf16.msra.mxu0 %v3847
      %3870 = vmatprep.subr.bf16.mxu0 0
      %3871 = vmatpush1.bf16.msra.mxu0 %v3846
      %3872 = vmatprep.subr.bf16.mxu0 0
      %3873 = vmatpush1.bf16.msra.mxu0 %v3845
      %3874 = vmatprep.subr.bf16.mxu0 0
      %3875 = vmatpush1.bf16.msra.mxu0 %v3844
      %3876 = vmatprep.subr.bf16.mxu0 0
      %3877 = vmatpush2.bf16.msra.mxu0 0
      %3878 = vmatprep.subr.bf16.mxu0 0
      %3879 = vmatpush2.bf16.msra.mxu0 0
      %3880 = vmatprep.subr.bf16.mxu0 0
      %3881 = vmatpush2.bf16.msra.mxu0 0
      %3882 = vmatprep.subr.bf16.mxu0 0
      %3883 = vmatpush2.bf16.msra.mxu0 0
      %3884 = vmatprep.subr.bf16.mxu0 0
      %3885 = vmatpush2.bf16.msra.mxu0 0
      %3886 = vmatprep.subr.bf16.mxu0 0
      %3887 = vmatpush2.bf16.msra.mxu0 0
      %3888 = vmatprep.subr.bf16.mxu0 0
      %3889 = vmatpush2.bf16.msra.mxu0 0
      %3890 = vmatprep.subr.bf16.mxu0 0
      %3891 = vmatpush2.bf16.msra.mxu0 0
      %3892 = vmatprep.mubr.bf16.mxu0 0
      %3893 = vmatmul.mubr.bf16.gmra.mxu0 %v3759
      %v3894 = vpop.f32.mrf.mxu0
      %v3895 = vadd.f32 0.0, %v3894
      %v3896 = vpop.f32.mrf.mxu0
      %v3897 = vpop.f32.mrf.mxu0
      %v3898 = vadd.f32 0.0, %v3897
      %v3899 = vpop.f32.mrf.mxu0
      %3900 = vmatprep.mubr.bf16.mxu0 0
      %3901 = vmatmul.mubr.bf16.gmra.mxu0 %v3761
      %v3902 = vpop.f32.mrf.mxu0
      %v3903 = vadd.f32 0.0, %v3902
      %v3904 = vpop.f32.mrf.mxu0
      %v3905 = vpop.f32.mrf.mxu0
      %v3906 = vadd.f32 0.0, %v3905
      %v3907 = vpop.f32.mrf.mxu0
      %3908 = vmatprep.mubr.bf16.mxu0 0
      %3909 = vmatmul.mubr.bf16.gmra.mxu0 %v3763
      %v3910 = vpop.f32.mrf.mxu0
      %v3911 = vadd.f32 0.0, %v3910
      %v3912 = vpop.f32.mrf.mxu0
      %v3913 = vpop.f32.mrf.mxu0
      %v3914 = vadd.f32 0.0, %v3913
      %v3915 = vpop.f32.mrf.mxu0
      %3916 = vmatprep.mubr.bf16.mxu0 0
      %3917 = vmatmul.mubr.bf16.gmra.mxu0 %v3765
      %v3918 = vpop.f32.mrf.mxu0
      %v3919 = vadd.f32 0.0, %v3918
      %v3920 = vpop.f32.mrf.mxu0
      %v3921 = vpop.f32.mrf.mxu0
      %v3922 = vadd.f32 0.0, %v3921
      %v3923 = vpop.f32.mrf.mxu0
      %3924 = vmatprep.mubr.bf16.mxu0 0
      %3925 = vmatmul.mubr.bf16.gmra.mxu0 %v3767
      %v3926 = vpop.f32.mrf.mxu0
      %v3927 = vadd.f32 0.0, %v3926
      %v3928 = vpop.f32.mrf.mxu0
      %v3929 = vpop.f32.mrf.mxu0
      %v3930 = vadd.f32 0.0, %v3929
      %v3931 = vpop.f32.mrf.mxu0
      %3932 = vmatprep.mubr.bf16.mxu0 0
      %3933 = vmatmul.mubr.bf16.gmra.mxu0 %v3769
      %v3934 = vpop.f32.mrf.mxu0
      %v3935 = vadd.f32 0.0, %v3934
      %v3936 = vpop.f32.mrf.mxu0
      %v3937 = vpop.f32.mrf.mxu0
      %v3938 = vadd.f32 0.0, %v3937
      %v3939 = vpop.f32.mrf.mxu0
      %3940 = vmatprep.mubr.bf16.mxu0 0
      %3941 = vmatmul.mubr.bf16.gmra.mxu0 %v3771
      %v3942 = vpop.f32.mrf.mxu0
      %v3943 = vadd.f32 0.0, %v3942
      %v3944 = vpop.f32.mrf.mxu0
      %v3945 = vpop.f32.mrf.mxu0
      %v3946 = vadd.f32 0.0, %v3945
      %v3947 = vpop.f32.mrf.mxu0
      %3948 = vmatprep.mubr.bf16.mxu0 0
      %3949 = vmatmul.mubr.bf16.gmra.mxu0 %v3773
      %v3950 = vpop.f32.mrf.mxu0
      %v3951 = vadd.f32 0.0, %v3950
      %v3952 = vpop.f32.mrf.mxu0
      %v3953 = vpop.f32.mrf.mxu0
      %v3954 = vadd.f32 0.0, %v3953
      %v3955 = vpop.f32.mrf.mxu0
      %3956 = vmatprep.mubr.bf16.mxu0 0
      %3957 = vmatmul.mubr.bf16.gmra.mxu0 %v3775
      %v3958 = vpop.f32.mrf.mxu0
      %v3959 = vadd.f32 0.0, %v3958
      %v3960 = vpop.f32.mrf.mxu0
      %v3961 = vpop.f32.mrf.mxu0
      %v3962 = vadd.f32 0.0, %v3961
      %v3963 = vpop.f32.mrf.mxu0
      %3964 = vmatprep.mubr.bf16.mxu0 0
      %3965 = vmatmul.mubr.bf16.gmra.mxu0 %v3777
      %v3966 = vpop.f32.mrf.mxu0
      %v3967 = vadd.f32 0.0, %v3966
      %v3968 = vpop.f32.mrf.mxu0
      %v3969 = vpop.f32.mrf.mxu0
      %v3970 = vadd.f32 0.0, %v3969
      %v3971 = vpop.f32.mrf.mxu0
      %3972 = vmatprep.mubr.bf16.mxu0 0
      %3973 = vmatmul.mubr.bf16.gmra.mxu0 %v3779
      %v3974 = vpop.f32.mrf.mxu0
      %v3975 = vadd.f32 0.0, %v3974
      %v3976 = vpop.f32.mrf.mxu0
      %v3977 = vpop.f32.mrf.mxu0
      %v3978 = vadd.f32 0.0, %v3977
      %v3979 = vpop.f32.mrf.mxu0
      %3980 = vmatprep.mubr.bf16.mxu0 0
      %3981 = vmatmul.mubr.bf16.gmra.mxu0 %v3781
      %v3982 = vpop.f32.mrf.mxu0
      %v3983 = vadd.f32 0.0, %v3982
      %v3984 = vpop.f32.mrf.mxu0
      %v3985 = vpop.f32.mrf.mxu0
      %v3986 = vadd.f32 0.0, %v3985
      %v3987 = vpop.f32.mrf.mxu0
      %3988 = vmatprep.mubr.bf16.mxu0 0
      %3989 = vmatmul.mubr.bf16.gmra.mxu0 %v3783
      %v3990 = vpop.f32.mrf.mxu0
      %v3991 = vadd.f32 0.0, %v3990
      %v3992 = vpop.f32.mrf.mxu0
      %v3993 = vpop.f32.mrf.mxu0
      %v3994 = vadd.f32 0.0, %v3993
      %v3995 = vpop.f32.mrf.mxu0
      %3996 = vmatprep.mubr.bf16.mxu0 0
      %3997 = vmatmul.mubr.bf16.gmra.mxu0 %v3785
      %v3998 = vpop.f32.mrf.mxu0
      %v3999 = vadd.f32 0.0, %v3998
      %v4000 = vpop.f32.mrf.mxu0
      %v4001 = vpop.f32.mrf.mxu0
      %v4002 = vadd.f32 0.0, %v4001
      %v4003 = vpop.f32.mrf.mxu0
      %4004 = vmatprep.mubr.bf16.mxu0 0
      %4005 = vmatmul.mubr.bf16.gmra.mxu0 %v3787
      %v4006 = vpop.f32.mrf.mxu0
      %v4007 = vadd.f32 0.0, %v4006
      %v4008 = vpop.f32.mrf.mxu0
      %v4009 = vpop.f32.mrf.mxu0
      %v4010 = vadd.f32 0.0, %v4009
      %v4011 = vpop.f32.mrf.mxu0
      %4012 = vmatprep.mubr.bf16.mxu0 0
      %4013 = vmatmul.mubr.bf16.gmra.mxu0 %v3789
      %v4014 = vpop.f32.mrf.mxu0
      %v4015 = vadd.f32 0.0, %v4014
      %v4016 = vpop.f32.mrf.mxu0
      %v4017 = vpop.f32.mrf.mxu0
      %v4018 = vadd.f32 0.0, %v4017
      %v4019 = vpop.f32.mrf.mxu0
      %4020 = vmatprep.mubr.bf16.mxu0 0
      %4021 = vmatmul.mubr.bf16.gmra.mxu0 %v3791
      %v4022 = vpop.f32.mrf.mxu0
      %v4023 = vadd.f32 0.0, %v4022
      %v4024 = vpop.f32.mrf.mxu0
      %v4025 = vpop.f32.mrf.mxu0
      %v4026 = vadd.f32 0.0, %v4025
      %v4027 = vpop.f32.mrf.mxu0
      %4028 = vmatprep.mubr.bf16.mxu0 0
      %4029 = vmatmul.mubr.bf16.gmra.mxu0 %v3793
      %v4030 = vpop.f32.mrf.mxu0
      %v4031 = vadd.f32 0.0, %v4030
      %v4032 = vpop.f32.mrf.mxu0
      %v4033 = vpop.f32.mrf.mxu0
      %v4034 = vadd.f32 0.0, %v4033
      %v4035 = vpop.f32.mrf.mxu0
      %4036 = vdwg.mxu0
      %v4037 = vld [vmem:[#allocation2] sm:$0xff]
      %v4038 = vld [vmem:[#allocation2 + $0x8] sm:$0xff]
      %v4039 = vld [vmem:[#allocation2 + $0x10] sm:$0xff]
      %v4040 = vld [vmem:[#allocation2 + $0x18] sm:$0xff]
      %v4041 = vld [vmem:[#allocation2 + $0x20] sm:$0xff]
      %v4042 = vld [vmem:[#allocation2 + $0x28] sm:$0xff]
      %v4043 = vld [vmem:[#allocation2 + $0x30] sm:$0xff]
      %v4044 = vld [vmem:[#allocation2 + $0x38] sm:$0xff]
      %v4045 = vld [vmem:[#allocation2 + $0x40] sm:$0xff]
      %v4046 = vld [vmem:[#allocation2 + $0x48] sm:$0xff]
      %v4047 = vld [vmem:[#allocation2 + $0x50] sm:$0xff]
      %v4048 = vld [vmem:[#allocation2 + $0x58] sm:$0xff]
      %v4049 = vld [vmem:[#allocation2 + $0x60] sm:$0xff]
      %v4050 = vld [vmem:[#allocation2 + $0x68] sm:$0xff]
      %v4051 = vld [vmem:[#allocation2 + $0x70] sm:$0xff]
      %v4052 = vld [vmem:[#allocation2 + $0x78] sm:$0xff]
      %v4053 = vld [vmem:[#allocation2 + $0x80] sm:$0xff]
      %v4054 = vld [vmem:[#allocation2 + $0x88] sm:$0xff]
      %v4055 = vld [vmem:[#allocation2 + $0x90] sm:$0xff]
      %v4056 = vld [vmem:[#allocation2 + $0x98] sm:$0xff]
      %v4057 = vld [vmem:[#allocation2 + $0xa0] sm:$0xff]
      %v4058 = vld [vmem:[#allocation2 + $0xa8] sm:$0xff]
      %v4059 = vld [vmem:[#allocation2 + $0xb0] sm:$0xff]
      %v4060 = vld [vmem:[#allocation2 + $0xb8] sm:$0xff]
      %v4061 = vld [vmem:[#allocation2 + $0xc0] sm:$0xff]
      %v4062 = vld [vmem:[#allocation2 + $0xc8] sm:$0xff]
      %v4063 = vld [vmem:[#allocation2 + $0xd0] sm:$0xff]
      %v4064 = vld [vmem:[#allocation2 + $0xd8] sm:$0xff]
      %v4065 = vld [vmem:[#allocation2 + $0xe0] sm:$0xff]
      %v4066 = vld [vmem:[#allocation2 + $0xe8] sm:$0xff]
      %v4067 = vld [vmem:[#allocation2 + $0xf0] sm:$0xff]
      %v4068 = vld [vmem:[#allocation2 + $0xf8] sm:$0xff]
      %v4069 = vld [vmem:[#allocation2 + $0x100] sm:$0xff]
      %v4070 = vld [vmem:[#allocation2 + $0x108] sm:$0xff]
      %v4071 = vld [vmem:[#allocation2 + $0x110] sm:$0xff]
      %v4072 = vld [vmem:[#allocation2 + $0x118] sm:$0xff]
      %v4073 = vadd.f32 %v4037, %v3895
      %v4074 = vadd.f32 %v4038, %v3898
      %v4075 = vadd.f32 %v4039, %v3903
      %v4076 = vadd.f32 %v4040, %v3906
      %v4077 = vadd.f32 %v4041, %v3911
      %v4078 = vadd.f32 %v4042, %v3914
      %v4079 = vadd.f32 %v4043, %v3919
      %v4080 = vadd.f32 %v4044, %v3922
      %v4081 = vadd.f32 %v4045, %v3927
      %v4082 = vadd.f32 %v4046, %v3930
      %v4083 = vadd.f32 %v4047, %v3935
      %v4084 = vadd.f32 %v4048, %v3938
      %v4085 = vadd.f32 %v4049, %v3943
      %v4086 = vadd.f32 %v4050, %v3946
      %v4087 = vadd.f32 %v4051, %v3951
      %v4088 = vadd.f32 %v4052, %v3954
      %v4089 = vadd.f32 %v4053, %v3959
      %v4090 = vadd.f32 %v4054, %v3962
      %v4091 = vadd.f32 %v4055, %v3967
      %v4092 = vadd.f32 %v4056, %v3970
      %v4093 = vadd.f32 %v4057, %v3975
      %v4094 = vadd.f32 %v4058, %v3978
      %v4095 = vadd.f32 %v4059, %v3983
      %v4096 = vadd.f32 %v4060, %v3986
      %v4097 = vadd.f32 %v4061, %v3991
      %v4098 = vadd.f32 %v4062, %v3994
      %v4099 = vadd.f32 %v4063, %v3999
      %v4100 = vadd.f32 %v4064, %v4002
      %v4101 = vadd.f32 %v4065, %v4007
      %v4102 = vadd.f32 %v4066, %v4010
      %v4103 = vadd.f32 %v4067, %v4015
      %v4104 = vadd.f32 %v4068, %v4018
      %v4105 = vadd.f32 %v4069, %v4023
      %v4106 = vadd.f32 %v4070, %v4026
      %v4107 = vadd.f32 %v4071, %v4031
      %v4108 = vadd.f32 %v4072, %v4034
      %4109 = vst [vmem:[#allocation2] sm:$0xff] %v4073
      %4110 = vst [vmem:[#allocation2 + $0x8] sm:$0xff] %v4074
      %4111 = vst [vmem:[#allocation2 + $0x10] sm:$0xff] %v4075
      %4112 = vst [vmem:[#allocation2 + $0x18] sm:$0xff] %v4076
      %4113 = vst [vmem:[#allocation2 + $0x20] sm:$0xff] %v4077
      %4114 = vst [vmem:[#allocation2 + $0x28] sm:$0xff] %v4078
      %4115 = vst [vmem:[#allocation2 + $0x30] sm:$0xff] %v4079
      %4116 = vst [vmem:[#allocation2 + $0x38] sm:$0xff] %v4080
      %4117 = vst [vmem:[#allocation2 + $0x40] sm:$0xff] %v4081
      %4118 = vst [vmem:[#allocation2 + $0x48] sm:$0xff] %v4082
      %4119 = vst [vmem:[#allocation2 + $0x50] sm:$0xff] %v4083
      %4120 = vst [vmem:[#allocation2 + $0x58] sm:$0xff] %v4084
      %4121 = vst [vmem:[#allocation2 + $0x60] sm:$0xff] %v4085
      %4122 = vst [vmem:[#allocation2 + $0x68] sm:$0xff] %v4086
      %4123 = vst [vmem:[#allocation2 + $0x70] sm:$0xff] %v4087
      %4124 = vst [vmem:[#allocation2 + $0x78] sm:$0xff] %v4088
      %4125 = vst [vmem:[#allocation2 + $0x80] sm:$0xff] %v4089
      %4126 = vst [vmem:[#allocation2 + $0x88] sm:$0xff] %v4090
      %4127 = vst [vmem:[#allocation2 + $0x90] sm:$0xff] %v4091
      %4128 = vst [vmem:[#allocation2 + $0x98] sm:$0xff] %v4092
      %4129 = vst [vmem:[#allocation2 + $0xa0] sm:$0xff] %v4093
      %4130 = vst [vmem:[#allocation2 + $0xa8] sm:$0xff] %v4094
      %4131 = vst [vmem:[#allocation2 + $0xb0] sm:$0xff] %v4095
      %4132 = vst [vmem:[#allocation2 + $0xb8] sm:$0xff] %v4096
      %4133 = vst [vmem:[#allocation2 + $0xc0] sm:$0xff] %v4097
      %4134 = vst [vmem:[#allocation2 + $0xc8] sm:$0xff] %v4098
      %4135 = vst [vmem:[#allocation2 + $0xd0] sm:$0xff] %v4099
      %4136 = vst [vmem:[#allocation2 + $0xd8] sm:$0xff] %v4100
      %4137 = vst [vmem:[#allocation2 + $0xe0] sm:$0xff] %v4101
      %4138 = vst [vmem:[#allocation2 + $0xe8] sm:$0xff] %v4102
      %4139 = vst [vmem:[#allocation2 + $0xf0] sm:$0xff] %v4103
      %4140 = vst [vmem:[#allocation2 + $0xf8] sm:$0xff] %v4104
      %4141 = vst [vmem:[#allocation2 + $0x100] sm:$0xff] %v4105
      %4142 = vst [vmem:[#allocation2 + $0x108] sm:$0xff] %v4106
      %4143 = vst [vmem:[#allocation2 + $0x110] sm:$0xff] %v4107
      %4144 = vst [vmem:[#allocation2 + $0x118] sm:$0xff] %v4108
      %v4145 = vld [vmem:[%s242 + $0x10] sm:$0xc]
      %v4146 = vld [vmem:[%s242 + $0x14] sm:$0xf]
      %v4147 = vld [vmem:[%s242 + $0x18] sm:$0xf]
      %v4148 = vld [vmem:[%s242 + $0x1c] sm:$0xf]
      %v4149 = vld [vmem:[%s242 + $0x20] sm:$0xf]
      %v4150 = vld [vmem:[%s242 + $0x24] sm:$0xf]
      %v4151 = vld [vmem:[%s242 + $0x28] sm:$0xf]
      %v4152 = vld [vmem:[%s242 + $0x2c] sm:$0xf]
      %v4153 = vld [vmem:[%s242 + $0x30] sm:$0xf]
      %v4154 = vld [vmem:[%s242 + $0x34] sm:$0xf]
      %v4155 = vld [vmem:[%s242 + $0x38] sm:$0xf]
      %v4156 = vld [vmem:[%s242 + $0x3c] sm:$0xf]
      %v4157 = vld [vmem:[%s242 + $0x40] sm:$0xf]
      %v4158 = vld [vmem:[%s242 + $0x44] sm:$0xf]
      %v4159 = vld [vmem:[%s242 + $0x48] sm:$0xf]
      %v4160 = vld [vmem:[%s242 + $0x4c] sm:$0xf]
      %v4161 = vld [vmem:[%s242 + $0x50] sm:$0xf]
      %v4162 = vld [vmem:[%s242 + $0x54] sm:$0xf]
      %v4163 = vld [vmem:[%s242 + $0x58] sm:$0xf]
      %v4164 = vld [vmem:[%s242 + $0x5c] sm:$0xf]
      %v4165 = vld [vmem:[%s242 + $0x60] sm:$0xf]
      %v4166 = vld [vmem:[%s242 + $0x64] sm:$0xf]
      %v4167 = vld [vmem:[%s242 + $0x68] sm:$0xf]
      %v4168 = vld [vmem:[%s242 + $0x6c] sm:$0xf]
      %v4169 = vld [vmem:[%s242 + $0x70] sm:$0xf]
      %v4170 = vld [vmem:[%s242 + $0x74] sm:$0xf]
      %v4171 = vld [vmem:[%s242 + $0x78] sm:$0xf]
      %v4172 = vld [vmem:[%s242 + $0x7c] sm:$0xf]
      %v4173 = vld [vmem:[%s242 + $0x80] sm:$0xf]
      %v4174 = vld [vmem:[%s242 + $0x84] sm:$0xf]
      %v4175 = vld [vmem:[%s242 + $0x88] sm:$0xf]
      %v4176 = vld [vmem:[%s242 + $0x8c] sm:$0xf]
      %v4177 = vld [vmem:[%s242 + $0x90] sm:$0xf]
      %v4178 = vld [vmem:[%s242 + $0x94] sm:$0xf]
      %v4179 = vld [vmem:[%s242 + $0x98] sm:$0xf]
      %v4180 = vld [vmem:[%s242 + $0x9c] sm:$0xf]
      %v4181 = vld [vmem:[%s242 + $0xa0] sm:$0x7]
      %s4182 = scalar_lea.vmem %s1, 448
      %v4183 = vld [vmem:[%s4182] sm:$0xf]
      %v4184 = vld [vmem:[%s4182 + $0x4] sm:$0xf]
      %v4185 = vld [vmem:[%s4182 + $0x8] sm:$0xf]
      %v4186 = vld [vmem:[%s4182 + $0xc] sm:$0xf]
      %v4187 = vld [vmem:[%s4182 + $0x10] sm:$0xf]
      %v4188 = vld [vmem:[%s4182 + $0x14] sm:$0xf]
      %v4189 = vld [vmem:[%s4182 + $0x18] sm:$0xf]
      %v4190 = vld [vmem:[%s4182 + $0x1c] sm:$0xf]
      %v4191 = vld [vmem:[%s4182 + $0x20] sm:$0xf]
      %v4192 = vld [vmem:[%s4182 + $0x24] sm:$0xf]
      %v4193 = vld [vmem:[%s4182 + $0x28] sm:$0xf]
      %v4194 = vld [vmem:[%s4182 + $0x2c] sm:$0xf]
      %v4195 = vld [vmem:[%s4182 + $0x30] sm:$0xf]
      %v4196 = vld [vmem:[%s4182 + $0x34] sm:$0xf]
      %v4197 = vld [vmem:[%s4182 + $0x38] sm:$0xf]
      %v4198 = vld [vmem:[%s4182 + $0x3c] sm:$0xf]
      %v4236 = vunpack.c.l.b16 %v4145
      %v4237 = vunpack.c.l.b16 %v4146
      %v4238 = vunpack.c.l.b16 %v4147
      %v4239 = vunpack.c.l.b16 %v4148
      %v4240 = vunpack.c.l.b16 %v4149
      %v4241 = vunpack.c.l.b16 %v4150
      %v4242 = vunpack.c.l.b16 %v4151
      %v4243 = vunpack.c.l.b16 %v4152
      %v4244 = vunpack.c.l.b16 %v4153
      %v4245 = vunpack.c.l.b16 %v4154
      %v4246 = vunpack.c.l.b16 %v4155
      %v4247 = vunpack.c.l.b16 %v4156
      %v4248 = vunpack.c.l.b16 %v4157
      %v4249 = vunpack.c.l.b16 %v4158
      %v4250 = vunpack.c.l.b16 %v4159
      %v4251 = vunpack.c.l.b16 %v4160
      %v4252 = vunpack.c.l.b16 %v4161
      %v4253 = vunpack.c.l.b16 %v4162
      %v4254 = vunpack.c.l.b16 %v4163
      %v4255 = vunpack.c.l.b16 %v4164
      %v4256 = vunpack.c.l.b16 %v4165
      %v4257 = vunpack.c.l.b16 %v4166
      %v4258 = vunpack.c.l.b16 %v4167
      %v4259 = vunpack.c.l.b16 %v4168
      %v4260 = vunpack.c.l.b16 %v4169
      %v4261 = vunpack.c.l.b16 %v4170
      %v4262 = vunpack.c.l.b16 %v4171
      %v4263 = vunpack.c.l.b16 %v4172
      %v4264 = vunpack.c.l.b16 %v4173
      %v4265 = vunpack.c.l.b16 %v4174
      %v4266 = vunpack.c.l.b16 %v4175
      %v4267 = vunpack.c.l.b16 %v4176
      %v4268 = vunpack.c.l.b16 %v4177
      %v4269 = vunpack.c.l.b16 %v4178
      %v4270 = vunpack.c.l.b16 %v4179
      %v4271 = vunpack.c.l.b16 %v4180
      %v4272 = vunpack.c.l.b16 %v4181
      %v4273 = vpack.c.b16 %v4237, %v4236
      %v4274 = vpack.c.b16 %v4239, %v4238
      %v4275 = vpack.c.b16 %v4241, %v4240
      %v4276 = vpack.c.b16 %v4243, %v4242
      %v4277 = vpack.c.b16 %v4245, %v4244
      %v4278 = vpack.c.b16 %v4247, %v4246
      %v4279 = vpack.c.b16 %v4249, %v4248
      %v4280 = vpack.c.b16 %v4251, %v4250
      %v4281 = vpack.c.b16 %v4253, %v4252
      %v4282 = vpack.c.b16 %v4255, %v4254
      %v4283 = vpack.c.b16 %v4257, %v4256
      %v4284 = vpack.c.b16 %v4259, %v4258
      %v4285 = vpack.c.b16 %v4261, %v4260
      %v4286 = vpack.c.b16 %v4263, %v4262
      %v4287 = vpack.c.b16 %v4265, %v4264
      %v4288 = vpack.c.b16 %v4267, %v4266
      %v4289 = vpack.c.b16 %v4269, %v4268
      %v4290 = vpack.c.b16 %v4271, %v4270
      %v4291 = vpack.c.b16 %v4272, %v4272
      %vm4292 = vsmask.f32 5376
      %v4294 = vshrl.u32 %v4273, 16
      %v4296 = vrot.slane %v4294, 2
      %v4297 = vshll.u32 %v4273, 16
      %v4299 = vrot.slane %v4297, 3
      %v4300 = vor.u32 %v4296, %v4299
      %v4302 = vshrl.u32 %v4274, 16
      %v4304 = vrot.slane %v4302, 2
      %v4305 = vshll.u32 %v4274, 16
      %v4307 = vrot.slane %v4305, 3
      %v4308 = vor.u32 %v4304, %v4307
      %v4309 = vsel %vm4292, %v4300, %v4308
      %v4311 = vshrl.u32 %v4275, 16
      %v4313 = vrot.slane %v4311, 2
      %v4314 = vshll.u32 %v4275, 16
      %v4316 = vrot.slane %v4314, 3
      %v4317 = vor.u32 %v4313, %v4316
      %v4318 = vsel %vm4292, %v4308, %v4317
      %v4320 = vshrl.u32 %v4276, 16
      %v4322 = vrot.slane %v4320, 2
      %v4323 = vshll.u32 %v4276, 16
      %v4325 = vrot.slane %v4323, 3
      %v4326 = vor.u32 %v4322, %v4325
      %v4327 = vsel %vm4292, %v4317, %v4326
      %v4329 = vshrl.u32 %v4277, 16
      %v4331 = vrot.slane %v4329, 2
      %v4332 = vshll.u32 %v4277, 16
      %v4334 = vrot.slane %v4332, 3
      %v4335 = vor.u32 %v4331, %v4334
      %v4336 = vsel %vm4292, %v4326, %v4335
      %v4338 = vshrl.u32 %v4278, 16
      %v4340 = vrot.slane %v4338, 2
      %v4341 = vshll.u32 %v4278, 16
      %v4343 = vrot.slane %v4341, 3
      %v4344 = vor.u32 %v4340, %v4343
      %v4345 = vsel %vm4292, %v4335, %v4344
      %v4347 = vshrl.u32 %v4279, 16
      %v4349 = vrot.slane %v4347, 2
      %v4350 = vshll.u32 %v4279, 16
      %v4352 = vrot.slane %v4350, 3
      %v4353 = vor.u32 %v4349, %v4352
      %v4354 = vsel %vm4292, %v4344, %v4353
      %v4356 = vshrl.u32 %v4280, 16
      %v4358 = vrot.slane %v4356, 2
      %v4359 = vshll.u32 %v4280, 16
      %v4361 = vrot.slane %v4359, 3
      %v4362 = vor.u32 %v4358, %v4361
      %v4363 = vsel %vm4292, %v4353, %v4362
      %v4365 = vshrl.u32 %v4281, 16
      %v4367 = vrot.slane %v4365, 2
      %v4368 = vshll.u32 %v4281, 16
      %v4370 = vrot.slane %v4368, 3
      %v4371 = vor.u32 %v4367, %v4370
      %v4372 = vsel %vm4292, %v4362, %v4371
      %v4374 = vshrl.u32 %v4282, 16
      %v4376 = vrot.slane %v4374, 2
      %v4377 = vshll.u32 %v4282, 16
      %v4379 = vrot.slane %v4377, 3
      %v4380 = vor.u32 %v4376, %v4379
      %v4381 = vsel %vm4292, %v4371, %v4380
      %v4383 = vshrl.u32 %v4283, 16
      %v4385 = vrot.slane %v4383, 2
      %v4386 = vshll.u32 %v4283, 16
      %v4388 = vrot.slane %v4386, 3
      %v4389 = vor.u32 %v4385, %v4388
      %v4390 = vsel %vm4292, %v4380, %v4389
      %v4392 = vshrl.u32 %v4284, 16
      %v4394 = vrot.slane %v4392, 2
      %v4395 = vshll.u32 %v4284, 16
      %v4397 = vrot.slane %v4395, 3
      %v4398 = vor.u32 %v4394, %v4397
      %v4399 = vsel %vm4292, %v4389, %v4398
      %v4401 = vshrl.u32 %v4285, 16
      %v4403 = vrot.slane %v4401, 2
      %v4404 = vshll.u32 %v4285, 16
      %v4406 = vrot.slane %v4404, 3
      %v4407 = vor.u32 %v4403, %v4406
      %v4408 = vsel %vm4292, %v4398, %v4407
      %v4410 = vshrl.u32 %v4286, 16
      %v4412 = vrot.slane %v4410, 2
      %v4413 = vshll.u32 %v4286, 16
      %v4415 = vrot.slane %v4413, 3
      %v4416 = vor.u32 %v4412, %v4415
      %v4417 = vsel %vm4292, %v4407, %v4416
      %v4419 = vshrl.u32 %v4287, 16
      %v4421 = vrot.slane %v4419, 2
      %v4422 = vshll.u32 %v4287, 16
      %v4424 = vrot.slane %v4422, 3
      %v4425 = vor.u32 %v4421, %v4424
      %v4426 = vsel %vm4292, %v4416, %v4425
      %v4428 = vshrl.u32 %v4288, 16
      %v4430 = vrot.slane %v4428, 2
      %v4431 = vshll.u32 %v4288, 16
      %v4433 = vrot.slane %v4431, 3
      %v4434 = vor.u32 %v4430, %v4433
      %v4435 = vsel %vm4292, %v4425, %v4434
      %v4437 = vshrl.u32 %v4289, 16
      %v4439 = vrot.slane %v4437, 2
      %v4440 = vshll.u32 %v4289, 16
      %v4442 = vrot.slane %v4440, 3
      %v4443 = vor.u32 %v4439, %v4442
      %v4444 = vsel %vm4292, %v4434, %v4443
      %v4446 = vshrl.u32 %v4290, 16
      %v4448 = vrot.slane %v4446, 2
      %v4449 = vshll.u32 %v4290, 16
      %v4451 = vrot.slane %v4449, 3
      %v4452 = vor.u32 %v4448, %v4451
      %v4453 = vsel %vm4292, %v4443, %v4452
      %v4455 = vshrl.u32 %v4291, 16
      %v4457 = vrot.slane %v4455, 2
      %v4458 = vshll.u32 %v4291, 16
      %v4460 = vrot.slane %v4458, 3
      %v4461 = vor.u32 %v4457, %v4460
      %v4462 = vsel %vm4292, %v4452, %v4461
      %v4497 = vunpack.c.l.b16 %v4183
      %v4498 = vunpack.c.l.b16 %v4184
      %v4499 = vunpack.c.l.b16 %v4185
      %v4500 = vunpack.c.l.b16 %v4186
      %v4501 = vunpack.c.l.b16 %v4187
      %v4502 = vunpack.c.l.b16 %v4188
      %v4503 = vunpack.c.l.b16 %v4189
      %v4504 = vunpack.c.l.b16 %v4190
      %v4505 = vunpack.c.l.b16 %v4191
      %v4506 = vunpack.c.l.b16 %v4192
      %v4507 = vunpack.c.l.b16 %v4193
      %v4508 = vunpack.c.l.b16 %v4194
      %v4509 = vunpack.c.l.b16 %v4195
      %v4510 = vunpack.c.l.b16 %v4196
      %v4511 = vunpack.c.l.b16 %v4197
      %v4512 = vunpack.c.l.b16 %v4198
      %v4513 = vpack.c.b16 %v4498, %v4497
      %v4514 = vpack.c.b16 %v4500, %v4499
      %v4515 = vpack.c.b16 %v4502, %v4501
      %v4516 = vpack.c.b16 %v4504, %v4503
      %v4517 = vpack.c.b16 %v4506, %v4505
      %v4518 = vpack.c.b16 %v4508, %v4507
      %v4519 = vpack.c.b16 %v4510, %v4509
      %v4520 = vpack.c.b16 %v4512, %v4511
      %4529 = vmatprep.subr.bf16.mxu0 0
      %4530 = vmatpush1.bf16.msra.mxu0 %v4520
      %4531 = vmatprep.subr.bf16.mxu0 0
      %4532 = vmatpush1.bf16.msra.mxu0 %v4519
      %4533 = vmatprep.subr.bf16.mxu0 0
      %4534 = vmatpush1.bf16.msra.mxu0 %v4518
      %4535 = vmatprep.subr.bf16.mxu0 0
      %4536 = vmatpush1.bf16.msra.mxu0 %v4517
      %4537 = vmatprep.subr.bf16.mxu0 0
      %4538 = vmatpush1.bf16.msra.mxu0 %v4516
      %4539 = vmatprep.subr.bf16.mxu0 0
      %4540 = vmatpush1.bf16.msra.mxu0 %v4515
      %4541 = vmatprep.subr.bf16.mxu0 0
      %4542 = vmatpush1.bf16.msra.mxu0 %v4514
      %4543 = vmatprep.subr.bf16.mxu0 0
      %4544 = vmatpush1.bf16.msra.mxu0 %v4513
      %4545 = vmatprep.subr.bf16.mxu0 0
      %4546 = vmatpush2.bf16.msra.mxu0 0
      %4547 = vmatprep.subr.bf16.mxu0 0
      %4548 = vmatpush2.bf16.msra.mxu0 0
      %4549 = vmatprep.subr.bf16.mxu0 0
      %4550 = vmatpush2.bf16.msra.mxu0 0
      %4551 = vmatprep.subr.bf16.mxu0 0
      %4552 = vmatpush2.bf16.msra.mxu0 0
      %4553 = vmatprep.subr.bf16.mxu0 0
      %4554 = vmatpush2.bf16.msra.mxu0 0
      %4555 = vmatprep.subr.bf16.mxu0 0
      %4556 = vmatpush2.bf16.msra.mxu0 0
      %4557 = vmatprep.subr.bf16.mxu0 0
      %4558 = vmatpush2.bf16.msra.mxu0 0
      %4559 = vmatprep.subr.bf16.mxu0 0
      %4560 = vmatpush2.bf16.msra.mxu0 0
      %4561 = vmatprep.mubr.bf16.mxu0 0
      %4562 = vmatmul.mubr.bf16.gmra.mxu0 %v4309
      %v4563 = vpop.f32.mrf.mxu0
      %v4564 = vadd.f32 0.0, %v4563
      %v4565 = vpop.f32.mrf.mxu0
      %v4566 = vpop.f32.mrf.mxu0
      %v4567 = vadd.f32 0.0, %v4566
      %v4568 = vpop.f32.mrf.mxu0
      %4569 = vmatprep.mubr.bf16.mxu0 0
      %4570 = vmatmul.mubr.bf16.gmra.mxu0 %v4318
      %v4571 = vpop.f32.mrf.mxu0
      %v4572 = vadd.f32 0.0, %v4571
      %v4573 = vpop.f32.mrf.mxu0
      %v4574 = vpop.f32.mrf.mxu0
      %v4575 = vadd.f32 0.0, %v4574
      %v4576 = vpop.f32.mrf.mxu0
      %4577 = vmatprep.mubr.bf16.mxu0 0
      %4578 = vmatmul.mubr.bf16.gmra.mxu0 %v4327
      %v4579 = vpop.f32.mrf.mxu0
      %v4580 = vadd.f32 0.0, %v4579
      %v4581 = vpop.f32.mrf.mxu0
      %v4582 = vpop.f32.mrf.mxu0
      %v4583 = vadd.f32 0.0, %v4582
      %v4584 = vpop.f32.mrf.mxu0
      %4585 = vmatprep.mubr.bf16.mxu0 0
      %4586 = vmatmul.mubr.bf16.gmra.mxu0 %v4336
      %v4587 = vpop.f32.mrf.mxu0
      %v4588 = vadd.f32 0.0, %v4587
      %v4589 = vpop.f32.mrf.mxu0
      %v4590 = vpop.f32.mrf.mxu0
      %v4591 = vadd.f32 0.0, %v4590
      %v4592 = vpop.f32.mrf.mxu0
      %4593 = vmatprep.mubr.bf16.mxu0 0
      %4594 = vmatmul.mubr.bf16.gmra.mxu0 %v4345
      %v4595 = vpop.f32.mrf.mxu0
      %v4596 = vadd.f32 0.0, %v4595
      %v4597 = vpop.f32.mrf.mxu0
      %v4598 = vpop.f32.mrf.mxu0
      %v4599 = vadd.f32 0.0, %v4598
      %v4600 = vpop.f32.mrf.mxu0
      %4601 = vmatprep.mubr.bf16.mxu0 0
      %4602 = vmatmul.mubr.bf16.gmra.mxu0 %v4354
      %v4603 = vpop.f32.mrf.mxu0
      %v4604 = vadd.f32 0.0, %v4603
      %v4605 = vpop.f32.mrf.mxu0
      %v4606 = vpop.f32.mrf.mxu0
      %v4607 = vadd.f32 0.0, %v4606
      %v4608 = vpop.f32.mrf.mxu0
      %4609 = vmatprep.mubr.bf16.mxu0 0
      %4610 = vmatmul.mubr.bf16.gmra.mxu0 %v4363
      %v4611 = vpop.f32.mrf.mxu0
      %v4612 = vadd.f32 0.0, %v4611
      %v4613 = vpop.f32.mrf.mxu0
      %v4614 = vpop.f32.mrf.mxu0
      %v4615 = vadd.f32 0.0, %v4614
      %v4616 = vpop.f32.mrf.mxu0
      %4617 = vmatprep.mubr.bf16.mxu0 0
      %4618 = vmatmul.mubr.bf16.gmra.mxu0 %v4372
      %v4619 = vpop.f32.mrf.mxu0
      %v4620 = vadd.f32 0.0, %v4619
      %v4621 = vpop.f32.mrf.mxu0
      %v4622 = vpop.f32.mrf.mxu0
      %v4623 = vadd.f32 0.0, %v4622
      %v4624 = vpop.f32.mrf.mxu0
      %4625 = vmatprep.mubr.bf16.mxu0 0
      %4626 = vmatmul.mubr.bf16.gmra.mxu0 %v4381
      %v4627 = vpop.f32.mrf.mxu0
      %v4628 = vadd.f32 0.0, %v4627
      %v4629 = vpop.f32.mrf.mxu0
      %v4630 = vpop.f32.mrf.mxu0
      %v4631 = vadd.f32 0.0, %v4630
      %v4632 = vpop.f32.mrf.mxu0
      %4633 = vmatprep.mubr.bf16.mxu0 0
      %4634 = vmatmul.mubr.bf16.gmra.mxu0 %v4390
      %v4635 = vpop.f32.mrf.mxu0
      %v4636 = vadd.f32 0.0, %v4635
      %v4637 = vpop.f32.mrf.mxu0
      %v4638 = vpop.f32.mrf.mxu0
      %v4639 = vadd.f32 0.0, %v4638
      %v4640 = vpop.f32.mrf.mxu0
      %4641 = vmatprep.mubr.bf16.mxu0 0
      %4642 = vmatmul.mubr.bf16.gmra.mxu0 %v4399
      %v4643 = vpop.f32.mrf.mxu0
      %v4644 = vadd.f32 0.0, %v4643
      %v4645 = vpop.f32.mrf.mxu0
      %v4646 = vpop.f32.mrf.mxu0
      %v4647 = vadd.f32 0.0, %v4646
      %v4648 = vpop.f32.mrf.mxu0
      %4649 = vmatprep.mubr.bf16.mxu0 0
      %4650 = vmatmul.mubr.bf16.gmra.mxu0 %v4408
      %v4651 = vpop.f32.mrf.mxu0
      %v4652 = vadd.f32 0.0, %v4651
      %v4653 = vpop.f32.mrf.mxu0
      %v4654 = vpop.f32.mrf.mxu0
      %v4655 = vadd.f32 0.0, %v4654
      %v4656 = vpop.f32.mrf.mxu0
      %4657 = vmatprep.mubr.bf16.mxu0 0
      %4658 = vmatmul.mubr.bf16.gmra.mxu0 %v4417
      %v4659 = vpop.f32.mrf.mxu0
      %v4660 = vadd.f32 0.0, %v4659
      %v4661 = vpop.f32.mrf.mxu0
      %v4662 = vpop.f32.mrf.mxu0
      %v4663 = vadd.f32 0.0, %v4662
      %v4664 = vpop.f32.mrf.mxu0
      %4665 = vmatprep.mubr.bf16.mxu0 0
      %4666 = vmatmul.mubr.bf16.gmra.mxu0 %v4426
      %v4667 = vpop.f32.mrf.mxu0
      %v4668 = vadd.f32 0.0, %v4667
      %v4669 = vpop.f32.mrf.mxu0
      %v4670 = vpop.f32.mrf.mxu0
      %v4671 = vadd.f32 0.0, %v4670
      %v4672 = vpop.f32.mrf.mxu0
      %4673 = vmatprep.mubr.bf16.mxu0 0
      %4674 = vmatmul.mubr.bf16.gmra.mxu0 %v4435
      %v4675 = vpop.f32.mrf.mxu0
      %v4676 = vadd.f32 0.0, %v4675
      %v4677 = vpop.f32.mrf.mxu0
      %v4678 = vpop.f32.mrf.mxu0
      %v4679 = vadd.f32 0.0, %v4678
      %v4680 = vpop.f32.mrf.mxu0
      %4681 = vmatprep.mubr.bf16.mxu0 0
      %4682 = vmatmul.mubr.bf16.gmra.mxu0 %v4444
      %v4683 = vpop.f32.mrf.mxu0
      %v4684 = vadd.f32 0.0, %v4683
      %v4685 = vpop.f32.mrf.mxu0
      %v4686 = vpop.f32.mrf.mxu0
      %v4687 = vadd.f32 0.0, %v4686
      %v4688 = vpop.f32.mrf.mxu0
      %4689 = vmatprep.mubr.bf16.mxu0 0
      %4690 = vmatmul.mubr.bf16.gmra.mxu0 %v4453
      %v4691 = vpop.f32.mrf.mxu0
      %v4692 = vadd.f32 0.0, %v4691
      %v4693 = vpop.f32.mrf.mxu0
      %v4694 = vpop.f32.mrf.mxu0
      %v4695 = vadd.f32 0.0, %v4694
      %v4696 = vpop.f32.mrf.mxu0
      %4697 = vmatprep.mubr.bf16.mxu0 0
      %4698 = vmatmul.mubr.bf16.gmra.mxu0 %v4462
      %v4699 = vpop.f32.mrf.mxu0
      %v4700 = vadd.f32 0.0, %v4699
      %v4701 = vpop.f32.mrf.mxu0
      %v4702 = vpop.f32.mrf.mxu0
      %v4703 = vadd.f32 0.0, %v4702
      %v4704 = vpop.f32.mrf.mxu0
      %4705 = vdwg.mxu0
      %v4706 = vld [vmem:[#allocation2] sm:$0xff]
      %v4707 = vld [vmem:[#allocation2 + $0x8] sm:$0xff]
      %v4708 = vld [vmem:[#allocation2 + $0x10] sm:$0xff]
      %v4709 = vld [vmem:[#allocation2 + $0x18] sm:$0xff]
      %v4710 = vld [vmem:[#allocation2 + $0x20] sm:$0xff]
      %v4711 = vld [vmem:[#allocation2 + $0x28] sm:$0xff]
      %v4712 = vld [vmem:[#allocation2 + $0x30] sm:$0xff]
      %v4713 = vld [vmem:[#allocation2 + $0x38] sm:$0xff]
      %v4714 = vld [vmem:[#allocation2 + $0x40] sm:$0xff]
      %v4715 = vld [vmem:[#allocation2 + $0x48] sm:$0xff]
      %v4716 = vld [vmem:[#allocation2 + $0x50] sm:$0xff]
      %v4717 = vld [vmem:[#allocation2 + $0x58] sm:$0xff]
      %v4718 = vld [vmem:[#allocation2 + $0x60] sm:$0xff]
      %v4719 = vld [vmem:[#allocation2 + $0x68] sm:$0xff]
      %v4720 = vld [vmem:[#allocation2 + $0x70] sm:$0xff]
      %v4721 = vld [vmem:[#allocation2 + $0x78] sm:$0xff]
      %v4722 = vld [vmem:[#allocation2 + $0x80] sm:$0xff]
      %v4723 = vld [vmem:[#allocation2 + $0x88] sm:$0xff]
      %v4724 = vld [vmem:[#allocation2 + $0x90] sm:$0xff]
      %v4725 = vld [vmem:[#allocation2 + $0x98] sm:$0xff]
      %v4726 = vld [vmem:[#allocation2 + $0xa0] sm:$0xff]
      %v4727 = vld [vmem:[#allocation2 + $0xa8] sm:$0xff]
      %v4728 = vld [vmem:[#allocation2 + $0xb0] sm:$0xff]
      %v4729 = vld [vmem:[#allocation2 + $0xb8] sm:$0xff]
      %v4730 = vld [vmem:[#allocation2 + $0xc0] sm:$0xff]
      %v4731 = vld [vmem:[#allocation2 + $0xc8] sm:$0xff]
      %v4732 = vld [vmem:[#allocation2 + $0xd0] sm:$0xff]
      %v4733 = vld [vmem:[#allocation2 + $0xd8] sm:$0xff]
      %v4734 = vld [vmem:[#allocation2 + $0xe0] sm:$0xff]
      %v4735 = vld [vmem:[#allocation2 + $0xe8] sm:$0xff]
      %v4736 = vld [vmem:[#allocation2 + $0xf0] sm:$0xff]
      %v4737 = vld [vmem:[#allocation2 + $0xf8] sm:$0xff]
      %v4738 = vld [vmem:[#allocation2 + $0x100] sm:$0xff]
      %v4739 = vld [vmem:[#allocation2 + $0x108] sm:$0xff]
      %v4740 = vld [vmem:[#allocation2 + $0x110] sm:$0xff]
      %v4741 = vld [vmem:[#allocation2 + $0x118] sm:$0xff]
      %v4742 = vadd.f32 %v4706, %v4564
      %v4743 = vadd.f32 %v4707, %v4567
      %v4744 = vadd.f32 %v4708, %v4572
      %v4745 = vadd.f32 %v4709, %v4575
      %v4746 = vadd.f32 %v4710, %v4580
      %v4747 = vadd.f32 %v4711, %v4583
      %v4748 = vadd.f32 %v4712, %v4588
      %v4749 = vadd.f32 %v4713, %v4591
      %v4750 = vadd.f32 %v4714, %v4596
      %v4751 = vadd.f32 %v4715, %v4599
      %v4752 = vadd.f32 %v4716, %v4604
      %v4753 = vadd.f32 %v4717, %v4607
      %v4754 = vadd.f32 %v4718, %v4612
      %v4755 = vadd.f32 %v4719, %v4615
      %v4756 = vadd.f32 %v4720, %v4620
      %v4757 = vadd.f32 %v4721, %v4623
      %v4758 = vadd.f32 %v4722, %v4628
      %v4759 = vadd.f32 %v4723, %v4631
      %v4760 = vadd.f32 %v4724, %v4636
      %v4761 = vadd.f32 %v4725, %v4639
      %v4762 = vadd.f32 %v4726, %v4644
      %v4763 = vadd.f32 %v4727, %v4647
      %v4764 = vadd.f32 %v4728, %v4652
      %v4765 = vadd.f32 %v4729, %v4655
      %v4766 = vadd.f32 %v4730, %v4660
      %v4767 = vadd.f32 %v4731, %v4663
      %v4768 = vadd.f32 %v4732, %v4668
      %v4769 = vadd.f32 %v4733, %v4671
      %v4770 = vadd.f32 %v4734, %v4676
      %v4771 = vadd.f32 %v4735, %v4679
      %v4772 = vadd.f32 %v4736, %v4684
      %v4773 = vadd.f32 %v4737, %v4687
      %v4774 = vadd.f32 %v4738, %v4692
      %v4775 = vadd.f32 %v4739, %v4695
      %v4776 = vadd.f32 %v4740, %v4700
      %v4777 = vadd.f32 %v4741, %v4703
      %4778 = vst [vmem:[#allocation2] sm:$0xff] %v4742
      %4779 = vst [vmem:[#allocation2 + $0x8] sm:$0xff] %v4743
      %4780 = vst [vmem:[#allocation2 + $0x10] sm:$0xff] %v4744
      %4781 = vst [vmem:[#allocation2 + $0x18] sm:$0xff] %v4745
      %4782 = vst [vmem:[#allocation2 + $0x20] sm:$0xff] %v4746
      %4783 = vst [vmem:[#allocation2 + $0x28] sm:$0xff] %v4747
      %4784 = vst [vmem:[#allocation2 + $0x30] sm:$0xff] %v4748
      %4785 = vst [vmem:[#allocation2 + $0x38] sm:$0xff] %v4749
      %4786 = vst [vmem:[#allocation2 + $0x40] sm:$0xff] %v4750
      %4787 = vst [vmem:[#allocation2 + $0x48] sm:$0xff] %v4751
      %4788 = vst [vmem:[#allocation2 + $0x50] sm:$0xff] %v4752
      %4789 = vst [vmem:[#allocation2 + $0x58] sm:$0xff] %v4753
      %4790 = vst [vmem:[#allocation2 + $0x60] sm:$0xff] %v4754
      %4791 = vst [vmem:[#allocation2 + $0x68] sm:$0xff] %v4755
      %4792 = vst [vmem:[#allocation2 + $0x70] sm:$0xff] %v4756
      %4793 = vst [vmem:[#allocation2 + $0x78] sm:$0xff] %v4757
      %4794 = vst [vmem:[#allocation2 + $0x80] sm:$0xff] %v4758
      %4795 = vst [vmem:[#allocation2 + $0x88] sm:$0xff] %v4759
      %4796 = vst [vmem:[#allocation2 + $0x90] sm:$0xff] %v4760
      %4797 = vst [vmem:[#allocation2 + $0x98] sm:$0xff] %v4761
      %4798 = vst [vmem:[#allocation2 + $0xa0] sm:$0xff] %v4762
      %4799 = vst [vmem:[#allocation2 + $0xa8] sm:$0xff] %v4763
      %4800 = vst [vmem:[#allocation2 + $0xb0] sm:$0xff] %v4764
      %4801 = vst [vmem:[#allocation2 + $0xb8] sm:$0xff] %v4765
      %4802 = vst [vmem:[#allocation2 + $0xc0] sm:$0xff] %v4766
      %4803 = vst [vmem:[#allocation2 + $0xc8] sm:$0xff] %v4767
      %4804 = vst [vmem:[#allocation2 + $0xd0] sm:$0xff] %v4768
      %4805 = vst [vmem:[#allocation2 + $0xd8] sm:$0xff] %v4769
      %4806 = vst [vmem:[#allocation2 + $0xe0] sm:$0xff] %v4770
      %4807 = vst [vmem:[#allocation2 + $0xe8] sm:$0xff] %v4771
      %4808 = vst [vmem:[#allocation2 + $0xf0] sm:$0xff] %v4772
      %4809 = vst [vmem:[#allocation2 + $0xf8] sm:$0xff] %v4773
      %4810 = vst [vmem:[#allocation2 + $0x100] sm:$0xff] %v4774
      %4811 = vst [vmem:[#allocation2 + $0x108] sm:$0xff] %v4775
      %4812 = vst [vmem:[#allocation2 + $0x110] sm:$0xff] %v4776
      %4813 = vst [vmem:[#allocation2 + $0x118] sm:$0xff] %v4777
      %v4814 = vld [vmem:[%s242 + $0x10] sm:$0x8]
      %v4815 = vld [vmem:[%s242 + $0x14] sm:$0xf]
      %v4816 = vld [vmem:[%s242 + $0x18] sm:$0xf]
      %v4817 = vld [vmem:[%s242 + $0x1c] sm:$0xf]
      %v4818 = vld [vmem:[%s242 + $0x20] sm:$0xf]
      %v4819 = vld [vmem:[%s242 + $0x24] sm:$0xf]
      %v4820 = vld [vmem:[%s242 + $0x28] sm:$0xf]
      %v4821 = vld [vmem:[%s242 + $0x2c] sm:$0xf]
      %v4822 = vld [vmem:[%s242 + $0x30] sm:$0xf]
      %v4823 = vld [vmem:[%s242 + $0x34] sm:$0xf]
      %v4824 = vld [vmem:[%s242 + $0x38] sm:$0xf]
      %v4825 = vld [vmem:[%s242 + $0x3c] sm:$0xf]
      %v4826 = vld [vmem:[%s242 + $0x40] sm:$0xf]
      %v4827 = vld [vmem:[%s242 + $0x44] sm:$0xf]
      %v4828 = vld [vmem:[%s242 + $0x48] sm:$0xf]
      %v4829 = vld [vmem:[%s242 + $0x4c] sm:$0xf]
      %v4830 = vld [vmem:[%s242 + $0x50] sm:$0xf]
      %v4831 = vld [vmem:[%s242 + $0x54] sm:$0xf]
      %v4832 = vld [vmem:[%s242 + $0x58] sm:$0xf]
      %v4833 = vld [vmem:[%s242 + $0x5c] sm:$0xf]
      %v4834 = vld [vmem:[%s242 + $0x60] sm:$0xf]
      %v4835 = vld [vmem:[%s242 + $0x64] sm:$0xf]
      %v4836 = vld [vmem:[%s242 + $0x68] sm:$0xf]
      %v4837 = vld [vmem:[%s242 + $0x6c] sm:$0xf]
      %v4838 = vld [vmem:[%s242 + $0x70] sm:$0xf]
      %v4839 = vld [vmem:[%s242 + $0x74] sm:$0xf]
      %v4840 = vld [vmem:[%s242 + $0x78] sm:$0xf]
      %v4841 = vld [vmem:[%s242 + $0x7c] sm:$0xf]
      %v4842 = vld [vmem:[%s242 + $0x80] sm:$0xf]
      %v4843 = vld [vmem:[%s242 + $0x84] sm:$0xf]
      %v4844 = vld [vmem:[%s242 + $0x88] sm:$0xf]
      %v4845 = vld [vmem:[%s242 + $0x8c] sm:$0xf]
      %v4846 = vld [vmem:[%s242 + $0x90] sm:$0xf]
      %v4847 = vld [vmem:[%s242 + $0x94] sm:$0xf]
      %v4848 = vld [vmem:[%s242 + $0x98] sm:$0xf]
      %v4849 = vld [vmem:[%s242 + $0x9c] sm:$0xf]
      %v4850 = vld [vmem:[%s242 + $0xa0] sm:$0x7]
      %s4851 = scalar_lea.vmem %s1, 512
      %v4852 = vld [vmem:[%s4851] sm:$0xf]
      %v4853 = vld [vmem:[%s4851 + $0x4] sm:$0xf]
      %v4854 = vld [vmem:[%s4851 + $0x8] sm:$0xf]
      %v4855 = vld [vmem:[%s4851 + $0xc] sm:$0xf]
      %v4856 = vld [vmem:[%s4851 + $0x10] sm:$0xf]
      %v4857 = vld [vmem:[%s4851 + $0x14] sm:$0xf]
      %v4858 = vld [vmem:[%s4851 + $0x18] sm:$0xf]
      %v4859 = vld [vmem:[%s4851 + $0x1c] sm:$0xf]
      %v4860 = vld [vmem:[%s4851 + $0x20] sm:$0xf]
      %v4861 = vld [vmem:[%s4851 + $0x24] sm:$0xf]
      %v4862 = vld [vmem:[%s4851 + $0x28] sm:$0xf]
      %v4863 = vld [vmem:[%s4851 + $0x2c] sm:$0xf]
      %v4864 = vld [vmem:[%s4851 + $0x30] sm:$0xf]
      %v4865 = vld [vmem:[%s4851 + $0x34] sm:$0xf]
      %v4866 = vld [vmem:[%s4851 + $0x38] sm:$0xf]
      %v4867 = vld [vmem:[%s4851 + $0x3c] sm:$0xf]
      %v4905 = vunpack.c.l.b16 %v4814
      %v4906 = vunpack.c.l.b16 %v4815
      %v4907 = vunpack.c.l.b16 %v4816
      %v4908 = vunpack.c.l.b16 %v4817
      %v4909 = vunpack.c.l.b16 %v4818
      %v4910 = vunpack.c.l.b16 %v4819
      %v4911 = vunpack.c.l.b16 %v4820
      %v4912 = vunpack.c.l.b16 %v4821
      %v4913 = vunpack.c.l.b16 %v4822
      %v4914 = vunpack.c.l.b16 %v4823
      %v4915 = vunpack.c.l.b16 %v4824
      %v4916 = vunpack.c.l.b16 %v4825
      %v4917 = vunpack.c.l.b16 %v4826
      %v4918 = vunpack.c.l.b16 %v4827
      %v4919 = vunpack.c.l.b16 %v4828
      %v4920 = vunpack.c.l.b16 %v4829
      %v4921 = vunpack.c.l.b16 %v4830
      %v4922 = vunpack.c.l.b16 %v4831
      %v4923 = vunpack.c.l.b16 %v4832
      %v4924 = vunpack.c.l.b16 %v4833
      %v4925 = vunpack.c.l.b16 %v4834
      %v4926 = vunpack.c.l.b16 %v4835
      %v4927 = vunpack.c.l.b16 %v4836
      %v4928 = vunpack.c.l.b16 %v4837
      %v4929 = vunpack.c.l.b16 %v4838
      %v4930 = vunpack.c.l.b16 %v4839
      %v4931 = vunpack.c.l.b16 %v4840
      %v4932 = vunpack.c.l.b16 %v4841
      %v4933 = vunpack.c.l.b16 %v4842
      %v4934 = vunpack.c.l.b16 %v4843
      %v4935 = vunpack.c.l.b16 %v4844
      %v4936 = vunpack.c.l.b16 %v4845
      %v4937 = vunpack.c.l.b16 %v4846
      %v4938 = vunpack.c.l.b16 %v4847
      %v4939 = vunpack.c.l.b16 %v4848
      %v4940 = vunpack.c.l.b16 %v4849
      %v4941 = vunpack.c.l.b16 %v4850
      %v4942 = vpack.c.b16 %v4906, %v4905
      %v4943 = vpack.c.b16 %v4908, %v4907
      %v4944 = vpack.c.b16 %v4910, %v4909
      %v4945 = vpack.c.b16 %v4912, %v4911
      %v4946 = vpack.c.b16 %v4914, %v4913
      %v4947 = vpack.c.b16 %v4916, %v4915
      %v4948 = vpack.c.b16 %v4918, %v4917
      %v4949 = vpack.c.b16 %v4920, %v4919
      %v4950 = vpack.c.b16 %v4922, %v4921
      %v4951 = vpack.c.b16 %v4924, %v4923
      %v4952 = vpack.c.b16 %v4926, %v4925
      %v4953 = vpack.c.b16 %v4928, %v4927
      %v4954 = vpack.c.b16 %v4930, %v4929
      %v4955 = vpack.c.b16 %v4932, %v4931
      %v4956 = vpack.c.b16 %v4934, %v4933
      %v4957 = vpack.c.b16 %v4936, %v4935
      %v4958 = vpack.c.b16 %v4938, %v4937
      %v4959 = vpack.c.b16 %v4940, %v4939
      %v4960 = vpack.c.b16 %v4941, %v4941
      %vm4961 = vcmask 1044480
      %v4962 = vrot.slane %v4942, 3
      %v4963 = vrot.slane %v4943, 3
      %v4964 = vsel %vm4961, %v4962, %v4963
      %v4965 = vrot.slane %v4944, 3
      %v4966 = vsel %vm4961, %v4963, %v4965
      %v4967 = vrot.slane %v4945, 3
      %v4968 = vsel %vm4961, %v4965, %v4967
      %v4969 = vrot.slane %v4946, 3
      %v4970 = vsel %vm4961, %v4967, %v4969
      %v4971 = vrot.slane %v4947, 3
      %v4972 = vsel %vm4961, %v4969, %v4971
      %v4973 = vrot.slane %v4948, 3
      %v4974 = vsel %vm4961, %v4971, %v4973
      %v4975 = vrot.slane %v4949, 3
      %v4976 = vsel %vm4961, %v4973, %v4975
      %v4977 = vrot.slane %v4950, 3
      %v4978 = vsel %vm4961, %v4975, %v4977
      %v4979 = vrot.slane %v4951, 3
      %v4980 = vsel %vm4961, %v4977, %v4979
      %v4981 = vrot.slane %v4952, 3
      %v4982 = vsel %vm4961, %v4979, %v4981
      %v4983 = vrot.slane %v4953, 3
      %v4984 = vsel %vm4961, %v4981, %v4983
      %v4985 = vrot.slane %v4954, 3
      %v4986 = vsel %vm4961, %v4983, %v4985
      %v4987 = vrot.slane %v4955, 3
      %v4988 = vsel %vm4961, %v4985, %v4987
      %v4989 = vrot.slane %v4956, 3
      %v4990 = vsel %vm4961, %v4987, %v4989
      %v4991 = vrot.slane %v4957, 3
      %v4992 = vsel %vm4961, %v4989, %v4991
      %v4993 = vrot.slane %v4958, 3
      %v4994 = vsel %vm4961, %v4991, %v4993
      %v4995 = vrot.slane %v4959, 3
      %v4996 = vsel %vm4961, %v4993, %v4995
      %v4997 = vrot.slane %v4960, 3
      %v4998 = vsel %vm4961, %v4995, %v4997
      %v5033 = vunpack.c.l.b16 %v4852
      %v5034 = vunpack.c.l.b16 %v4853
      %v5035 = vunpack.c.l.b16 %v4854
      %v5036 = vunpack.c.l.b16 %v4855
      %v5037 = vunpack.c.l.b16 %v4856
      %v5038 = vunpack.c.l.b16 %v4857
      %v5039 = vunpack.c.l.b16 %v4858
      %v5040 = vunpack.c.l.b16 %v4859
      %v5041 = vunpack.c.l.b16 %v4860
      %v5042 = vunpack.c.l.b16 %v4861
      %v5043 = vunpack.c.l.b16 %v4862
      %v5044 = vunpack.c.l.b16 %v4863
      %v5045 = vunpack.c.l.b16 %v4864
      %v5046 = vunpack.c.l.b16 %v4865
      %v5047 = vunpack.c.l.b16 %v4866
      %v5048 = vunpack.c.l.b16 %v4867
      %v5049 = vpack.c.b16 %v5034, %v5033
      %v5050 = vpack.c.b16 %v5036, %v5035
      %v5051 = vpack.c.b16 %v5038, %v5037
      %v5052 = vpack.c.b16 %v5040, %v5039
      %v5053 = vpack.c.b16 %v5042, %v5041
      %v5054 = vpack.c.b16 %v5044, %v5043
      %v5055 = vpack.c.b16 %v5046, %v5045
      %v5056 = vpack.c.b16 %v5048, %v5047
      %5065 = vmatprep.subr.bf16.mxu0 0
      %5066 = vmatpush1.bf16.msra.mxu0 %v5056
      %5067 = vmatprep.subr.bf16.mxu0 0
      %5068 = vmatpush1.bf16.msra.mxu0 %v5055
      %5069 = vmatprep.subr.bf16.mxu0 0
      %5070 = vmatpush1.bf16.msra.mxu0 %v5054
      %5071 = vmatprep.subr.bf16.mxu0 0
      %5072 = vmatpush1.bf16.msra.mxu0 %v5053
      %5073 = vmatprep.subr.bf16.mxu0 0
      %5074 = vmatpush1.bf16.msra.mxu0 %v5052
      %5075 = vmatprep.subr.bf16.mxu0 0
      %5076 = vmatpush1.bf16.msra.mxu0 %v5051
      %5077 = vmatprep.subr.bf16.mxu0 0
      %5078 = vmatpush1.bf16.msra.mxu0 %v5050
      %5079 = vmatprep.subr.bf16.mxu0 0
      %5080 = vmatpush1.bf16.msra.mxu0 %v5049
      %5081 = vmatprep.subr.bf16.mxu0 0
      %5082 = vmatpush2.bf16.msra.mxu0 0
      %5083 = vmatprep.subr.bf16.mxu0 0
      %5084 = vmatpush2.bf16.msra.mxu0 0
      %5085 = vmatprep.subr.bf16.mxu0 0
      %5086 = vmatpush2.bf16.msra.mxu0 0
      %5087 = vmatprep.subr.bf16.mxu0 0
      %5088 = vmatpush2.bf16.msra.mxu0 0
      %5089 = vmatprep.subr.bf16.mxu0 0
      %5090 = vmatpush2.bf16.msra.mxu0 0
      %5091 = vmatprep.subr.bf16.mxu0 0
      %5092 = vmatpush2.bf16.msra.mxu0 0
      %5093 = vmatprep.subr.bf16.mxu0 0
      %5094 = vmatpush2.bf16.msra.mxu0 0
      %5095 = vmatprep.subr.bf16.mxu0 0
      %5096 = vmatpush2.bf16.msra.mxu0 0
      %5097 = vmatprep.mubr.bf16.mxu0 0
      %5098 = vmatmul.mubr.bf16.gmra.mxu0 %v4964
      %v5099 = vpop.f32.mrf.mxu0
      %v5100 = vadd.f32 0.0, %v5099
      %v5101 = vpop.f32.mrf.mxu0
      %v5102 = vpop.f32.mrf.mxu0
      %v5103 = vadd.f32 0.0, %v5102
      %v5104 = vpop.f32.mrf.mxu0
      %5105 = vmatprep.mubr.bf16.mxu0 0
      %5106 = vmatmul.mubr.bf16.gmra.mxu0 %v4966
      %v5107 = vpop.f32.mrf.mxu0
      %v5108 = vadd.f32 0.0, %v5107
      %v5109 = vpop.f32.mrf.mxu0
      %v5110 = vpop.f32.mrf.mxu0
      %v5111 = vadd.f32 0.0, %v5110
      %v5112 = vpop.f32.mrf.mxu0
      %5113 = vmatprep.mubr.bf16.mxu0 0
      %5114 = vmatmul.mubr.bf16.gmra.mxu0 %v4968
      %v5115 = vpop.f32.mrf.mxu0
      %v5116 = vadd.f32 0.0, %v5115
      %v5117 = vpop.f32.mrf.mxu0
      %v5118 = vpop.f32.mrf.mxu0
      %v5119 = vadd.f32 0.0, %v5118
      %v5120 = vpop.f32.mrf.mxu0
      %5121 = vmatprep.mubr.bf16.mxu0 0
      %5122 = vmatmul.mubr.bf16.gmra.mxu0 %v4970
      %v5123 = vpop.f32.mrf.mxu0
      %v5124 = vadd.f32 0.0, %v5123
      %v5125 = vpop.f32.mrf.mxu0
      %v5126 = vpop.f32.mrf.mxu0
      %v5127 = vadd.f32 0.0, %v5126
      %v5128 = vpop.f32.mrf.mxu0
      %5129 = vmatprep.mubr.bf16.mxu0 0
      %5130 = vmatmul.mubr.bf16.gmra.mxu0 %v4972
      %v5131 = vpop.f32.mrf.mxu0
      %v5132 = vadd.f32 0.0, %v5131
      %v5133 = vpop.f32.mrf.mxu0
      %v5134 = vpop.f32.mrf.mxu0
      %v5135 = vadd.f32 0.0, %v5134
      %v5136 = vpop.f32.mrf.mxu0
      %5137 = vmatprep.mubr.bf16.mxu0 0
      %5138 = vmatmul.mubr.bf16.gmra.mxu0 %v4974
      %v5139 = vpop.f32.mrf.mxu0
      %v5140 = vadd.f32 0.0, %v5139
      %v5141 = vpop.f32.mrf.mxu0
      %v5142 = vpop.f32.mrf.mxu0
      %v5143 = vadd.f32 0.0, %v5142
      %v5144 = vpop.f32.mrf.mxu0
      %5145 = vmatprep.mubr.bf16.mxu0 0
      %5146 = vmatmul.mubr.bf16.gmra.mxu0 %v4976
      %v5147 = vpop.f32.mrf.mxu0
      %v5148 = vadd.f32 0.0, %v5147
      %v5149 = vpop.f32.mrf.mxu0
      %v5150 = vpop.f32.mrf.mxu0
      %v5151 = vadd.f32 0.0, %v5150
      %v5152 = vpop.f32.mrf.mxu0
      %5153 = vmatprep.mubr.bf16.mxu0 0
      %5154 = vmatmul.mubr.bf16.gmra.mxu0 %v4978
      %v5155 = vpop.f32.mrf.mxu0
      %v5156 = vadd.f32 0.0, %v5155
      %v5157 = vpop.f32.mrf.mxu0
      %v5158 = vpop.f32.mrf.mxu0
      %v5159 = vadd.f32 0.0, %v5158
      %v5160 = vpop.f32.mrf.mxu0
      %5161 = vmatprep.mubr.bf16.mxu0 0
      %5162 = vmatmul.mubr.bf16.gmra.mxu0 %v4980
      %v5163 = vpop.f32.mrf.mxu0
      %v5164 = vadd.f32 0.0, %v5163
      %v5165 = vpop.f32.mrf.mxu0
      %v5166 = vpop.f32.mrf.mxu0
      %v5167 = vadd.f32 0.0, %v5166
      %v5168 = vpop.f32.mrf.mxu0
      %5169 = vmatprep.mubr.bf16.mxu0 0
      %5170 = vmatmul.mubr.bf16.gmra.mxu0 %v4982
      %v5171 = vpop.f32.mrf.mxu0
      %v5172 = vadd.f32 0.0, %v5171
      %v5173 = vpop.f32.mrf.mxu0
      %v5174 = vpop.f32.mrf.mxu0
      %v5175 = vadd.f32 0.0, %v5174
      %v5176 = vpop.f32.mrf.mxu0
      %5177 = vmatprep.mubr.bf16.mxu0 0
      %5178 = vmatmul.mubr.bf16.gmra.mxu0 %v4984
      %v5179 = vpop.f32.mrf.mxu0
      %v5180 = vadd.f32 0.0, %v5179
      %v5181 = vpop.f32.mrf.mxu0
      %v5182 = vpop.f32.mrf.mxu0
      %v5183 = vadd.f32 0.0, %v5182
      %v5184 = vpop.f32.mrf.mxu0
      %5185 = vmatprep.mubr.bf16.mxu0 0
      %5186 = vmatmul.mubr.bf16.gmra.mxu0 %v4986
      %v5187 = vpop.f32.mrf.mxu0
      %v5188 = vadd.f32 0.0, %v5187
      %v5189 = vpop.f32.mrf.mxu0
      %v5190 = vpop.f32.mrf.mxu0
      %v5191 = vadd.f32 0.0, %v5190
      %v5192 = vpop.f32.mrf.mxu0
      %5193 = vmatprep.mubr.bf16.mxu0 0
      %5194 = vmatmul.mubr.bf16.gmra.mxu0 %v4988
      %v5195 = vpop.f32.mrf.mxu0
      %v5196 = vadd.f32 0.0, %v5195
      %v5197 = vpop.f32.mrf.mxu0
      %v5198 = vpop.f32.mrf.mxu0
      %v5199 = vadd.f32 0.0, %v5198
      %v5200 = vpop.f32.mrf.mxu0
      %5201 = vmatprep.mubr.bf16.mxu0 0
      %5202 = vmatmul.mubr.bf16.gmra.mxu0 %v4990
      %v5203 = vpop.f32.mrf.mxu0
      %v5204 = vadd.f32 0.0, %v5203
      %v5205 = vpop.f32.mrf.mxu0
      %v5206 = vpop.f32.mrf.mxu0
      %v5207 = vadd.f32 0.0, %v5206
      %v5208 = vpop.f32.mrf.mxu0
      %5209 = vmatprep.mubr.bf16.mxu0 0
      %5210 = vmatmul.mubr.bf16.gmra.mxu0 %v4992
      %v5211 = vpop.f32.mrf.mxu0
      %v5212 = vadd.f32 0.0, %v5211
      %v5213 = vpop.f32.mrf.mxu0
      %v5214 = vpop.f32.mrf.mxu0
      %v5215 = vadd.f32 0.0, %v5214
      %v5216 = vpop.f32.mrf.mxu0
      %5217 = vmatprep.mubr.bf16.mxu0 0
      %5218 = vmatmul.mubr.bf16.gmra.mxu0 %v4994
      %v5219 = vpop.f32.mrf.mxu0
      %v5220 = vadd.f32 0.0, %v5219
      %v5221 = vpop.f32.mrf.mxu0
      %v5222 = vpop.f32.mrf.mxu0
      %v5223 = vadd.f32 0.0, %v5222
      %v5224 = vpop.f32.mrf.mxu0
      %5225 = vmatprep.mubr.bf16.mxu0 0
      %5226 = vmatmul.mubr.bf16.gmra.mxu0 %v4996
      %v5227 = vpop.f32.mrf.mxu0
      %v5228 = vadd.f32 0.0, %v5227
      %v5229 = vpop.f32.mrf.mxu0
      %v5230 = vpop.f32.mrf.mxu0
      %v5231 = vadd.f32 0.0, %v5230
      %v5232 = vpop.f32.mrf.mxu0
      %5233 = vmatprep.mubr.bf16.mxu0 0
      %5234 = vmatmul.mubr.bf16.gmra.mxu0 %v4998
      %v5235 = vpop.f32.mrf.mxu0
      %v5236 = vadd.f32 0.0, %v5235
      %v5237 = vpop.f32.mrf.mxu0
      %v5238 = vpop.f32.mrf.mxu0
      %v5239 = vadd.f32 0.0, %v5238
      %v5240 = vpop.f32.mrf.mxu0
      %5241 = vdwg.mxu0
      %v5242 = vld [vmem:[#allocation2] sm:$0xff]
      %v5243 = vld [vmem:[#allocation2 + $0x8] sm:$0xff]
      %v5244 = vld [vmem:[#allocation2 + $0x10] sm:$0xff]
      %v5245 = vld [vmem:[#allocation2 + $0x18] sm:$0xff]
      %v5246 = vld [vmem:[#allocation2 + $0x20] sm:$0xff]
      %v5247 = vld [vmem:[#allocation2 + $0x28] sm:$0xff]
      %v5248 = vld [vmem:[#allocation2 + $0x30] sm:$0xff]
      %v5249 = vld [vmem:[#allocation2 + $0x38] sm:$0xff]
      %v5250 = vld [vmem:[#allocation2 + $0x40] sm:$0xff]
      %v5251 = vld [vmem:[#allocation2 + $0x48] sm:$0xff]
      %v5252 = vld [vmem:[#allocation2 + $0x50] sm:$0xff]
      %v5253 = vld [vmem:[#allocation2 + $0x58] sm:$0xff]
      %v5254 = vld [vmem:[#allocation2 + $0x60] sm:$0xff]
      %v5255 = vld [vmem:[#allocation2 + $0x68] sm:$0xff]
      %v5256 = vld [vmem:[#allocation2 + $0x70] sm:$0xff]
      %v5257 = vld [vmem:[#allocation2 + $0x78] sm:$0xff]
      %v5258 = vld [vmem:[#allocation2 + $0x80] sm:$0xff]
      %v5259 = vld [vmem:[#allocation2 + $0x88] sm:$0xff]
      %v5260 = vld [vmem:[#allocation2 + $0x90] sm:$0xff]
      %v5261 = vld [vmem:[#allocation2 + $0x98] sm:$0xff]
      %v5262 = vld [vmem:[#allocation2 + $0xa0] sm:$0xff]
      %v5263 = vld [vmem:[#allocation2 + $0xa8] sm:$0xff]
      %v5264 = vld [vmem:[#allocation2 + $0xb0] sm:$0xff]
      %v5265 = vld [vmem:[#allocation2 + $0xb8] sm:$0xff]
      %v5266 = vld [vmem:[#allocation2 + $0xc0] sm:$0xff]
      %v5267 = vld [vmem:[#allocation2 + $0xc8] sm:$0xff]
      %v5268 = vld [vmem:[#allocation2 + $0xd0] sm:$0xff]
      %v5269 = vld [vmem:[#allocation2 + $0xd8] sm:$0xff]
      %v5270 = vld [vmem:[#allocation2 + $0xe0] sm:$0xff]
      %v5271 = vld [vmem:[#allocation2 + $0xe8] sm:$0xff]
      %v5272 = vld [vmem:[#allocation2 + $0xf0] sm:$0xff]
      %v5273 = vld [vmem:[#allocation2 + $0xf8] sm:$0xff]
      %v5274 = vld [vmem:[#allocation2 + $0x100] sm:$0xff]
      %v5275 = vld [vmem:[#allocation2 + $0x108] sm:$0xff]
      %v5276 = vld [vmem:[#allocation2 + $0x110] sm:$0xff]
      %v5277 = vld [vmem:[#allocation2 + $0x118] sm:$0xff]
      %v5278 = vadd.f32 %v5242, %v5100
      %v5279 = vadd.f32 %v5243, %v5103
      %v5280 = vadd.f32 %v5244, %v5108
      %v5281 = vadd.f32 %v5245, %v5111
      %v5282 = vadd.f32 %v5246, %v5116
      %v5283 = vadd.f32 %v5247, %v5119
      %v5284 = vadd.f32 %v5248, %v5124
      %v5285 = vadd.f32 %v5249, %v5127
      %v5286 = vadd.f32 %v5250, %v5132
      %v5287 = vadd.f32 %v5251, %v5135
      %v5288 = vadd.f32 %v5252, %v5140
      %v5289 = vadd.f32 %v5253, %v5143
      %v5290 = vadd.f32 %v5254, %v5148
      %v5291 = vadd.f32 %v5255, %v5151
      %v5292 = vadd.f32 %v5256, %v5156
      %v5293 = vadd.f32 %v5257, %v5159
      %v5294 = vadd.f32 %v5258, %v5164
      %v5295 = vadd.f32 %v5259, %v5167
      %v5296 = vadd.f32 %v5260, %v5172
      %v5297 = vadd.f32 %v5261, %v5175
      %v5298 = vadd.f32 %v5262, %v5180
      %v5299 = vadd.f32 %v5263, %v5183
      %v5300 = vadd.f32 %v5264, %v5188
      %v5301 = vadd.f32 %v5265, %v5191
      %v5302 = vadd.f32 %v5266, %v5196
      %v5303 = vadd.f32 %v5267, %v5199
      %v5304 = vadd.f32 %v5268, %v5204
      %v5305 = vadd.f32 %v5269, %v5207
      %v5306 = vadd.f32 %v5270, %v5212
      %v5307 = vadd.f32 %v5271, %v5215
      %v5308 = vadd.f32 %v5272, %v5220
      %v5309 = vadd.f32 %v5273, %v5223
      %v5310 = vadd.f32 %v5274, %v5228
      %v5311 = vadd.f32 %v5275, %v5231
      %v5312 = vadd.f32 %v5276, %v5236
      %v5313 = vadd.f32 %v5277, %v5239
      %5314 = vst [vmem:[#allocation2] sm:$0xff] %v5278
      %5315 = vst [vmem:[#allocation2 + $0x8] sm:$0xff] %v5279
      %5316 = vst [vmem:[#allocation2 + $0x10] sm:$0xff] %v5280
      %5317 = vst [vmem:[#allocation2 + $0x18] sm:$0xff] %v5281
      %5318 = vst [vmem:[#allocation2 + $0x20] sm:$0xff] %v5282
      %5319 = vst [vmem:[#allocation2 + $0x28] sm:$0xff] %v5283
      %5320 = vst [vmem:[#allocation2 + $0x30] sm:$0xff] %v5284
      %5321 = vst [vmem:[#allocation2 + $0x38] sm:$0xff] %v5285
      %5322 = vst [vmem:[#allocation2 + $0x40] sm:$0xff] %v5286
      %5323 = vst [vmem:[#allocation2 + $0x48] sm:$0xff] %v5287
      %5324 = vst [vmem:[#allocation2 + $0x50] sm:$0xff] %v5288
      %5325 = vst [vmem:[#allocation2 + $0x58] sm:$0xff] %v5289
      %5326 = vst [vmem:[#allocation2 + $0x60] sm:$0xff] %v5290
      %5327 = vst [vmem:[#allocation2 + $0x68] sm:$0xff] %v5291
      %5328 = vst [vmem:[#allocation2 + $0x70] sm:$0xff] %v5292
      %5329 = vst [vmem:[#allocation2 + $0x78] sm:$0xff] %v5293
      %5330 = vst [vmem:[#allocation2 + $0x80] sm:$0xff] %v5294
      %5331 = vst [vmem:[#allocation2 + $0x88] sm:$0xff] %v5295
      %5332 = vst [vmem:[#allocation2 + $0x90] sm:$0xff] %v5296
      %5333 = vst [vmem:[#allocation2 + $0x98] sm:$0xff] %v5297
      %5334 = vst [vmem:[#allocation2 + $0xa0] sm:$0xff] %v5298
      %5335 = vst [vmem:[#allocation2 + $0xa8] sm:$0xff] %v5299
      %5336 = vst [vmem:[#allocation2 + $0xb0] sm:$0xff] %v5300
      %5337 = vst [vmem:[#allocation2 + $0xb8] sm:$0xff] %v5301
      %5338 = vst [vmem:[#allocation2 + $0xc0] sm:$0xff] %v5302
      %5339 = vst [vmem:[#allocation2 + $0xc8] sm:$0xff] %v5303
      %5340 = vst [vmem:[#allocation2 + $0xd0] sm:$0xff] %v5304
      %5341 = vst [vmem:[#allocation2 + $0xd8] sm:$0xff] %v5305
      %5342 = vst [vmem:[#allocation2 + $0xe0] sm:$0xff] %v5306
      %5343 = vst [vmem:[#allocation2 + $0xe8] sm:$0xff] %v5307
      %5344 = vst [vmem:[#allocation2 + $0xf0] sm:$0xff] %v5308
      %5345 = vst [vmem:[#allocation2 + $0xf8] sm:$0xff] %v5309
      %5346 = vst [vmem:[#allocation2 + $0x100] sm:$0xff] %v5310
      %5347 = vst [vmem:[#allocation2 + $0x108] sm:$0xff] %v5311
      %5348 = vst [vmem:[#allocation2 + $0x110] sm:$0xff] %v5312
      %5349 = vst [vmem:[#allocation2 + $0x118] sm:$0xff] %v5313
      %v5350 = vld [vmem:[#allocation2] sm:$0xff]
      %v5351 = vld [vmem:[#allocation2 + $0x8] sm:$0xff]
      %5352 = vst [vmem:[#allocation3] sm:$0xff] %v5350
      %5353 = vst [vmem:[#allocation3 + $0x8] sm:$0xff] %v5351
      %v5354 = vld [vmem:[#allocation2 + $0x12] sm:$0xff]
      %v5355 = vld [vmem:[#allocation2 + $0x1a] sm:$0xff]
      %5356 = vst [vmem:[#allocation3 + $0x10] sm:$0xff] %v5354
      %5357 = vst [vmem:[#allocation3 + $0x18] sm:$0xff] %v5355
      %v5358 = vld [vmem:[#allocation2 + $0x24] sm:$0xff]
      %v5359 = vld [vmem:[#allocation2 + $0x2c] sm:$0xff]
      %5360 = vst [vmem:[#allocation3 + $0x20] sm:$0xff] %v5358
      %5361 = vst [vmem:[#allocation3 + $0x28] sm:$0xff] %v5359
      %v5362 = vld [vmem:[#allocation2 + $0x36] sm:$0xff]
      %v5363 = vld [vmem:[#allocation2 + $0x3e] sm:$0xff]
      %5364 = vst [vmem:[#allocation3 + $0x30] sm:$0xff] %v5362
      %5365 = vst [vmem:[#allocation3 + $0x38] sm:$0xff] %v5363
      %v5366 = vld [vmem:[#allocation2 + $0x48] sm:$0xff]
      %v5367 = vld [vmem:[#allocation2 + $0x50] sm:$0xff]
      %5368 = vst [vmem:[#allocation3 + $0x40] sm:$0xff] %v5366
      %5369 = vst [vmem:[#allocation3 + $0x48] sm:$0xff] %v5367
      %v5370 = vld [vmem:[#allocation2 + $0x5a] sm:$0xff]
      %v5371 = vld [vmem:[#allocation2 + $0x62] sm:$0xff]
      %5372 = vst [vmem:[#allocation3 + $0x50] sm:$0xff] %v5370
      %5373 = vst [vmem:[#allocation3 + $0x58] sm:$0xff] %v5371
      %v5374 = vld [vmem:[#allocation2 + $0x6c] sm:$0xff]
      %v5375 = vld [vmem:[#allocation2 + $0x74] sm:$0xff]
      %5376 = vst [vmem:[#allocation3 + $0x60] sm:$0xff] %v5374
      %5377 = vst [vmem:[#allocation3 + $0x68] sm:$0xff] %v5375
      %v5378 = vld [vmem:[#allocation2 + $0x7e] sm:$0xff]
      %v5379 = vld [vmem:[#allocation2 + $0x86] sm:$0xff]
      %5380 = vst [vmem:[#allocation3 + $0x70] sm:$0xff] %v5378
      %5381 = vst [vmem:[#allocation3 + $0x78] sm:$0xff] %v5379
      %v5382 = vld [vmem:[#allocation2 + $0x90] sm:$0xff]
      %v5383 = vld [vmem:[#allocation2 + $0x98] sm:$0xff]
      %5384 = vst [vmem:[#allocation3 + $0x80] sm:$0xff] %v5382
      %5385 = vst [vmem:[#allocation3 + $0x88] sm:$0xff] %v5383
      %v5386 = vld [vmem:[#allocation2 + $0xa2] sm:$0xff]
      %v5387 = vld [vmem:[#allocation2 + $0xaa] sm:$0xff]
      %5388 = vst [vmem:[#allocation3 + $0x90] sm:$0xff] %v5386
      %5389 = vst [vmem:[#allocation3 + $0x98] sm:$0xff] %v5387
      %v5390 = vld [vmem:[#allocation2 + $0xb4] sm:$0xff]
      %v5391 = vld [vmem:[#allocation2 + $0xbc] sm:$0xff]
      %5392 = vst [vmem:[#allocation3 + $0xa0] sm:$0xff] %v5390
      %5393 = vst [vmem:[#allocation3 + $0xa8] sm:$0xff] %v5391
      %v5394 = vld [vmem:[#allocation2 + $0xc6] sm:$0xff]
      %v5395 = vld [vmem:[#allocation2 + $0xce] sm:$0xff]
      %5396 = vst [vmem:[#allocation3 + $0xb0] sm:$0xff] %v5394
      %5397 = vst [vmem:[#allocation3 + $0xb8] sm:$0xff] %v5395
      %v5398 = vld [vmem:[#allocation2 + $0xd8] sm:$0xff]
      %v5399 = vld [vmem:[#allocation2 + $0xe0] sm:$0xff]
      %5400 = vst [vmem:[#allocation3 + $0xc0] sm:$0xff] %v5398
      %5401 = vst [vmem:[#allocation3 + $0xc8] sm:$0xff] %v5399
      %v5402 = vld [vmem:[#allocation2 + $0xea] sm:$0xff]
      %v5403 = vld [vmem:[#allocation2 + $0xf2] sm:$0xff]
      %5404 = vst [vmem:[#allocation3 + $0xd0] sm:$0xff] %v5402
      %5405 = vst [vmem:[#allocation3 + $0xd8] sm:$0xff] %v5403
      %v5406 = vld [vmem:[#allocation2 + $0xfc] sm:$0xff]
      %v5407 = vld [vmem:[#allocation2 + $0x104] sm:$0xff]
      %5408 = vst [vmem:[#allocation3 + $0xe0] sm:$0xff] %v5406
      %5409 = vst [vmem:[#allocation3 + $0xe8] sm:$0xff] %v5407
      %v5410 = vld [vmem:[#allocation2 + $0x10e] sm:$0xff]
      %v5411 = vld [vmem:[#allocation2 + $0x116] sm:$0xff]
      %5412 = vst [vmem:[#allocation3 + $0xf0] sm:$0xff] %v5410
      %5413 = vst [vmem:[#allocation3 + $0xf8] sm:$0xff] %v5411
      %v5414 = vld [vmem:[#allocation3] sm:$0xff]
      %v5415 = vld [vmem:[#allocation3 + $0x8] sm:$0xff]
      %v5416 = vld [vmem:[#allocation3 + $0x10] sm:$0xff]
      %v5417 = vld [vmem:[#allocation3 + $0x18] sm:$0xff]
      %v5418 = vld [vmem:[#allocation3 + $0x20] sm:$0xff]
      %v5419 = vld [vmem:[#allocation3 + $0x28] sm:$0xff]
      %v5420 = vld [vmem:[#allocation3 + $0x30] sm:$0xff]
      %v5421 = vld [vmem:[#allocation3 + $0x38] sm:$0xff]
      %v5422 = vld [vmem:[#allocation3 + $0x40] sm:$0xff]
      %v5423 = vld [vmem:[#allocation3 + $0x48] sm:$0xff]
      %v5424 = vld [vmem:[#allocation3 + $0x50] sm:$0xff]
      %v5425 = vld [vmem:[#allocation3 + $0x58] sm:$0xff]
      %v5426 = vld [vmem:[#allocation3 + $0x60] sm:$0xff]
      %v5427 = vld [vmem:[#allocation3 + $0x68] sm:$0xff]
      %v5428 = vld [vmem:[#allocation3 + $0x70] sm:$0xff]
      %v5429 = vld [vmem:[#allocation3 + $0x78] sm:$0xff]
      %v5430 = vld [vmem:[#allocation3 + $0x80] sm:$0xff]
      %v5431 = vld [vmem:[#allocation3 + $0x88] sm:$0xff]
      %v5432 = vld [vmem:[#allocation3 + $0x90] sm:$0xff]
      %v5433 = vld [vmem:[#allocation3 + $0x98] sm:$0xff]
      %v5434 = vld [vmem:[#allocation3 + $0xa0] sm:$0xff]
      %v5435 = vld [vmem:[#allocation3 + $0xa8] sm:$0xff]
      %v5436 = vld [vmem:[#allocation3 + $0xb0] sm:$0xff]
      %v5437 = vld [vmem:[#allocation3 + $0xb8] sm:$0xff]
      %v5438 = vld [vmem:[#allocation3 + $0xc0] sm:$0xff]
      %v5439 = vld [vmem:[#allocation3 + $0xc8] sm:$0xff]
      %v5440 = vld [vmem:[#allocation3 + $0xd0] sm:$0xff]
      %v5441 = vld [vmem:[#allocation3 + $0xd8] sm:$0xff]
      %v5442 = vld [vmem:[#allocation3 + $0xe0] sm:$0xff]
      %v5443 = vld [vmem:[#allocation3 + $0xe8] sm:$0xff]
      %v5444 = vld [vmem:[#allocation3 + $0xf0] sm:$0xff]
      %v5445 = vld [vmem:[#allocation3 + $0xf8] sm:$0xff]
      %5446 = vxpose.xlu0.b32.start [1/16] %v5414, 128
      %5447 = vxpose.xlu0.b32.cont [2/16] %v5415, 128
      %5448 = vxpose.xlu0.b32.cont [3/16] %v5416, 128
      %5449 = vxpose.xlu0.b32.cont [4/16] %v5417, 128
      %5450 = vxpose.xlu0.b32.cont [5/16] %v5418, 128
      %5451 = vxpose.xlu0.b32.cont [6/16] %v5419, 128
      %5452 = vxpose.xlu0.b32.cont [7/16] %v5420, 128
      %5453 = vxpose.xlu0.b32.cont [8/16] %v5421, 128
      %5454 = vxpose.xlu0.b32.cont [9/16] %v5422, 128
      %5455 = vxpose.xlu0.b32.cont [10/16] %v5423, 128
      %5456 = vxpose.xlu0.b32.cont [11/16] %v5424, 128
      %5457 = vxpose.xlu0.b32.cont [12/16] %v5425, 128
      %5458 = vxpose.xlu0.b32.cont [13/16] %v5426, 128
      %5459 = vxpose.xlu0.b32.cont [14/16] %v5427, 128
      %5460 = vxpose.xlu0.b32.cont [15/16] %v5428, 128
      %5461 = vxpose.xlu0.b32.end [16/16] %v5429, 128
      %v5462 = vpop.trf.xlu0
      %v5463 = vpop.trf.xlu0
      %v5464 = vpop.trf.xlu0
      %v5465 = vpop.trf.xlu0
      %v5466 = vpop.trf.xlu0
      %v5467 = vpop.trf.xlu0
      %v5468 = vpop.trf.xlu0
      %v5469 = vpop.trf.xlu0
      %v5470 = vpop.trf.xlu0
      %v5471 = vpop.trf.xlu0
      %v5472 = vpop.trf.xlu0
      %v5473 = vpop.trf.xlu0
      %v5474 = vpop.trf.xlu0
      %v5475 = vpop.trf.xlu0
      %v5476 = vpop.trf.xlu0
      %v5477 = vpop.trf.xlu0
      %5478 = vxpose.xlu0.b32.start [1/16] %v5430, 128
      %5479 = vxpose.xlu0.b32.cont [2/16] %v5431, 128
      %5480 = vxpose.xlu0.b32.cont [3/16] %v5432, 128
      %5481 = vxpose.xlu0.b32.cont [4/16] %v5433, 128
      %5482 = vxpose.xlu0.b32.cont [5/16] %v5434, 128
      %5483 = vxpose.xlu0.b32.cont [6/16] %v5435, 128
      %5484 = vxpose.xlu0.b32.cont [7/16] %v5436, 128
      %5485 = vxpose.xlu0.b32.cont [8/16] %v5437, 128
      %5486 = vxpose.xlu0.b32.cont [9/16] %v5438, 128
      %5487 = vxpose.xlu0.b32.cont [10/16] %v5439, 128
      %5488 = vxpose.xlu0.b32.cont [11/16] %v5440, 128
      %5489 = vxpose.xlu0.b32.cont [12/16] %v5441, 128
      %5490 = vxpose.xlu0.b32.cont [13/16] %v5442, 128
      %5491 = vxpose.xlu0.b32.cont [14/16] %v5443, 128
      %5492 = vxpose.xlu0.b32.cont [15/16] %v5444, 128
      %5493 = vxpose.xlu0.b32.end [16/16] %v5445, 128
      %v5494 = vpop.trf.xlu0
      %v5495 = vpop.trf.xlu0
      %v5496 = vpop.trf.xlu0
      %v5497 = vpop.trf.xlu0
      %v5498 = vpop.trf.xlu0
      %v5499 = vpop.trf.xlu0
      %v5500 = vpop.trf.xlu0
      %v5501 = vpop.trf.xlu0
      %v5502 = vpop.trf.xlu0
      %v5503 = vpop.trf.xlu0
      %v5504 = vpop.trf.xlu0
      %v5505 = vpop.trf.xlu0
      %v5506 = vpop.trf.xlu0
      %v5507 = vpop.trf.xlu0
      %v5508 = vpop.trf.xlu0
      %v5509 = vpop.trf.xlu0
      %v5510 = vxor.u32 %v5462, 2147483648
      %v5511 = vxor.u32 %v5494, 2147483648
      %v5512 = vxor.u32 %v5463, 2147483648
      %v5513 = vxor.u32 %v5495, 2147483648
      %v5514 = vxor.u32 %v5464, 2147483648
      %v5515 = vxor.u32 %v5496, 2147483648
      %v5516 = vxor.u32 %v5465, 2147483648
      %v5517 = vxor.u32 %v5497, 2147483648
      %v5518 = vmul.f32 %v5510, 1.442695
      %v5519 = vpow.pop %v5518
      %v5520 = vmul.f32 %v5511, 1.442695
      %v5521 = vpow.pop %v5520
      %v5522 = vmul.f32 %v5512, 1.442695
      %v5523 = vpow.pop %v5522
      %v5524 = vmul.f32 %v5513, 1.442695
      %v5525 = vpow.pop %v5524
      %v5526 = vmul.f32 %v5514, 1.442695
      %v5527 = vpow.pop %v5526
      %v5528 = vmul.f32 %v5515, 1.442695
      %v5529 = vpow.pop %v5528
      %v5530 = vmul.f32 %v5516, 1.442695
      %v5531 = vpow.pop %v5530
      %v5532 = vmul.f32 %v5517, 1.442695
      %v5533 = vpow.pop %v5532
      %v5534 = vadd.f32 %v5519, 1.0
      %v5535 = vadd.f32 %v5521, 1.0
      %v5536 = vadd.f32 %v5523, 1.0
      %v5537 = vadd.f32 %v5525, 1.0
      %v5538 = vadd.f32 %v5527, 1.0
      %v5539 = vadd.f32 %v5529, 1.0
      %v5540 = vadd.f32 %v5531, 1.0
      %v5541 = vadd.f32 %v5533, 1.0
      %v5542 = vrcp.pop %v5534
      %v5543 = vmul.f32 1.0, %v5542
      %v5544 = vrcp.pop %v5535
      %v5545 = vmul.f32 1.0, %v5544
      %v5546 = vrcp.pop %v5536
      %v5547 = vmul.f32 1.0, %v5546
      %v5548 = vrcp.pop %v5537
      %v5549 = vmul.f32 1.0, %v5548
      %v5550 = vrcp.pop %v5538
      %v5551 = vmul.f32 1.0, %v5550
      %v5552 = vrcp.pop %v5539
      %v5553 = vmul.f32 1.0, %v5552
      %v5554 = vrcp.pop %v5540
      %v5555 = vmul.f32 1.0, %v5554
      %v5556 = vrcp.pop %v5541
      %v5557 = vmul.f32 1.0, %v5556
      %v5558 = vxor.u32 %v5466, 2147483648
      %v5559 = vxor.u32 %v5498, 2147483648
      %v5560 = vxor.u32 %v5467, 2147483648
      %v5561 = vxor.u32 %v5499, 2147483648
      %v5562 = vxor.u32 %v5468, 2147483648
      %v5563 = vxor.u32 %v5500, 2147483648
      %v5564 = vxor.u32 %v5469, 2147483648
      %v5565 = vxor.u32 %v5501, 2147483648
      %v5566 = vmul.f32 %v5558, 1.442695
      %v5567 = vpow.pop %v5566
      %v5568 = vmul.f32 %v5559, 1.442695
      %v5569 = vpow.pop %v5568
      %v5570 = vmul.f32 %v5560, 1.442695
      %v5571 = vpow.pop %v5570
      %v5572 = vmul.f32 %v5561, 1.442695
      %v5573 = vpow.pop %v5572
      %v5574 = vmul.f32 %v5562, 1.442695
      %v5575 = vpow.pop %v5574
      %v5576 = vmul.f32 %v5563, 1.442695
      %v5577 = vpow.pop %v5576
      %v5578 = vmul.f32 %v5564, 1.442695
      %v5579 = vpow.pop %v5578
      %v5580 = vmul.f32 %v5565, 1.442695
      %v5581 = vpow.pop %v5580
      %v5582 = vadd.f32 %v5567, 1.0
      %v5583 = vadd.f32 %v5569, 1.0
      %v5584 = vadd.f32 %v5571, 1.0
      %v5585 = vadd.f32 %v5573, 1.0
      %v5586 = vadd.f32 %v5575, 1.0
      %v5587 = vadd.f32 %v5577, 1.0
      %v5588 = vadd.f32 %v5579, 1.0
      %v5589 = vadd.f32 %v5581, 1.0
      %v5590 = vrcp.pop %v5582
      %v5591 = vmul.f32 1.0, %v5590
      %v5592 = vrcp.pop %v5583
      %v5593 = vmul.f32 1.0, %v5592
      %v5594 = vrcp.pop %v5584
      %v5595 = vmul.f32 1.0, %v5594
      %v5596 = vrcp.pop %v5585
      %v5597 = vmul.f32 1.0, %v5596
      %v5598 = vrcp.pop %v5586
      %v5599 = vmul.f32 1.0, %v5598
      %v5600 = vrcp.pop %v5587
      %v5601 = vmul.f32 1.0, %v5600
      %v5602 = vrcp.pop %v5588
      %v5603 = vmul.f32 1.0, %v5602
      %v5604 = vrcp.pop %v5589
      %v5605 = vmul.f32 1.0, %v5604
      %v5606 = vxor.u32 %v5470, 2147483648
      %v5607 = vxor.u32 %v5502, 2147483648
      %v5608 = vxor.u32 %v5471, 2147483648
      %v5609 = vxor.u32 %v5503, 2147483648
      %v5610 = vxor.u32 %v5472, 2147483648
      %v5611 = vxor.u32 %v5504, 2147483648
      %v5612 = vxor.u32 %v5473, 2147483648
      %v5613 = vxor.u32 %v5505, 2147483648
      %v5614 = vmul.f32 %v5606, 1.442695
      %v5615 = vpow.pop %v5614
      %v5616 = vmul.f32 %v5607, 1.442695
      %v5617 = vpow.pop %v5616
      %v5618 = vmul.f32 %v5608, 1.442695
      %v5619 = vpow.pop %v5618
      %v5620 = vmul.f32 %v5609, 1.442695
      %v5621 = vpow.pop %v5620
      %v5622 = vmul.f32 %v5610, 1.442695
      %v5623 = vpow.pop %v5622
      %v5624 = vmul.f32 %v5611, 1.442695
      %v5625 = vpow.pop %v5624
      %v5626 = vmul.f32 %v5612, 1.442695
      %v5627 = vpow.pop %v5626
      %v5628 = vmul.f32 %v5613, 1.442695
      %v5629 = vpow.pop %v5628
      %v5630 = vadd.f32 %v5615, 1.0
      %v5631 = vadd.f32 %v5617, 1.0
      %v5632 = vadd.f32 %v5619, 1.0
      %v5633 = vadd.f32 %v5621, 1.0
      %v5634 = vadd.f32 %v5623, 1.0
      %v5635 = vadd.f32 %v5625, 1.0
      %v5636 = vadd.f32 %v5627, 1.0
      %v5637 = vadd.f32 %v5629, 1.0
      %v5638 = vrcp.pop %v5630
      %v5639 = vmul.f32 1.0, %v5638
      %v5640 = vrcp.pop %v5631
      %v5641 = vmul.f32 1.0, %v5640
      %v5642 = vrcp.pop %v5632
      %v5643 = vmul.f32 1.0, %v5642
      %v5644 = vrcp.pop %v5633
      %v5645 = vmul.f32 1.0, %v5644
      %v5646 = vrcp.pop %v5634
      %v5647 = vmul.f32 1.0, %v5646
      %v5648 = vrcp.pop %v5635
      %v5649 = vmul.f32 1.0, %v5648
      %v5650 = vrcp.pop %v5636
      %v5651 = vmul.f32 1.0, %v5650
      %v5652 = vrcp.pop %v5637
      %v5653 = vmul.f32 1.0, %v5652
      %v5654 = vtanh.pop %v5474
      %v5655 = vtanh.pop %v5506
      %v5656 = vtanh.pop %v5475
      %v5657 = vtanh.pop %v5507
      %v5658 = vtanh.pop %v5476
      %v5659 = vtanh.pop %v5508
      %v5660 = vtanh.pop %v5477
      %v5661 = vtanh.pop %v5509
      %v5662 = vld [vmem:[%s247] sm:$0xff]
      %v5663 = vld [vmem:[%s247 + $0x8] sm:$0xff]
      %v5664 = vld [vmem:[%s247 + $0x10] sm:$0xff]
      %v5665 = vld [vmem:[%s247 + $0x18] sm:$0xff]
      %v5666 = vld [vmem:[%s247 + $0x20] sm:$0xff]
      %v5667 = vld [vmem:[%s247 + $0x28] sm:$0xff]
      %v5668 = vld [vmem:[%s247 + $0x30] sm:$0xff]
      %v5669 = vld [vmem:[%s247 + $0x38] sm:$0xff]
      %v5670 = vmul.f32 %v5591, %v5662
      %v5671 = vmul.f32 %v5593, %v5663
      %v5672 = vmul.f32 %v5595, %v5664
      %v5673 = vmul.f32 %v5597, %v5665
      %v5674 = vmul.f32 %v5599, %v5666
      %v5675 = vmul.f32 %v5601, %v5667
      %v5676 = vmul.f32 %v5603, %v5668
      %v5677 = vmul.f32 %v5605, %v5669
      %v5678 = vmul.f32 %v5543, %v5654
      %v5679 = vmul.f32 %v5545, %v5655
      %v5680 = vmul.f32 %v5547, %v5656
      %v5681 = vmul.f32 %v5549, %v5657
      %v5682 = vmul.f32 %v5551, %v5658
      %v5683 = vmul.f32 %v5553, %v5659
      %v5684 = vmul.f32 %v5555, %v5660
      %v5685 = vmul.f32 %v5557, %v5661
      %v5686 = vadd.f32 %v5670, %v5678
      %v5687 = vadd.f32 %v5671, %v5679
      %v5688 = vadd.f32 %v5672, %v5680
      %v5689 = vadd.f32 %v5673, %v5681
      %v5690 = vadd.f32 %v5674, %v5682
      %v5691 = vadd.f32 %v5675, %v5683
      %v5692 = vadd.f32 %v5676, %v5684
      %v5693 = vadd.f32 %v5677, %v5685
      %v5694 = vtanh.pop %v5686
      %v5695 = vtanh.pop %v5687
      %v5696 = vtanh.pop %v5688
      %v5697 = vtanh.pop %v5689
      %v5698 = vtanh.pop %v5690
      %v5699 = vtanh.pop %v5691
      %v5700 = vtanh.pop %v5692
      %v5701 = vtanh.pop %v5693
      %v5702 = vmul.f32 %v5639, %v5694
      %v5703 = vmul.f32 %v5641, %v5695
      %v5704 = vmul.f32 %v5643, %v5696
      %v5705 = vmul.f32 %v5645, %v5697
      %v5706 = vmul.f32 %v5647, %v5698
      %v5707 = vmul.f32 %v5649, %v5699
      %v5708 = vmul.f32 %v5651, %v5700
      %v5709 = vmul.f32 %v5653, %v5701
      %5710 = vst [vmem:[%s257] sm:$0xff] %v5686
      %5711 = vst [vmem:[%s257 + $0x8] sm:$0xff] %v5687
      %5712 = vst [vmem:[%s257 + $0x10] sm:$0xff] %v5688
      %5713 = vst [vmem:[%s257 + $0x18] sm:$0xff] %v5689
      %5714 = vst [vmem:[%s257 + $0x20] sm:$0xff] %v5690
      %5715 = vst [vmem:[%s257 + $0x28] sm:$0xff] %v5691
      %5716 = vst [vmem:[%s257 + $0x30] sm:$0xff] %v5692
      %5717 = vst [vmem:[%s257 + $0x38] sm:$0xff] %v5693
      %5718 = vst [vmem:[%s252] sm:$0xff] %v5702
      %5719 = vst [vmem:[%s252 + $0x8] sm:$0xff] %v5703
      %5720 = vst [vmem:[%s252 + $0x10] sm:$0xff] %v5704
      %5721 = vst [vmem:[%s252 + $0x18] sm:$0xff] %v5705
      %5722 = vst [vmem:[%s252 + $0x20] sm:$0xff] %v5706
      %5723 = vst [vmem:[%s252 + $0x28] sm:$0xff] %v5707
      %5724 = vst [vmem:[%s252 + $0x30] sm:$0xff] %v5708
      %5725 = vst [vmem:[%s252 + $0x38] sm:$0xff] %v5709
      %p5726 = scmp.lt.s32.totalorder %s17, 1
      %s5727 = scalar_select %p5726, %s17, 1
      %s5728 = smul.addr %s5727, 8
      %s5729 = smul.addr %s5728, 8
      %s5730 = scalar_lea.vmem %s4, %s5729
      %p5731 = scmp.lt.s32.totalorder %s17, 1
      %s5732 = scalar_select %p5731, %s17, 1
      %s5733 = smul.addr %s5732, 8
      %s5734 = smul.addr %s5733, 8
      %s5735 = scalar_lea.vmem %s5, %s5734
      // Predicated region
      $region37: #{xlstm_cell_forward.1} parent=35 // pred_check
        %p5736 = pneg %p129
      $region38: #{xlstm_cell_forward.1} parent=35 // pred_check_branch
        %5738 = sbr.rel (%p5736) target = $region40
      $region39: #{xlstm_cell_forward.1} parent=35 // pred_region
        _
      $region40: #{xlstm_cell_forward.1} parent=35 // pred_fallthru
        _
      // Predicated region
      $region41: #{xlstm_cell_forward.1} parent=35 // pred_check
        %p5739 = pneg %p155
      $region42: #{xlstm_cell_forward.1} parent=35 // pred_check_branch
        %5741 = sbr.rel (%p5739) target = $region44
      $region43: #{xlstm_cell_forward.1} parent=35 // pred_region
        _
      $region44: #{xlstm_cell_forward.1} parent=35 // pred_fallthru
        _
    $region36: #{xlstm_cell_forward.1} parent=5 // pred_fallthru
      _
    %p5742 = scmp.le.s32.totalorder 2, %s12
    // Predicated region
    $region45: #{xlstm_cell_forward.1} parent=5 // pred_check
      %p5743 = pneg %p5742
    $region46: #{xlstm_cell_forward.1} parent=5 // pred_check_branch
      %5745 = sbr.rel (%p5743) target = $region48
    $region47: #{xlstm_cell_forward.1} parent=5 // pred_region
      %s5746 = ssub.s32 %s12, 2
      // Predicated region
      $region49: #{xlstm_cell_forward.1} parent=47 // pred_check
        %p5747 = pneg %p135
      $region50: #{xlstm_cell_forward.1} parent=47 // pred_check_branch
        %5749 = sbr.rel (%p5747) target = $region52
      $region51: #{xlstm_cell_forward.1} parent=47 // pred_region
        %p5750 = scmp.lt.s32.totalorder %s18, 1
        %s5751 = scalar_select %p5750, %s18, 1
        %s5752 = smul.addr %s5751, 8
        %s5753 = smul.addr %s5752, 8
        %s5754 = scalar_lea.vmem %s4, %s5753
      $region52: #{xlstm_cell_forward.1} parent=47 // pred_fallthru
        _
      // Predicated region
      $region53: #{xlstm_cell_forward.1} parent=47 // pred_check
        %p5755 = pneg %p161
      $region54: #{xlstm_cell_forward.1} parent=47 // pred_check_branch
        %5757 = sbr.rel (%p5755) target = $region56
      $region55: #{xlstm_cell_forward.1} parent=47 // pred_region
        %p5758 = scmp.lt.s32.totalorder %s18, 1
        %s5759 = scalar_select %p5758, %s18, 1
        %s5760 = smul.addr %s5759, 8
        %s5761 = smul.addr %s5760, 8
        %s5762 = scalar_lea.vmem %s5, %s5761
      $region56: #{xlstm_cell_forward.1} parent=47 // pred_fallthru
        _
    $region48: #{xlstm_cell_forward.1} parent=5 // pred_fallthru
      _
  $region6: #{xlstm_cell_forward.1} parent=0 // loop_footer
    %s16 = sadd.s32 1, %s12
  $region7: #{xlstm_cell_forward.1} parent=0 // loop_footer_branch
    %11 = sbr.rel target = $region3
  $region8: #{xlstm_cell_forward.1} parent=0 // loop_exit
    _

</llo_original>
